<compile_context>
chip_gen: v6e
topology: v6e:2x2x1
jax: 0.10.0
libtpu: 0.0.40
codegen_flags: <defaults>
</compile_context>

<pallas_src>
import functools

import jax
import jax.numpy as jnp
from jax.experimental import pallas as pl
from jax.experimental.pallas import tpu as pltpu


def _round_up(n, m):
    return (n + m - 1) // m * m


def _pick_t_chunk(seq_len, x_dim, max_unroll=64):
    """Decoder steps executed per grid iteration (keeps BlockSpec legal)."""
    if seq_len <= max_unroll:
        return seq_len                       # single chunk: block == full dims
    for c in range(max_unroll, 0, -1):       # lane-dense chunked output block
        if seq_len % c == 0 and (c * x_dim) % 128 == 0:
            return c
    return seq_len                           # fallback: one big chunk


def _decoder_kernel(w_i_ref, w_h_ref, b_i_ref, b_h_ref, w_lin_ref, b_lin_ref,
                    h0_ref, out_ref, h_scr, x_scr, *, t_chunk, x_dim, h_pad):
    """One grid step == one batch block x one chunk of T_CHUNK decoder steps."""
    c = pl.program_id(1)

    # Chunk 0 of every batch block: h <- h_enc, x <- GO (zeros).
    @pl.when(c == 0)
    def _():
        h_scr[...] = h0_ref[...]
        x_scr[...] = jnp.zeros_like(x_scr)

    wi = w_i_ref[...]                        # (x_dim, 3*h_pad)
    wh = w_h_ref[...]                        # (h_pad, 3*h_pad)
    wl = w_lin_ref[...]                      # (h_pad, x_dim)
    bsz = h_scr.shape[0]
    # Hoist bias broadcasts out of the unrolled time loop.
    bi = jnp.broadcast_to(b_i_ref[...], (bsz, 3 * h_pad))
    bh = jnp.broadcast_to(b_h_ref[...], (bsz, 3 * h_pad))
    bl = jnp.broadcast_to(b_lin_ref[...], (bsz, x_dim))
    cdt = wi.dtype

    h = h_scr[...]                           # (B, h_pad)  f32
    x = x_scr[...]                           # (B, x_dim)  f32

    # Fully unrolled at trace time -> static, lane-aligned slices and stores.
    for k in range(t_chunk):
        # PyTorch GRUCell (gate order r, z, n):
        #   gi = x Wi + b_i ; gh = h Wh + b_h
        #   r = sig(gi_r + gh_r); z = sig(gi_z + gh_z)
        #   n = tanh(gi_n + r * gh_n); h' = (1-z)*n + z*h
        gi = jnp.dot(x.astype(cdt), wi, preferred_element_type=jnp.float32) + bi
        gh = jnp.dot(h.astype(cdt), wh, preferred_element_type=jnp.float32) + bh
        r = jax.nn.sigmoid(gi[:, 0:h_pad] + gh[:, 0:h_pad])
        z = jax.nn.sigmoid(gi[:, h_pad:2 * h_pad] + gh[:, h_pad:2 * h_pad])
        n = jnp.tanh(gi[:, 2 * h_pad:3 * h_pad] + r * gh[:, 2 * h_pad:3 * h_pad])
        h = (1.0 - z) * n + z * h
        # Linear projection == autoregressive feedback for the next step.
        x = jnp.dot(h.astype(cdt), wl, preferred_element_type=jnp.float32) + bl
        out_ref[:, k * x_dim:(k + 1) * x_dim] = x.astype(out_ref.dtype)

    h_scr[...] = h
    x_scr[...] = x


def prepare_decoder_params(params, *, compute_dtype=jnp.float32):
    """One-time conversion of PyTorch-layout params into kernel layout.

    Transposes to (in, out), fuses the three gates along the output axis, folds
    the hidden dim up to a multiple of 128 with zeros (exactly equivalent), and
    optionally casts weights to bf16 (f32 accumulation in-kernel).
    """
    w_ih = jnp.asarray(params["gru_weight_ih"], jnp.float32)   # (3h, x)
    w_hh = jnp.asarray(params["gru_weight_hh"], jnp.float32)   # (3h, h)
    b_ih = jnp.asarray(params["gru_bias_ih"], jnp.float32)     # (3h,)
    b_hh = jnp.asarray(params["gru_bias_hh"], jnp.float32)     # (3h,)
    w_l = jnp.asarray(params["lin_weight"], jnp.float32)       # (x, h)
    b_l = jnp.asarray(params["lin_bias"], jnp.float32)         # (x,)

    h_dim = w_hh.shape[1]
    x_dim = w_l.shape[0]
    h_pad = _round_up(h_dim, 128)            # lane-aligned r/z/n gate slices
    dp = h_pad - h_dim

    gates_i = [w_ih[g * h_dim:(g + 1) * h_dim] for g in range(3)]   # (h, x)
    gates_h = [w_hh[g * h_dim:(g + 1) * h_dim] for g in range(3)]   # (h, h)
    gates_bi = [b_ih[g * h_dim:(g + 1) * h_dim] for g in range(3)]
    gates_bh = [b_hh[g * h_dim:(g + 1) * h_dim] for g in range(3)]

    w_i = jnp.concatenate(
        [jnp.pad(g.T, ((0, 0), (0, dp))) for g in gates_i], axis=1)     # (x, 3*h_pad)
    w_h = jnp.concatenate(
        [jnp.pad(g.T, ((0, dp), (0, dp))) for g in gates_h], axis=1)    # (h_pad, 3*h_pad)
    b_i = jnp.concatenate([jnp.pad(g, (0, dp)) for g in gates_bi]).reshape(1, 3 * h_pad)
    b_h = jnp.concatenate([jnp.pad(g, (0, dp)) for g in gates_bh]).reshape(1, 3 * h_pad)
    w_lin = jnp.pad(w_l.T, ((0, dp), (0, 0)))                            # (h_pad, x)
    b_lin = b_l.reshape(1, x_dim)

    return {
        "w_i": w_i.astype(compute_dtype),
        "w_h": w_h.astype(compute_dtype),
        "b_i": b_i,                      # biases stay f32 (added post-matmul)
        "b_h": b_h,
        "w_lin": w_lin.astype(compute_dtype),
        "b_lin": b_lin,
    }


def decoder_forward(inp, h_enc, prep):
    """Mirrors Decoder.forward(input, h_enc).

    inp   : (batch, seq_len, x_dim)  -- only seq_len is used (as in PyTorch)
    h_enc : (batch, h_dim)
    prep  : output of prepare_decoder_params (built once, outside hot path)
    returns (batch, seq_len, x_dim) float32
    """
    batch, seq_len, x_dim = inp.shape
    h_dim = h_enc.shape[1]
    h_pad = prep["w_h"].shape[0]
    assert prep["w_i"].shape[0] == x_dim

    # Pad batch to the 8-sublane granule; block it for a "parallel" grid axis.
    if batch <= 256:
        b_blk = _round_up(batch, 8)
        b_pad = b_blk
    else:
        b_blk = 256
        b_pad = _round_up(batch, b_blk)
    nb = b_pad // b_blk

    t_chunk = _pick_t_chunk(seq_len, x_dim)
    nc = seq_len // t_chunk

    h0 = jnp.zeros((b_pad, h_pad), jnp.float32)
    h0 = h0.at[:batch, :h_dim].set(h_enc.astype(jnp.float32))

    kernel = functools.partial(_decoder_kernel,
                               t_chunk=t_chunk, x_dim=x_dim, h_pad=h_pad)

    def const2d(arr):
        # Constant-index weight/bias block (stays VMEM-resident across the grid).
        # NOTE: for very large h_dim on v7x add pipeline_mode=pl.Buffered(1)
        # here to single-buffer the weights under the 64 MiB VMEM.
        return pl.BlockSpec(arr.shape, lambda b, c: (0, 0))

    in_specs = [
        const2d(prep["w_i"]), const2d(prep["w_h"]),
        const2d(prep["b_i"]), const2d(prep["b_h"]),
        const2d(prep["w_lin"]), const2d(prep["b_lin"]),
        pl.BlockSpec((b_blk, h_pad), lambda b, c: (b, 0)),       # h_enc
    ]

    out = pl.pallas_call(
        kernel,
        out_shape=jax.ShapeDtypeStruct((b_pad, seq_len * x_dim), jnp.float32),
        grid_spec=pltpu.PrefetchScalarGridSpec(
            num_scalar_prefetch=0,
            grid=(nb, nc),                    # batch blocks x time chunks
            in_specs=in_specs,
            out_specs=pl.BlockSpec((b_blk, t_chunk * x_dim), lambda b, c: (b, c)),
            scratch_shapes=[
                pltpu.VMEM((b_blk, h_pad), jnp.float32),   # carried h state
                pltpu.VMEM((b_blk, x_dim), jnp.float32),   # carried x feedback
            ],
        ),
        compiler_params=pltpu.CompilerParams(
            dimension_semantics=("parallel", "arbitrary"),  # batch ||, time serial
            vmem_limit_bytes=32 * 1024 * 1024,
        ),
    )(prep["w_i"], prep["w_h"], prep["b_i"], prep["b_h"],
      prep["w_lin"], prep["b_lin"], h0)

    # (B_pad, seq*x) -> (batch, seq, x): free reshape + slice, no transpose pass.
    return out.reshape(b_pad, seq_len, x_dim)[:batch]


def decoder_reference(inp, h_enc, params):
    """Pure-JAX reference (exactly the PyTorch unrolled loop)."""
    batch, seq_len, x_dim = inp.shape
    w_ih, w_hh = params["gru_weight_ih"], params["gru_weight_hh"]
    b_ih, b_hh = params["gru_bias_ih"], params["gru_bias_hh"]
    w_lin, b_lin = params["lin_weight"], params["lin_bias"]

    def gru_cell(x, h):
        gi = x @ w_ih.T + b_ih
        gh = h @ w_hh.T + b_hh
        i_r, i_z, i_n = jnp.split(gi, 3, axis=1)
        h_r, h_z, h_n = jnp.split(gh, 3, axis=1)
        r = jax.nn.sigmoid(i_r + h_r)
        z = jax.nn.sigmoid(i_z + h_z)
        n = jnp.tanh(i_n + r * h_n)
        return (1.0 - z) * n + z * h

    h = h_enc
    x = jnp.zeros((batch, x_dim), jnp.float32)
    outs = []
    for _ in range(seq_len):
        h = gru_cell(x, h)
        x = h @ w_lin.T + b_lin
        outs.append(x)
    return jnp.transpose(jnp.stack(outs), (1, 0, 2))


def init_params(key, x_dim, h_dim):
    """Deterministic init mimicking PyTorch default U(-1/sqrt(h_dim), 1/sqrt(h_dim))."""
    k = 1.0 / jnp.sqrt(jnp.float32(h_dim))
    ks = jax.random.split(key, 6)
    u = lambda kk, shape: jax.random.uniform(kk, shape, jnp.float32, -k, k)
    return {
        "gru_weight_ih": u(ks[0], (3 * h_dim, x_dim)),
        "gru_weight_hh": u(ks[1], (3 * h_dim, h_dim)),
        "gru_bias_ih": u(ks[2], (3 * h_dim,)),
        "gru_bias_hh": u(ks[3], (3 * h_dim,)),
        "lin_weight": u(ks[4], (x_dim, h_dim)),
        "lin_bias": u(ks[5], (x_dim,)),
    }


if __name__ == "__main__":
    batch, seq_len, x_dim, h_dim = 2, 8, 4, 32

    key = jax.random.PRNGKey(0)
    k_params, k_inp, k_h = jax.random.split(key, 3)
    params = init_params(k_params, x_dim, h_dim)
    inp = jax.random.normal(k_inp, (batch, seq_len, x_dim), jnp.float32)
    h_enc = jax.random.normal(k_h, (batch, h_dim), jnp.float32)

    # Weight repacking happens once, outside the per-call hot path.
    # (compute_dtype=jnp.bfloat16 is supported; f32 kept here for exactness.)
    prep = prepare_decoder_params(params, compute_dtype=jnp.float32)

    fwd = jax.jit(decoder_forward)
    out = jax.block_until_ready(fwd(inp, h_enc, prep))
    ref = jax.block_until_ready(decoder_reference(inp, h_enc, params))

    assert out.shape == (batch, seq_len, x_dim)
    assert jnp.allclose(out, ref, atol=1e-5, rtol=1e-5), (out, ref)
    print("KERNEL_OK")
</pallas_src>

<mosaic_0001>
module attributes {stable_mosaic.version = 11 : i64} {
  func.func @_decoder_kernel(%arg0: i32, %arg1: i32, %arg2: memref<4x384xf32, #tpu.memory_space<vmem>>, %arg3: memref<128x384xf32, #tpu.memory_space<vmem>>, %arg4: memref<1x384xf32, #tpu.memory_space<vmem>>, %arg5: memref<1x384xf32, #tpu.memory_space<vmem>>, %arg6: memref<128x4xf32, #tpu.memory_space<vmem>>, %arg7: memref<1x4xf32, #tpu.memory_space<vmem>>, %arg8: memref<8x128xf32, #tpu.memory_space<vmem>>, %arg9: memref<8x32xf32, #tpu.memory_space<vmem>>, %arg10: memref<8x128xf32, #tpu.memory_space<vmem>>, %arg11: memref<8x4xf32, #tpu.memory_space<vmem>>) attributes {dimension_semantics = [#tpu.dimension_semantics<parallel>, #tpu.dimension_semantics<arbitrary>], iteration_bounds = array<i64: 1, 1>, scalar_prefetch = 0 : i64, scratch_operands = 2 : i64, tpu.core_type = #tpu.core_type<tc>, window_params = [{pipeline_mode = #tpu.pipeline_mode<synchronous>, transform_indices = @transform_0, window_bounds = array<i64: 4, 384>}, {pipeline_mode = #tpu.pipeline_mode<synchronous>, transform_indices = @transform_1, window_bounds = array<i64: 128, 384>}, {pipeline_mode = #tpu.pipeline_mode<synchronous>, transform_indices = @transform_2, window_bounds = array<i64: 1, 384>}, {pipeline_mode = #tpu.pipeline_mode<synchronous>, transform_indices = @transform_3, window_bounds = array<i64: 1, 384>}, {pipeline_mode = #tpu.pipeline_mode<synchronous>, transform_indices = @transform_4, window_bounds = array<i64: 128, 4>}, {pipeline_mode = #tpu.pipeline_mode<synchronous>, transform_indices = @transform_5, window_bounds = array<i64: 1, 4>}, {transform_indices = @transform_6, window_bounds = array<i64: 8, 128>}, {transform_indices = @transform_7, window_bounds = array<i64: 8, 32>}]} {
    %c0_i32 = arith.constant 0 : i32
    %0 = arith.cmpi eq, %arg1, %c0_i32 : i32
    %1 = arith.extui %0 : i1 to i32
    %c0_i32_0 = arith.constant 0 : i32
    %2 = arith.cmpi ne, %1, %c0_i32_0 : i32
    scf.if %2 {
      %c0_76 = arith.constant 0 : index
      %c0_77 = arith.constant 0 : index
      %283 = vector.load %arg8[%c0_76, %c0_77] : memref<8x128xf32, #tpu.memory_space<vmem>>, vector<8x128xf32>
      %c0_78 = arith.constant 0 : index
      %c0_79 = arith.constant 0 : index
      %284 = vector.load %arg10[%c0_78, %c0_79] : memref<8x128xf32, #tpu.memory_space<vmem>>, vector<8x128xf32>
      tpu.vector_store %arg10[%c0_78, %c0_79], %283 {strides = array<i32>} : memref<8x128xf32, #tpu.memory_space<vmem>>, vector<8x128xf32>,
      %cst_80 = arith.constant 0.000000e+00 : f32
      %285 = vector.broadcast %cst_80 : f32 to vector<8x4xf32>
      %c0_81 = arith.constant 0 : index
      %c0_82 = arith.constant 0 : index
      %286 = vector.load %arg11[%c0_81, %c0_82] : memref<8x4xf32, #tpu.memory_space<vmem>>, vector<8x4xf32>
      tpu.vector_store %arg11[%c0_81, %c0_82], %285 {strides = array<i32>} : memref<8x4xf32, #tpu.memory_space<vmem>>, vector<8x4xf32>,
    } else {
    }
    %c0 = arith.constant 0 : index
    %c0_1 = arith.constant 0 : index
    %3 = vector.load %arg2[%c0, %c0_1] : memref<4x384xf32, #tpu.memory_space<vmem>>, vector<4x384xf32>
    %c0_2 = arith.constant 0 : index
    %c0_3 = arith.constant 0 : index
    %4 = vector.load %arg3[%c0_2, %c0_3] : memref<128x384xf32, #tpu.memory_space<vmem>>, vector<128x384xf32>
    %c0_4 = arith.constant 0 : index
    %c0_5 = arith.constant 0 : index
    %5 = vector.load %arg6[%c0_4, %c0_5] : memref<128x4xf32, #tpu.memory_space<vmem>>, vector<128x4xf32>
    %c0_6 = arith.constant 0 : index
    %c0_7 = arith.constant 0 : index
    %6 = vector.load %arg4[%c0_6, %c0_7] : memref<1x384xf32, #tpu.memory_space<vmem>>, vector<1x384xf32>
    %7 = vector.shape_cast %6 : vector<1x384xf32> to vector<1x384xf32>
    %8 = vector.broadcast %7 : vector<1x384xf32> to vector<8x384xf32>
    %c0_8 = arith.constant 0 : index
    %c0_9 = arith.constant 0 : index
    %9 = vector.load %arg5[%c0_8, %c0_9] : memref<1x384xf32, #tpu.memory_space<vmem>>, vector<1x384xf32>
    %10 = vector.shape_cast %9 : vector<1x384xf32> to vector<1x384xf32>
    %11 = vector.broadcast %10 : vector<1x384xf32> to vector<8x384xf32>
    %c0_10 = arith.constant 0 : index
    %c0_11 = arith.constant 0 : index
    %12 = vector.load %arg7[%c0_10, %c0_11] : memref<1x4xf32, #tpu.memory_space<vmem>>, vector<1x4xf32>
    %13 = vector.shape_cast %12 : vector<1x4xf32> to vector<1x4xf32>
    %14 = vector.broadcast %13 : vector<1x4xf32> to vector<8x4xf32>
    %c0_12 = arith.constant 0 : index
    %c0_13 = arith.constant 0 : index
    %15 = vector.load %arg10[%c0_12, %c0_13] : memref<8x128xf32, #tpu.memory_space<vmem>>, vector<8x128xf32>
    %c0_14 = arith.constant 0 : index
    %c0_15 = arith.constant 0 : index
    %16 = vector.load %arg11[%c0_14, %c0_15] : memref<8x4xf32, #tpu.memory_space<vmem>>, vector<8x4xf32>
    %cst = arith.constant dense<0.000000e+00> : vector<8x384xf32>
    %17 = tpu.matmul %16, %3, %cst {dimension_numbers = #tpu.dot_dimension_numbers<[1], [0], [0], [1], [0, 0, 1, 1], [], []>} : vector<8x4xf32>, vector<4x384xf32>, vector<8x384xf32> -> vector<8x384xf32>
    %18 = arith.addf %17, %8 : vector<8x384xf32>
    %cst_16 = arith.constant dense<0.000000e+00> : vector<8x384xf32>
    %19 = tpu.matmul %15, %4, %cst_16 {dimension_numbers = #tpu.dot_dimension_numbers<[1], [0], [0], [1], [0, 0, 1, 1], [], []>} : vector<8x128xf32>, vector<128x384xf32>, vector<8x384xf32> -> vector<8x384xf32>
    %20 = arith.addf %19, %11 : vector<8x384xf32>
    %21 = vector.extract_strided_slice %18 {offsets = [0, 0], sizes = [8, 128], strides = [1, 1]} : vector<8x384xf32> to vector<8x128xf32>
    %22 = vector.extract_strided_slice %20 {offsets = [0, 0], sizes = [8, 128], strides = [1, 1]} : vector<8x384xf32> to vector<8x128xf32>
    %23 = arith.addf %21, %22 : vector<8x128xf32>
    %24 = arith.negf %23 : vector<8x128xf32>
    %25 = math.exp %24 : vector<8x128xf32>
    %cst_17 = arith.constant 1.000000e+00 : f32
    %26 = vector.broadcast %cst_17 : f32 to vector<8x128xf32>
    %27 = arith.addf %26, %25 : vector<8x128xf32>
    %28 = arith.divf %26, %27 : vector<8x128xf32>
    %29 = vector.extract_strided_slice %18 {offsets = [0, 128], sizes = [8, 128], strides = [1, 1]} : vector<8x384xf32> to vector<8x128xf32>
    %30 = vector.extract_strided_slice %20 {offsets = [0, 128], sizes = [8, 128], strides = [1, 1]} : vector<8x384xf32> to vector<8x128xf32>
    %31 = arith.addf %29, %30 : vector<8x128xf32>
    %32 = arith.negf %31 : vector<8x128xf32>
    %33 = math.exp %32 : vector<8x128xf32>
    %cst_18 = arith.constant 1.000000e+00 : f32
    %34 = vector.broadcast %cst_18 : f32 to vector<8x128xf32>
    %35 = arith.addf %34, %33 : vector<8x128xf32>
    %36 = arith.divf %34, %35 : vector<8x128xf32>
    %37 = vector.extract_strided_slice %18 {offsets = [0, 256], sizes = [8, 128], strides = [1, 1]} : vector<8x384xf32> to vector<8x128xf32>
    %38 = vector.extract_strided_slice %20 {offsets = [0, 256], sizes = [8, 128], strides = [1, 1]} : vector<8x384xf32> to vector<8x128xf32>
    %39 = arith.mulf %28, %38 : vector<8x128xf32>
    %40 = arith.addf %37, %39 : vector<8x128xf32>
    %41 = math.tanh %40 : vector<8x128xf32>
    %cst_19 = arith.constant 1.000000e+00 : f32
    %42 = vector.broadcast %cst_19 : f32 to vector<8x128xf32>
    %43 = arith.subf %42, %36 : vector<8x128xf32>
    %44 = arith.mulf %43, %41 : vector<8x128xf32>
    %45 = arith.mulf %36, %15 : vector<8x128xf32>
    %46 = arith.addf %44, %45 : vector<8x128xf32>
    %cst_20 = arith.constant dense<0.000000e+00> : vector<8x4xf32>
    %47 = tpu.matmul %46, %5, %cst_20 {dimension_numbers = #tpu.dot_dimension_numbers<[1], [0], [0], [1], [0, 0, 1, 1], [], []>} : vector<8x128xf32>, vector<128x4xf32>, vector<8x4xf32> -> vector<8x4xf32>
    %48 = arith.addf %47, %14 : vector<8x4xf32>
    %c0_21 = arith.constant 0 : index
    %c0_22 = arith.constant 0 : index
    %49 = vector.load %arg9[%c0_21, %c0_22] : memref<8x32xf32, #tpu.memory_space<vmem>>, vector<8x4xf32>
    tpu.vector_store %arg9[%c0_21, %c0_22], %48 {strides = array<i32>} : memref<8x32xf32, #tpu.memory_space<vmem>>, vector<8x4xf32>,
    %cst_23 = arith.constant dense<0.000000e+00> : vector<8x384xf32>
    %50 = tpu.matmul %48, %3, %cst_23 {dimension_numbers = #tpu.dot_dimension_numbers<[1], [0], [0], [1], [0, 0, 1, 1], [], []>} : vector<8x4xf32>, vector<4x384xf32>, vector<8x384xf32> -> vector<8x384xf32>
    %51 = arith.addf %50, %8 : vector<8x384xf32>
    %cst_24 = arith.constant dense<0.000000e+00> : vector<8x384xf32>
    %52 = tpu.matmul %46, %4, %cst_24 {dimension_numbers = #tpu.dot_dimension_numbers<[1], [0], [0], [1], [0, 0, 1, 1], [], []>} : vector<8x128xf32>, vector<128x384xf32>, vector<8x384xf32> -> vector<8x384xf32>
    %53 = arith.addf %52, %11 : vector<8x384xf32>
    %54 = vector.extract_strided_slice %51 {offsets = [0, 0], sizes = [8, 128], strides = [1, 1]} : vector<8x384xf32> to vector<8x128xf32>
    %55 = vector.extract_strided_slice %53 {offsets = [0, 0], sizes = [8, 128], strides = [1, 1]} : vector<8x384xf32> to vector<8x128xf32>
    %56 = arith.addf %54, %55 : vector<8x128xf32>
    %57 = arith.negf %56 : vector<8x128xf32>
    %58 = math.exp %57 : vector<8x128xf32>
    %cst_25 = arith.constant 1.000000e+00 : f32
    %59 = vector.broadcast %cst_25 : f32 to vector<8x128xf32>
    %60 = arith.addf %59, %58 : vector<8x128xf32>
    %61 = arith.divf %59, %60 : vector<8x128xf32>
    %62 = vector.extract_strided_slice %51 {offsets = [0, 128], sizes = [8, 128], strides = [1, 1]} : vector<8x384xf32> to vector<8x128xf32>
    %63 = vector.extract_strided_slice %53 {offsets = [0, 128], sizes = [8, 128], strides = [1, 1]} : vector<8x384xf32> to vector<8x128xf32>
    %64 = arith.addf %62, %63 : vector<8x128xf32>
    %65 = arith.negf %64 : vector<8x128xf32>
    %66 = math.exp %65 : vector<8x128xf32>
    %cst_26 = arith.constant 1.000000e+00 : f32
    %67 = vector.broadcast %cst_26 : f32 to vector<8x128xf32>
    %68 = arith.addf %67, %66 : vector<8x128xf32>
    %69 = arith.divf %67, %68 : vector<8x128xf32>
    %70 = vector.extract_strided_slice %51 {offsets = [0, 256], sizes = [8, 128], strides = [1, 1]} : vector<8x384xf32> to vector<8x128xf32>
    %71 = vector.extract_strided_slice %53 {offsets = [0, 256], sizes = [8, 128], strides = [1, 1]} : vector<8x384xf32> to vector<8x128xf32>
    %72 = arith.mulf %61, %71 : vector<8x128xf32>
    %73 = arith.addf %70, %72 : vector<8x128xf32>
    %74 = math.tanh %73 : vector<8x128xf32>
    %cst_27 = arith.constant 1.000000e+00 : f32
    %75 = vector.broadcast %cst_27 : f32 to vector<8x128xf32>
    %76 = arith.subf %75, %69 : vector<8x128xf32>
    %77 = arith.mulf %76, %74 : vector<8x128xf32>
    %78 = arith.mulf %69, %46 : vector<8x128xf32>
    %79 = arith.addf %77, %78 : vector<8x128xf32>
    %cst_28 = arith.constant dense<0.000000e+00> : vector<8x4xf32>
    %80 = tpu.matmul %79, %5, %cst_28 {dimension_numbers = #tpu.dot_dimension_numbers<[1], [0], [0], [1], [0, 0, 1, 1], [], []>} : vector<8x128xf32>, vector<128x4xf32>, vector<8x4xf32> -> vector<8x4xf32>
    %81 = arith.addf %80, %14 : vector<8x4xf32>
    %c0_29 = arith.constant 0 : index
    %c4 = arith.constant 4 : index
    %82 = vector.load %arg9[%c0_29, %c4] : memref<8x32xf32, #tpu.memory_space<vmem>>, vector<8x4xf32>
    tpu.vector_store %arg9[%c0_29, %c4], %81 {strides = array<i32>} : memref<8x32xf32, #tpu.memory_space<vmem>>, vector<8x4xf32>,
    %cst_30 = arith.constant dense<0.000000e+00> : vector<8x384xf32>
    %83 = tpu.matmul %81, %3, %cst_30 {dimension_numbers = #tpu.dot_dimension_numbers<[1], [0], [0], [1], [0, 0, 1, 1], [], []>} : vector<8x4xf32>, vector<4x384xf32>, vector<8x384xf32> -> vector<8x384xf32>
    %84 = arith.addf %83, %8 : vector<8x384xf32>
    %cst_31 = arith.constant dense<0.000000e+00> : vector<8x384xf32>
    %85 = tpu.matmul %79, %4, %cst_31 {dimension_numbers = #tpu.dot_dimension_numbers<[1], [0], [0], [1], [0, 0, 1, 1], [], []>} : vector<8x128xf32>, vector<128x384xf32>, vector<8x384xf32> -> vector<8x384xf32>
    %86 = arith.addf %85, %11 : vector<8x384xf32>
    %87 = vector.extract_strided_slice %84 {offsets = [0, 0], sizes = [8, 128], strides = [1, 1]} : vector<8x384xf32> to vector<8x128xf32>
    %88 = vector.extract_strided_slice %86 {offsets = [0, 0], sizes = [8, 128], strides = [1, 1]} : vector<8x384xf32> to vector<8x128xf32>
    %89 = arith.addf %87, %88 : vector<8x128xf32>
    %90 = arith.negf %89 : vector<8x128xf32>
    %91 = math.exp %90 : vector<8x128xf32>
    %cst_32 = arith.constant 1.000000e+00 : f32
    %92 = vector.broadcast %cst_32 : f32 to vector<8x128xf32>
    %93 = arith.addf %92, %91 : vector<8x128xf32>
    %94 = arith.divf %92, %93 : vector<8x128xf32>
    %95 = vector.extract_strided_slice %84 {offsets = [0, 128], sizes = [8, 128], strides = [1, 1]} : vector<8x384xf32> to vector<8x128xf32>
    %96 = vector.extract_strided_slice %86 {offsets = [0, 128], sizes = [8, 128], strides = [1, 1]} : vector<8x384xf32> to vector<8x128xf32>
    %97 = arith.addf %95, %96 : vector<8x128xf32>
    %98 = arith.negf %97 : vector<8x128xf32>
    %99 = math.exp %98 : vector<8x128xf32>
    %cst_33 = arith.constant 1.000000e+00 : f32
    %100 = vector.broadcast %cst_33 : f32 to vector<8x128xf32>
    %101 = arith.addf %100, %99 : vector<8x128xf32>
    %102 = arith.divf %100, %101 : vector<8x128xf32>
    %103 = vector.extract_strided_slice %84 {offsets = [0, 256], sizes = [8, 128], strides = [1, 1]} : vector<8x384xf32> to vector<8x128xf32>
    %104 = vector.extract_strided_slice %86 {offsets = [0, 256], sizes = [8, 128], strides = [1, 1]} : vector<8x384xf32> to vector<8x128xf32>
    %105 = arith.mulf %94, %104 : vector<8x128xf32>
    %106 = arith.addf %103, %105 : vector<8x128xf32>
    %107 = math.tanh %106 : vector<8x128xf32>
    %cst_34 = arith.constant 1.000000e+00 : f32
    %108 = vector.broadcast %cst_34 : f32 to vector<8x128xf32>
    %109 = arith.subf %108, %102 : vector<8x128xf32>
    %110 = arith.mulf %109, %107 : vector<8x128xf32>
    %111 = arith.mulf %102, %79 : vector<8x128xf32>
    %112 = arith.addf %110, %111 : vector<8x128xf32>
    %cst_35 = arith.constant dense<0.000000e+00> : vector<8x4xf32>
    %113 = tpu.matmul %112, %5, %cst_35 {dimension_numbers = #tpu.dot_dimension_numbers<[1], [0], [0], [1], [0, 0, 1, 1], [], []>} : vector<8x128xf32>, vector<128x4xf32>, vector<8x4xf32> -> vector<8x4xf32>
    %114 = arith.addf %113, %14 : vector<8x4xf32>
    %c0_36 = arith.constant 0 : index
    %c8 = arith.constant 8 : index
    %115 = vector.load %arg9[%c0_36, %c8] : memref<8x32xf32, #tpu.memory_space<vmem>>, vector<8x4xf32>
    tpu.vector_store %arg9[%c0_36, %c8], %114 {strides = array<i32>} : memref<8x32xf32, #tpu.memory_space<vmem>>, vector<8x4xf32>,
    %cst_37 = arith.constant dense<0.000000e+00> : vector<8x384xf32>
    %116 = tpu.matmul %114, %3, %cst_37 {dimension_numbers = #tpu.dot_dimension_numbers<[1], [0], [0], [1], [0, 0, 1, 1], [], []>} : vector<8x4xf32>, vector<4x384xf32>, vector<8x384xf32> -> vector<8x384xf32>
    %117 = arith.addf %116, %8 : vector<8x384xf32>
    %cst_38 = arith.constant dense<0.000000e+00> : vector<8x384xf32>
    %118 = tpu.matmul %112, %4, %cst_38 {dimension_numbers = #tpu.dot_dimension_numbers<[1], [0], [0], [1], [0, 0, 1, 1], [], []>} : vector<8x128xf32>, vector<128x384xf32>, vector<8x384xf32> -> vector<8x384xf32>
    %119 = arith.addf %118, %11 : vector<8x384xf32>
    %120 = vector.extract_strided_slice %117 {offsets = [0, 0], sizes = [8, 128], strides = [1, 1]} : vector<8x384xf32> to vector<8x128xf32>
    %121 = vector.extract_strided_slice %119 {offsets = [0, 0], sizes = [8, 128], strides = [1, 1]} : vector<8x384xf32> to vector<8x128xf32>
    %122 = arith.addf %120, %121 : vector<8x128xf32>
    %123 = arith.negf %122 : vector<8x128xf32>
    %124 = math.exp %123 : vector<8x128xf32>
    %cst_39 = arith.constant 1.000000e+00 : f32
    %125 = vector.broadcast %cst_39 : f32 to vector<8x128xf32>
    %126 = arith.addf %125, %124 : vector<8x128xf32>
    %127 = arith.divf %125, %126 : vector<8x128xf32>
    %128 = vector.extract_strided_slice %117 {offsets = [0, 128], sizes = [8, 128], strides = [1, 1]} : vector<8x384xf32> to vector<8x128xf32>
    %129 = vector.extract_strided_slice %119 {offsets = [0, 128], sizes = [8, 128], strides = [1, 1]} : vector<8x384xf32> to vector<8x128xf32>
    %130 = arith.addf %128, %129 : vector<8x128xf32>
    %131 = arith.negf %130 : vector<8x128xf32>
    %132 = math.exp %131 : vector<8x128xf32>
    %cst_40 = arith.constant 1.000000e+00 : f32
    %133 = vector.broadcast %cst_40 : f32 to vector<8x128xf32>
    %134 = arith.addf %133, %132 : vector<8x128xf32>
    %135 = arith.divf %133, %134 : vector<8x128xf32>
    %136 = vector.extract_strided_slice %117 {offsets = [0, 256], sizes = [8, 128], strides = [1, 1]} : vector<8x384xf32> to vector<8x128xf32>
    %137 = vector.extract_strided_slice %119 {offsets = [0, 256], sizes = [8, 128], strides = [1, 1]} : vector<8x384xf32> to vector<8x128xf32>
    %138 = arith.mulf %127, %137 : vector<8x128xf32>
    %139 = arith.addf %136, %138 : vector<8x128xf32>
    %140 = math.tanh %139 : vector<8x128xf32>
    %cst_41 = arith.constant 1.000000e+00 : f32
    %141 = vector.broadcast %cst_41 : f32 to vector<8x128xf32>
    %142 = arith.subf %141, %135 : vector<8x128xf32>
    %143 = arith.mulf %142, %140 : vector<8x128xf32>
    %144 = arith.mulf %135, %112 : vector<8x128xf32>
    %145 = arith.addf %143, %144 : vector<8x128xf32>
    %cst_42 = arith.constant dense<0.000000e+00> : vector<8x4xf32>
    %146 = tpu.matmul %145, %5, %cst_42 {dimension_numbers = #tpu.dot_dimension_numbers<[1], [0], [0], [1], [0, 0, 1, 1], [], []>} : vector<8x128xf32>, vector<128x4xf32>, vector<8x4xf32> -> vector<8x4xf32>
    %147 = arith.addf %146, %14 : vector<8x4xf32>
    %c0_43 = arith.constant 0 : index
    %c12 = arith.constant 12 : index
    %148 = vector.load %arg9[%c0_43, %c12] : memref<8x32xf32, #tpu.memory_space<vmem>>, vector<8x4xf32>
    tpu.vector_store %arg9[%c0_43, %c12], %147 {strides = array<i32>} : memref<8x32xf32, #tpu.memory_space<vmem>>, vector<8x4xf32>,
    %cst_44 = arith.constant dense<0.000000e+00> : vector<8x384xf32>
    %149 = tpu.matmul %147, %3, %cst_44 {dimension_numbers = #tpu.dot_dimension_numbers<[1], [0], [0], [1], [0, 0, 1, 1], [], []>} : vector<8x4xf32>, vector<4x384xf32>, vector<8x384xf32> -> vector<8x384xf32>
    %150 = arith.addf %149, %8 : vector<8x384xf32>
    %cst_45 = arith.constant dense<0.000000e+00> : vector<8x384xf32>
    %151 = tpu.matmul %145, %4, %cst_45 {dimension_numbers = #tpu.dot_dimension_numbers<[1], [0], [0], [1], [0, 0, 1, 1], [], []>} : vector<8x128xf32>, vector<128x384xf32>, vector<8x384xf32> -> vector<8x384xf32>
    %152 = arith.addf %151, %11 : vector<8x384xf32>
    %153 = vector.extract_strided_slice %150 {offsets = [0, 0], sizes = [8, 128], strides = [1, 1]} : vector<8x384xf32> to vector<8x128xf32>
    %154 = vector.extract_strided_slice %152 {offsets = [0, 0], sizes = [8, 128], strides = [1, 1]} : vector<8x384xf32> to vector<8x128xf32>
    %155 = arith.addf %153, %154 : vector<8x128xf32>
    %156 = arith.negf %155 : vector<8x128xf32>
    %157 = math.exp %156 : vector<8x128xf32>
    %cst_46 = arith.constant 1.000000e+00 : f32
    %158 = vector.broadcast %cst_46 : f32 to vector<8x128xf32>
    %159 = arith.addf %158, %157 : vector<8x128xf32>
    %160 = arith.divf %158, %159 : vector<8x128xf32>
    %161 = vector.extract_strided_slice %150 {offsets = [0, 128], sizes = [8, 128], strides = [1, 1]} : vector<8x384xf32> to vector<8x128xf32>
    %162 = vector.extract_strided_slice %152 {offsets = [0, 128], sizes = [8, 128], strides = [1, 1]} : vector<8x384xf32> to vector<8x128xf32>
    %163 = arith.addf %161, %162 : vector<8x128xf32>
    %164 = arith.negf %163 : vector<8x128xf32>
    %165 = math.exp %164 : vector<8x128xf32>
    %cst_47 = arith.constant 1.000000e+00 : f32
    %166 = vector.broadcast %cst_47 : f32 to vector<8x128xf32>
    %167 = arith.addf %166, %165 : vector<8x128xf32>
    %168 = arith.divf %166, %167 : vector<8x128xf32>
    %169 = vector.extract_strided_slice %150 {offsets = [0, 256], sizes = [8, 128], strides = [1, 1]} : vector<8x384xf32> to vector<8x128xf32>
    %170 = vector.extract_strided_slice %152 {offsets = [0, 256], sizes = [8, 128], strides = [1, 1]} : vector<8x384xf32> to vector<8x128xf32>
    %171 = arith.mulf %160, %170 : vector<8x128xf32>
    %172 = arith.addf %169, %171 : vector<8x128xf32>
    %173 = math.tanh %172 : vector<8x128xf32>
    %cst_48 = arith.constant 1.000000e+00 : f32
    %174 = vector.broadcast %cst_48 : f32 to vector<8x128xf32>
    %175 = arith.subf %174, %168 : vector<8x128xf32>
    %176 = arith.mulf %175, %173 : vector<8x128xf32>
    %177 = arith.mulf %168, %145 : vector<8x128xf32>
    %178 = arith.addf %176, %177 : vector<8x128xf32>
    %cst_49 = arith.constant dense<0.000000e+00> : vector<8x4xf32>
    %179 = tpu.matmul %178, %5, %cst_49 {dimension_numbers = #tpu.dot_dimension_numbers<[1], [0], [0], [1], [0, 0, 1, 1], [], []>} : vector<8x128xf32>, vector<128x4xf32>, vector<8x4xf32> -> vector<8x4xf32>
    %180 = arith.addf %179, %14 : vector<8x4xf32>
    %c0_50 = arith.constant 0 : index
    %c16 = arith.constant 16 : index
    %181 = vector.load %arg9[%c0_50, %c16] : memref<8x32xf32, #tpu.memory_space<vmem>>, vector<8x4xf32>
    tpu.vector_store %arg9[%c0_50, %c16], %180 {strides = array<i32>} : memref<8x32xf32, #tpu.memory_space<vmem>>, vector<8x4xf32>,
    %cst_51 = arith.constant dense<0.000000e+00> : vector<8x384xf32>
    %182 = tpu.matmul %180, %3, %cst_51 {dimension_numbers = #tpu.dot_dimension_numbers<[1], [0], [0], [1], [0, 0, 1, 1], [], []>} : vector<8x4xf32>, vector<4x384xf32>, vector<8x384xf32> -> vector<8x384xf32>
    %183 = arith.addf %182, %8 : vector<8x384xf32>
    %cst_52 = arith.constant dense<0.000000e+00> : vector<8x384xf32>
    %184 = tpu.matmul %178, %4, %cst_52 {dimension_numbers = #tpu.dot_dimension_numbers<[1], [0], [0], [1], [0, 0, 1, 1], [], []>} : vector<8x128xf32>, vector<128x384xf32>, vector<8x384xf32> -> vector<8x384xf32>
    %185 = arith.addf %184, %11 : vector<8x384xf32>
    %186 = vector.extract_strided_slice %183 {offsets = [0, 0], sizes = [8, 128], strides = [1, 1]} : vector<8x384xf32> to vector<8x128xf32>
    %187 = vector.extract_strided_slice %185 {offsets = [0, 0], sizes = [8, 128], strides = [1, 1]} : vector<8x384xf32> to vector<8x128xf32>
    %188 = arith.addf %186, %187 : vector<8x128xf32>
    %189 = arith.negf %188 : vector<8x128xf32>
    %190 = math.exp %189 : vector<8x128xf32>
    %cst_53 = arith.constant 1.000000e+00 : f32
    %191 = vector.broadcast %cst_53 : f32 to vector<8x128xf32>
    %192 = arith.addf %191, %190 : vector<8x128xf32>
    %193 = arith.divf %191, %192 : vector<8x128xf32>
    %194 = vector.extract_strided_slice %183 {offsets = [0, 128], sizes = [8, 128], strides = [1, 1]} : vector<8x384xf32> to vector<8x128xf32>
    %195 = vector.extract_strided_slice %185 {offsets = [0, 128], sizes = [8, 128], strides = [1, 1]} : vector<8x384xf32> to vector<8x128xf32>
    %196 = arith.addf %194, %195 : vector<8x128xf32>
    %197 = arith.negf %196 : vector<8x128xf32>
    %198 = math.exp %197 : vector<8x128xf32>
    %cst_54 = arith.constant 1.000000e+00 : f32
    %199 = vector.broadcast %cst_54 : f32 to vector<8x128xf32>
    %200 = arith.addf %199, %198 : vector<8x128xf32>
    %201 = arith.divf %199, %200 : vector<8x128xf32>
    %202 = vector.extract_strided_slice %183 {offsets = [0, 256], sizes = [8, 128], strides = [1, 1]} : vector<8x384xf32> to vector<8x128xf32>
    %203 = vector.extract_strided_slice %185 {offsets = [0, 256], sizes = [8, 128], strides = [1, 1]} : vector<8x384xf32> to vector<8x128xf32>
    %204 = arith.mulf %193, %203 : vector<8x128xf32>
    %205 = arith.addf %202, %204 : vector<8x128xf32>
    %206 = math.tanh %205 : vector<8x128xf32>
    %cst_55 = arith.constant 1.000000e+00 : f32
    %207 = vector.broadcast %cst_55 : f32 to vector<8x128xf32>
    %208 = arith.subf %207, %201 : vector<8x128xf32>
    %209 = arith.mulf %208, %206 : vector<8x128xf32>
    %210 = arith.mulf %201, %178 : vector<8x128xf32>
    %211 = arith.addf %209, %210 : vector<8x128xf32>
    %cst_56 = arith.constant dense<0.000000e+00> : vector<8x4xf32>
    %212 = tpu.matmul %211, %5, %cst_56 {dimension_numbers = #tpu.dot_dimension_numbers<[1], [0], [0], [1], [0, 0, 1, 1], [], []>} : vector<8x128xf32>, vector<128x4xf32>, vector<8x4xf32> -> vector<8x4xf32>
    %213 = arith.addf %212, %14 : vector<8x4xf32>
    %c0_57 = arith.constant 0 : index
    %c20 = arith.constant 20 : index
    %214 = vector.load %arg9[%c0_57, %c20] : memref<8x32xf32, #tpu.memory_space<vmem>>, vector<8x4xf32>
    tpu.vector_store %arg9[%c0_57, %c20], %213 {strides = array<i32>} : memref<8x32xf32, #tpu.memory_space<vmem>>, vector<8x4xf32>,
    %cst_58 = arith.constant dense<0.000000e+00> : vector<8x384xf32>
    %215 = tpu.matmul %213, %3, %cst_58 {dimension_numbers = #tpu.dot_dimension_numbers<[1], [0], [0], [1], [0, 0, 1, 1], [], []>} : vector<8x4xf32>, vector<4x384xf32>, vector<8x384xf32> -> vector<8x384xf32>
    %216 = arith.addf %215, %8 : vector<8x384xf32>
    %cst_59 = arith.constant dense<0.000000e+00> : vector<8x384xf32>
    %217 = tpu.matmul %211, %4, %cst_59 {dimension_numbers = #tpu.dot_dimension_numbers<[1], [0], [0], [1], [0, 0, 1, 1], [], []>} : vector<8x128xf32>, vector<128x384xf32>, vector<8x384xf32> -> vector<8x384xf32>
    %218 = arith.addf %217, %11 : vector<8x384xf32>
    %219 = vector.extract_strided_slice %216 {offsets = [0, 0], sizes = [8, 128], strides = [1, 1]} : vector<8x384xf32> to vector<8x128xf32>
    %220 = vector.extract_strided_slice %218 {offsets = [0, 0], sizes = [8, 128], strides = [1, 1]} : vector<8x384xf32> to vector<8x128xf32>
    %221 = arith.addf %219, %220 : vector<8x128xf32>
    %222 = arith.negf %221 : vector<8x128xf32>
    %223 = math.exp %222 : vector<8x128xf32>
    %cst_60 = arith.constant 1.000000e+00 : f32
    %224 = vector.broadcast %cst_60 : f32 to vector<8x128xf32>
    %225 = arith.addf %224, %223 : vector<8x128xf32>
    %226 = arith.divf %224, %225 : vector<8x128xf32>
    %227 = vector.extract_strided_slice %216 {offsets = [0, 128], sizes = [8, 128], strides = [1, 1]} : vector<8x384xf32> to vector<8x128xf32>
    %228 = vector.extract_strided_slice %218 {offsets = [0, 128], sizes = [8, 128], strides = [1, 1]} : vector<8x384xf32> to vector<8x128xf32>
    %229 = arith.addf %227, %228 : vector<8x128xf32>
    %230 = arith.negf %229 : vector<8x128xf32>
    %231 = math.exp %230 : vector<8x128xf32>
    %cst_61 = arith.constant 1.000000e+00 : f32
    %232 = vector.broadcast %cst_61 : f32 to vector<8x128xf32>
    %233 = arith.addf %232, %231 : vector<8x128xf32>
    %234 = arith.divf %232, %233 : vector<8x128xf32>
    %235 = vector.extract_strided_slice %216 {offsets = [0, 256], sizes = [8, 128], strides = [1, 1]} : vector<8x384xf32> to vector<8x128xf32>
    %236 = vector.extract_strided_slice %218 {offsets = [0, 256], sizes = [8, 128], strides = [1, 1]} : vector<8x384xf32> to vector<8x128xf32>
    %237 = arith.mulf %226, %236 : vector<8x128xf32>
    %238 = arith.addf %235, %237 : vector<8x128xf32>
    %239 = math.tanh %238 : vector<8x128xf32>
    %cst_62 = arith.constant 1.000000e+00 : f32
    %240 = vector.broadcast %cst_62 : f32 to vector<8x128xf32>
    %241 = arith.subf %240, %234 : vector<8x128xf32>
    %242 = arith.mulf %241, %239 : vector<8x128xf32>
    %243 = arith.mulf %234, %211 : vector<8x128xf32>
    %244 = arith.addf %242, %243 : vector<8x128xf32>
    %cst_63 = arith.constant dense<0.000000e+00> : vector<8x4xf32>
    %245 = tpu.matmul %244, %5, %cst_63 {dimension_numbers = #tpu.dot_dimension_numbers<[1], [0], [0], [1], [0, 0, 1, 1], [], []>} : vector<8x128xf32>, vector<128x4xf32>, vector<8x4xf32> -> vector<8x4xf32>
    %246 = arith.addf %245, %14 : vector<8x4xf32>
    %c0_64 = arith.constant 0 : index
    %c24 = arith.constant 24 : index
    %247 = vector.load %arg9[%c0_64, %c24] : memref<8x32xf32, #tpu.memory_space<vmem>>, vector<8x4xf32>
    tpu.vector_store %arg9[%c0_64, %c24], %246 {strides = array<i32>} : memref<8x32xf32, #tpu.memory_space<vmem>>, vector<8x4xf32>,
    %cst_65 = arith.constant dense<0.000000e+00> : vector<8x384xf32>
    %248 = tpu.matmul %246, %3, %cst_65 {dimension_numbers = #tpu.dot_dimension_numbers<[1], [0], [0], [1], [0, 0, 1, 1], [], []>} : vector<8x4xf32>, vector<4x384xf32>, vector<8x384xf32> -> vector<8x384xf32>
    %249 = arith.addf %248, %8 : vector<8x384xf32>
    %cst_66 = arith.constant dense<0.000000e+00> : vector<8x384xf32>
    %250 = tpu.matmul %244, %4, %cst_66 {dimension_numbers = #tpu.dot_dimension_numbers<[1], [0], [0], [1], [0, 0, 1, 1], [], []>} : vector<8x128xf32>, vector<128x384xf32>, vector<8x384xf32> -> vector<8x384xf32>
    %251 = arith.addf %250, %11 : vector<8x384xf32>
    %252 = vector.extract_strided_slice %249 {offsets = [0, 0], sizes = [8, 128], strides = [1, 1]} : vector<8x384xf32> to vector<8x128xf32>
    %253 = vector.extract_strided_slice %251 {offsets = [0, 0], sizes = [8, 128], strides = [1, 1]} : vector<8x384xf32> to vector<8x128xf32>
    %254 = arith.addf %252, %253 : vector<8x128xf32>
    %255 = arith.negf %254 : vector<8x128xf32>
    %256 = math.exp %255 : vector<8x128xf32>
    %cst_67 = arith.constant 1.000000e+00 : f32
    %257 = vector.broadcast %cst_67 : f32 to vector<8x128xf32>
    %258 = arith.addf %257, %256 : vector<8x128xf32>
    %259 = arith.divf %257, %258 : vector<8x128xf32>
    %260 = vector.extract_strided_slice %249 {offsets = [0, 128], sizes = [8, 128], strides = [1, 1]} : vector<8x384xf32> to vector<8x128xf32>
    %261 = vector.extract_strided_slice %251 {offsets = [0, 128], sizes = [8, 128], strides = [1, 1]} : vector<8x384xf32> to vector<8x128xf32>
    %262 = arith.addf %260, %261 : vector<8x128xf32>
    %263 = arith.negf %262 : vector<8x128xf32>
    %264 = math.exp %263 : vector<8x128xf32>
    %cst_68 = arith.constant 1.000000e+00 : f32
    %265 = vector.broadcast %cst_68 : f32 to vector<8x128xf32>
    %266 = arith.addf %265, %264 : vector<8x128xf32>
    %267 = arith.divf %265, %266 : vector<8x128xf32>
    %268 = vector.extract_strided_slice %249 {offsets = [0, 256], sizes = [8, 128], strides = [1, 1]} : vector<8x384xf32> to vector<8x128xf32>
    %269 = vector.extract_strided_slice %251 {offsets = [0, 256], sizes = [8, 128], strides = [1, 1]} : vector<8x384xf32> to vector<8x128xf32>
    %270 = arith.mulf %259, %269 : vector<8x128xf32>
    %271 = arith.addf %268, %270 : vector<8x128xf32>
    %272 = math.tanh %271 : vector<8x128xf32>
    %cst_69 = arith.constant 1.000000e+00 : f32
    %273 = vector.broadcast %cst_69 : f32 to vector<8x128xf32>
    %274 = arith.subf %273, %267 : vector<8x128xf32>
    %275 = arith.mulf %274, %272 : vector<8x128xf32>
    %276 = arith.mulf %267, %244 : vector<8x128xf32>
    %277 = arith.addf %275, %276 : vector<8x128xf32>
    %cst_70 = arith.constant dense<0.000000e+00> : vector<8x4xf32>
    %278 = tpu.matmul %277, %5, %cst_70 {dimension_numbers = #tpu.dot_dimension_numbers<[1], [0], [0], [1], [0, 0, 1, 1], [], []>} : vector<8x128xf32>, vector<128x4xf32>, vector<8x4xf32> -> vector<8x4xf32>
    %279 = arith.addf %278, %14 : vector<8x4xf32>
    %c0_71 = arith.constant 0 : index
    %c28 = arith.constant 28 : index
    %280 = vector.load %arg9[%c0_71, %c28] : memref<8x32xf32, #tpu.memory_space<vmem>>, vector<8x4xf32>
    tpu.vector_store %arg9[%c0_71, %c28], %279 {strides = array<i32>} : memref<8x32xf32, #tpu.memory_space<vmem>>, vector<8x4xf32>,
    %c0_72 = arith.constant 0 : index
    %c0_73 = arith.constant 0 : index
    %281 = vector.load %arg10[%c0_72, %c0_73] : memref<8x128xf32, #tpu.memory_space<vmem>>, vector<8x128xf32>
    tpu.vector_store %arg10[%c0_72, %c0_73], %277 {strides = array<i32>} : memref<8x128xf32, #tpu.memory_space<vmem>>, vector<8x128xf32>,
    %c0_74 = arith.constant 0 : index
    %c0_75 = arith.constant 0 : index
    %282 = vector.load %arg11[%c0_74, %c0_75] : memref<8x4xf32, #tpu.memory_space<vmem>>, vector<8x4xf32>
    tpu.vector_store %arg11[%c0_74, %c0_75], %279 {strides = array<i32>} : memref<8x4xf32, #tpu.memory_space<vmem>>, vector<8x4xf32>,
    return
  }
  func.func @transform_0(%arg0: i32, %arg1: i32) -> (i32, i32) {
    %c0_i32 = arith.constant 0 : i32
    %c0_i32_0 = arith.constant 0 : i32
    %c0_i32_1 = arith.constant 0 : i32
    return %c0_i32, %c0_i32_0 : i32, i32
  }
  func.func @transform_1(%arg0: i32, %arg1: i32) -> (i32, i32) {
    %c0_i32 = arith.constant 0 : i32
    %c0_i32_0 = arith.constant 0 : i32
    %c0_i32_1 = arith.constant 0 : i32
    return %c0_i32, %c0_i32_0 : i32, i32
  }
  func.func @transform_2(%arg0: i32, %arg1: i32) -> (i32, i32) {
    %c0_i32 = arith.constant 0 : i32
    %c0_i32_0 = arith.constant 0 : i32
    %c0_i32_1 = arith.constant 0 : i32
    return %c0_i32, %c0_i32_0 : i32, i32
  }
  func.func @transform_3(%arg0: i32, %arg1: i32) -> (i32, i32) {
    %c0_i32 = arith.constant 0 : i32
    %c0_i32_0 = arith.constant 0 : i32
    %c0_i32_1 = arith.constant 0 : i32
    return %c0_i32, %c0_i32_0 : i32, i32
  }
  func.func @transform_4(%arg0: i32, %arg1: i32) -> (i32, i32) {
    %c0_i32 = arith.constant 0 : i32
    %c0_i32_0 = arith.constant 0 : i32
    %c0_i32_1 = arith.constant 0 : i32
    return %c0_i32, %c0_i32_0 : i32, i32
  }
  func.func @transform_5(%arg0: i32, %arg1: i32) -> (i32, i32) {
    %c0_i32 = arith.constant 0 : i32
    %c0_i32_0 = arith.constant 0 : i32
    %c0_i32_1 = arith.constant 0 : i32
    return %c0_i32, %c0_i32_0 : i32, i32
  }
  func.func @transform_6(%arg0: i32, %arg1: i32) -> (i32, i32) {
    %c0_i32 = arith.constant 0 : i32
    %c0_i32_0 = arith.constant 0 : i32
    return %arg0, %c0_i32 : i32, i32
  }
  func.func @transform_7(%arg0: i32, %arg1: i32) -> (i32, i32) {
    %c0_i32 = arith.constant 0 : i32
    return %arg0, %arg1 : i32, i32
  }
}

</mosaic_0001>

<llo_original>
// kernel: decoder_forward.1
$region0: #{decoder_forward.1}
  #allocation0 [shape = 'u32[]', space=smem, size = 0x4, offset = 0x4, fixed_abs, tag = 'smem constant byte address 0x4 - core index']
  #allocation1 [shape = 'u32[144,128]{1,0:T(1,128)}', space=vmem, size = 0x12000, scoped, tag = 'internal scratch']
  #allocation2 [shape = 'f32[8,128]{1,0:T(8,128)}', space=vmem, size = 0x1000, scoped, tag = 'scratch operand']
  #allocation3 [shape = 'f32[8,4]{1,0:T(8,128)}', space=vmem, size = 0x1000, scoped, tag = 'scratch operand']
  %s0 = inlined_call_operand.vmem [shape: f32[4,384], index: 0, kind: input, shape index: {}]
  %s1 = inlined_call_operand.hbm [shape: f32[128,384], index: 1, kind: input, shape index: {}]
  %s2 = inlined_call_operand.vmem [shape: f32[1,384], index: 2, kind: input, shape index: {}]
  %s3 = inlined_call_operand.vmem [shape: f32[1,384], index: 3, kind: input, shape index: {}]
  %s4 = inlined_call_operand.vmem [shape: f32[128,4], index: 4, kind: input, shape index: {}]
  %s5 = inlined_call_operand.vmem [shape: f32[1,4], index: 5, kind: input, shape index: {}]
  %s6 = inlined_call_operand.vmem [shape: f32[8,128], index: 6, kind: input, shape index: {}]
  %s7 = inlined_call_operand.vmem [shape: f32[8,32], index: 7, kind: output, shape index: {}]
  %s8 = sld [smem:[#allocation0]]
  $region46: #{decoder_forward.1} parent=0
    _
  %s10 = ssub.s32 1, %s8
  %s11 = scalar_select 0, %s10, %s8
  $region1: #{decoder_forward.1} parent=0
    #allocation4 [shape = 'u8[196608]{0}', space=vmem, size = 0x30000, scoped, tag = 'input window, operand 1, single buffered']
    #allocation5 [shape = 's32[1]{0}', space=sflag, size = 0x4, scoped, tag = 'scoped memory for decoder_forward.1']
    %12 = vsyncpa [#allocation5], 0
    // Predicated region
    $region2: #{decoder_forward.1} parent=1 // pred_check
      _
    $region3: #{decoder_forward.1} parent=1 // pred_check_branch
      %14 = sbr.rel (0) target = $region5
    $region4: #{decoder_forward.1} parent=1 // pred_region
      _
    $region5: #{decoder_forward.1} parent=1 // pred_fallthru
      _
    // Predicated region
    $region6: #{decoder_forward.1} parent=1 // pred_check
      _
    $region7: #{decoder_forward.1} parent=1 // pred_check_branch
      %16 = sbr.rel (0) target = $region9
    $region8: #{decoder_forward.1} parent=1 // pred_region
      %s18 = ssub.s32 6144, 6144
      %19 = vsyncadd [#allocation5], %s18
      %s20 = sshll.u32 [#allocation4], 4
      %s21 = int_to_ptr.vmem [resolvable:$true] %s20
      %26 = dma.hbm_to_vmem [thread:$0]  %s1, 6144, %s21, [#allocation5], 384, 384, 24
    $region9: #{decoder_forward.1} parent=1 // pred_fallthru
      _
    // Predicated region
    $region10: #{decoder_forward.1} parent=1 // pred_check
      _
    $region11: #{decoder_forward.1} parent=1 // pred_check_branch
      %28 = sbr.rel (0) target = $region13
    $region12: #{decoder_forward.1} parent=1 // pred_region
      _
    $region13: #{decoder_forward.1} parent=1 // pred_fallthru
      _
    // Predicated region
    $region14: #{decoder_forward.1} parent=1 // pred_check
      _
    $region15: #{decoder_forward.1} parent=1 // pred_check_branch
      %30 = sbr.rel (0) target = $region17
    $region16: #{decoder_forward.1} parent=1 // pred_region
      _
    $region17: #{decoder_forward.1} parent=1 // pred_fallthru
      _
    // Predicated region
    $region18: #{decoder_forward.1} parent=1 // pred_check
      _
    $region19: #{decoder_forward.1} parent=1 // pred_check_branch
      %32 = sbr.rel (0) target = $region21
    $region20: #{decoder_forward.1} parent=1 // pred_region
      _
    $region21: #{decoder_forward.1} parent=1 // pred_fallthru
      _
    // Predicated region
    $region22: #{decoder_forward.1} parent=1 // pred_check
      _
    $region23: #{decoder_forward.1} parent=1 // pred_check_branch
      %34 = sbr.rel (0) target = $region25
    $region24: #{decoder_forward.1} parent=1 // pred_region
      _
    $region25: #{decoder_forward.1} parent=1 // pred_fallthru
      _
    // Predicated region
    $region26: #{decoder_forward.1} parent=1 // pred_check
      _
    $region27: #{decoder_forward.1} parent=1 // pred_check_branch
      %36 = sbr.rel (0) target = $region29
    $region28: #{decoder_forward.1} parent=1 // pred_region
      _
    $region29: #{decoder_forward.1} parent=1 // pred_fallthru
      _
    // Predicated region
    $region30: #{decoder_forward.1} parent=1 // pred_check
      _
    $region31: #{decoder_forward.1} parent=1 // pred_check_branch
      %38 = sbr.rel (0) target = $region33
    $region32: #{decoder_forward.1} parent=1 // pred_region
      %39 = dma.done [#allocation5], 6144
    $region33: #{decoder_forward.1} parent=1 // pred_fallthru
      _
    %p40 = scmp.eq.s32.totalorder 0, 0
    // Predicated region
    $region34: #{decoder_forward.1} parent=1 // pred_check
      %p41 = pneg %p40
    $region35: #{decoder_forward.1} parent=1 // pred_check_branch
      %43 = sbr.rel (%p41) target = $region37
    $region36: #{decoder_forward.1} parent=1 // pred_region
      %v44 = vld [vmem:[%s6] sm:$0xff]
      %45 = vst [vmem:[#allocation2] sm:$0xff] %v44
      %vm46 = vcmask 31744
      %47 = vst.msk [vmem:[#allocation3] sm:$0xff] %vm46, 0.0
    $region37: #{decoder_forward.1} parent=1 // pred_fallthru
      _
    %v48 = vld [vmem:[%s0] sm:$0xff]
    %v49 = vld [vmem:[%s0 + $0x8] sm:$0xf]
    %v50 = vld [vmem:[#allocation4] sm:$0xff]
    %v51 = vld [vmem:[#allocation4 + $0x8] sm:$0xff]
    %v52 = vld [vmem:[#allocation4 + $0x10] sm:$0xff]
    %v53 = vld [vmem:[#allocation4 + $0x18] sm:$0xff]
    %v54 = vld [vmem:[#allocation4 + $0x20] sm:$0xff]
    %v55 = vld [vmem:[#allocation4 + $0x28] sm:$0xff]
    %v56 = vld [vmem:[#allocation4 + $0x30] sm:$0xff]
    %v57 = vld [vmem:[#allocation4 + $0x38] sm:$0xff]
    %v58 = vld [vmem:[#allocation4 + $0x40] sm:$0xff]
    %v59 = vld [vmem:[#allocation4 + $0x48] sm:$0xff]
    %v60 = vld [vmem:[#allocation4 + $0x50] sm:$0xff]
    %v61 = vld [vmem:[#allocation4 + $0x58] sm:$0xff]
    %v62 = vld [vmem:[#allocation4 + $0x60] sm:$0xff]
    %v63 = vld [vmem:[#allocation4 + $0x68] sm:$0xff]
    %v64 = vld [vmem:[#allocation4 + $0x70] sm:$0xff]
    %v65 = vld [vmem:[#allocation4 + $0x78] sm:$0xff]
    %v66 = vld [vmem:[#allocation4 + $0x80] sm:$0xff]
    %v67 = vld [vmem:[#allocation4 + $0x88] sm:$0xff]
    %v68 = vld [vmem:[#allocation4 + $0x90] sm:$0xff]
    %v69 = vld [vmem:[#allocation4 + $0x98] sm:$0xff]
    %v70 = vld [vmem:[#allocation4 + $0xa0] sm:$0xff]
    %v71 = vld [vmem:[#allocation4 + $0xa8] sm:$0xff]
    %v72 = vld [vmem:[#allocation4 + $0xb0] sm:$0xff]
    %v73 = vld [vmem:[#allocation4 + $0xb8] sm:$0xff]
    %v74 = vld [vmem:[#allocation4 + $0xc0] sm:$0xff]
    %v75 = vld [vmem:[#allocation4 + $0xc8] sm:$0xff]
    %v76 = vld [vmem:[#allocation4 + $0xd0] sm:$0xff]
    %v77 = vld [vmem:[#allocation4 + $0xd8] sm:$0xff]
    %v78 = vld [vmem:[#allocation4 + $0xe0] sm:$0xff]
    %v79 = vld [vmem:[#allocation4 + $0xe8] sm:$0xff]
    %v80 = vld [vmem:[#allocation4 + $0xf0] sm:$0xff]
    %v81 = vld [vmem:[#allocation4 + $0xf8] sm:$0xff]
    %v82 = vld [vmem:[#allocation4 + $0x100] sm:$0xff]
    %v83 = vld [vmem:[#allocation4 + $0x108] sm:$0xff]
    %v84 = vld [vmem:[#allocation4 + $0x110] sm:$0xff]
    %v85 = vld [vmem:[#allocation4 + $0x118] sm:$0xff]
    %v86 = vld [vmem:[#allocation4 + $0x120] sm:$0xff]
    %v87 = vld [vmem:[#allocation4 + $0x128] sm:$0xff]
    %v88 = vld [vmem:[#allocation4 + $0x130] sm:$0xff]
    %v89 = vld [vmem:[#allocation4 + $0x138] sm:$0xff]
    %v90 = vld [vmem:[#allocation4 + $0x140] sm:$0xff]
    %v91 = vld [vmem:[#allocation4 + $0x148] sm:$0xff]
    %v92 = vld [vmem:[#allocation4 + $0x150] sm:$0xff]
    %v93 = vld [vmem:[#allocation4 + $0x158] sm:$0xff]
    %v94 = vld [vmem:[#allocation4 + $0x160] sm:$0xff]
    %v95 = vld [vmem:[#allocation4 + $0x168] sm:$0xff]
    %v96 = vld [vmem:[#allocation4 + $0x170] sm:$0xff]
    %v97 = vld [vmem:[#allocation4 + $0x178] sm:$0xff]
    %v98 = vld [vmem:[%s4] sm:$0xff]
    %v99 = vld [vmem:[%s4 + $0x8] sm:$0xff]
    %v100 = vld [vmem:[%s4 + $0x10] sm:$0xff]
    %v101 = vld [vmem:[%s4 + $0x18] sm:$0xff]
    %v102 = vld [vmem:[%s4 + $0x20] sm:$0xff]
    %v103 = vld [vmem:[%s4 + $0x28] sm:$0xff]
    %v104 = vld [vmem:[%s4 + $0x30] sm:$0xff]
    %v105 = vld [vmem:[%s4 + $0x38] sm:$0xff]
    %v106 = vld [vmem:[%s4 + $0x40] sm:$0xff]
    %v107 = vld [vmem:[%s4 + $0x48] sm:$0xff]
    %v108 = vld [vmem:[%s4 + $0x50] sm:$0xff]
    %v109 = vld [vmem:[%s4 + $0x58] sm:$0xff]
    %v110 = vld [vmem:[%s4 + $0x60] sm:$0xff]
    %v111 = vld [vmem:[%s4 + $0x68] sm:$0xff]
    %v112 = vld [vmem:[%s4 + $0x70] sm:$0xff]
    %v113 = vld [vmem:[%s4 + $0x78] sm:$0xff]
    %v114 = vld [vmem:[%s2] sm:$0x7]
    %v116 = vlaneseq
    %v117 = vshrl.u32 %v116, 7
    %v118 = vsub.s32 0, %v117
    %v119 = vrot.slane %v114, %v118
    %v120 = vlaneseq
    %v121 = vshrl.u32 %v120, 7
    %v122 = vsub.s32 1, %v121
    %v123 = vrot.slane %v114, %v122
    %v124 = vlaneseq
    %v125 = vshrl.u32 %v124, 7
    %v126 = vsub.s32 2, %v125
    %v127 = vrot.slane %v114, %v126
    %v131 = vld [vmem:[%s3] sm:$0x7]
    %v133 = vlaneseq
    %v134 = vshrl.u32 %v133, 7
    %v135 = vsub.s32 0, %v134
    %v136 = vrot.slane %v131, %v135
    %v137 = vlaneseq
    %v138 = vshrl.u32 %v137, 7
    %v139 = vsub.s32 1, %v138
    %v140 = vrot.slane %v131, %v139
    %v141 = vlaneseq
    %v142 = vshrl.u32 %v141, 7
    %v143 = vsub.s32 2, %v142
    %v144 = vrot.slane %v131, %v143
    %v148 = vld [vmem:[%s5] sm:$0x1]
    %v150 = vlaneseq
    %v151 = vshrl.u32 %v150, 7
    %v152 = vsub.s32 0, %v151
    %v153 = vrot.slane %v148, %v152
    %v155 = vld [vmem:[#allocation2] sm:$0xff]
    %v156 = vld [vmem:[#allocation3] sm:$0xff]
    %v159 = vcombine.high %v48, %v48
    %vm160 = vcmask 31744
    %v162 = vsel %vm160, %v156, 0
    %vm164 = vcmask 1043456
    %v165 = vsel %vm164, %v48, 0
    %v167 = vsel %vm164, %v159, 0
    %v169 = vsel %vm164, %v49, 0
    %171 = vmatprep.subr.mxu0 0.0
    %172 = vmatpush1.msra.mxu0 0.0
    %173 = vmatprep.subr.mxu0 0.0
    %174 = vmatpush1.msra.mxu0 0.0
    %175 = vmatprep.subr.mxu0 0.0
    %176 = vmatpush1.msra.mxu0 0.0
    %177 = vmatprep.subr.mxu0 0.0
    %178 = vmatpush1.msra.mxu0 0.0
    %179 = vmatprep.subr.mxu0 0.0
    %180 = vmatpush1.msra.mxu0 0.0
    %181 = vmatprep.subr.mxu0 0.0
    %182 = vmatpush1.msra.mxu0 0.0
    %183 = vmatprep.subr.mxu0 0.0
    %184 = vmatpush1.msra.mxu0 0.0
    %185 = vmatprep.subr.mxu0 0.0
    %186 = vmatpush1.msra.mxu0 0.0
    %187 = vmatprep.subr.mxu0 0.0
    %188 = vmatpush1.msra.mxu0 0.0
    %189 = vmatprep.subr.mxu0 0.0
    %190 = vmatpush1.msra.mxu0 0.0
    %191 = vmatprep.subr.mxu0 0.0
    %192 = vmatpush1.msra.mxu0 0.0
    %193 = vmatprep.subr.mxu0 0.0
    %194 = vmatpush1.msra.mxu0 0.0
    %195 = vmatprep.subr.mxu0 0.0
    %196 = vmatpush1.msra.mxu0 0.0
    %197 = vmatprep.subr.mxu0 0.0
    %198 = vmatpush1.msra.mxu0 0.0
    %199 = vmatprep.subr.mxu0 0.0
    %200 = vmatpush1.msra.mxu0 0.0
    %201 = vmatprep.subr.mxu0 %v167
    %202 = vmatpush1.msra.mxu0 %v165
    %203 = vmatprep.subr.mxu0 0.0
    %204 = vmatpush2.msra.mxu0 0.0
    %205 = vmatprep.subr.mxu0 0.0
    %206 = vmatpush2.msra.mxu0 0.0
    %207 = vmatprep.subr.mxu0 0.0
    %208 = vmatpush2.msra.mxu0 0.0
    %209 = vmatprep.subr.mxu0 0.0
    %210 = vmatpush2.msra.mxu0 0.0
    %211 = vmatprep.subr.mxu0 0.0
    %212 = vmatpush2.msra.mxu0 0.0
    %213 = vmatprep.subr.mxu0 0.0
    %214 = vmatpush2.msra.mxu0 0.0
    %215 = vmatprep.subr.mxu0 0.0
    %216 = vmatpush2.msra.mxu0 0.0
    %217 = vmatprep.subr.mxu0 0.0
    %218 = vmatpush2.msra.mxu0 0.0
    %219 = vmatprep.subr.mxu0 0.0
    %220 = vmatpush2.msra.mxu0 0.0
    %221 = vmatprep.subr.mxu0 0.0
    %222 = vmatpush2.msra.mxu0 0.0
    %223 = vmatprep.subr.mxu0 0.0
    %224 = vmatpush2.msra.mxu0 0.0
    %225 = vmatprep.subr.mxu0 0.0
    %226 = vmatpush2.msra.mxu0 0.0
    %227 = vmatprep.subr.mxu0 0.0
    %228 = vmatpush2.msra.mxu0 0.0
    %229 = vmatprep.subr.mxu0 0.0
    %230 = vmatpush2.msra.mxu0 0.0
    %231 = vmatprep.subr.mxu0 0.0
    %232 = vmatpush2.msra.mxu0 0.0
    %233 = vmatprep.subr.mxu0 0.0
    %234 = vmatpush2.msra.mxu0 0.0
    %235 = vmatprep.mubr.f32.mxu0 0.0
    %236 = vmatmul.mubr.f32.gmra.mxu0 %v162
    %v237 = vpop.f32.mrf.mxu0
    %v238 = vadd.f32 %v119, %v237
    %v239 = vpop.f32.mrf.mxu0
    %v240 = vadd.f32 %v123, %v239
    %241 = vdwg.mxu0
    %242 = vmatprep.subr.mxu0 0.0
    %243 = vmatpush1.msra.mxu0 0.0
    %244 = vmatprep.subr.mxu0 0.0
    %245 = vmatpush1.msra.mxu0 0.0
    %246 = vmatprep.subr.mxu0 0.0
    %247 = vmatpush1.msra.mxu0 0.0
    %248 = vmatprep.subr.mxu0 0.0
    %249 = vmatpush1.msra.mxu0 0.0
    %250 = vmatprep.subr.mxu0 0.0
    %251 = vmatpush1.msra.mxu0 0.0
    %252 = vmatprep.subr.mxu0 0.0
    %253 = vmatpush1.msra.mxu0 0.0
    %254 = vmatprep.subr.mxu0 0.0
    %255 = vmatpush1.msra.mxu0 0.0
    %256 = vmatprep.subr.mxu0 0.0
    %257 = vmatpush1.msra.mxu0 0.0
    %258 = vmatprep.subr.mxu0 0.0
    %259 = vmatpush1.msra.mxu0 0.0
    %260 = vmatprep.subr.mxu0 0.0
    %261 = vmatpush1.msra.mxu0 0.0
    %262 = vmatprep.subr.mxu0 0.0
    %263 = vmatpush1.msra.mxu0 0.0
    %264 = vmatprep.subr.mxu0 0.0
    %265 = vmatpush1.msra.mxu0 0.0
    %266 = vmatprep.subr.mxu0 0.0
    %267 = vmatpush1.msra.mxu0 0.0
    %268 = vmatprep.subr.mxu0 0.0
    %269 = vmatpush1.msra.mxu0 0.0
    %270 = vmatprep.subr.mxu0 0.0
    %271 = vmatpush1.msra.mxu0 0.0
    %272 = vmatprep.subr.mxu0 0.0
    %273 = vmatpush1.msra.mxu0 %v169
    %274 = vmatprep.subr.mxu0 0.0
    %275 = vmatpush2.msra.mxu0 0.0
    %276 = vmatprep.subr.mxu0 0.0
    %277 = vmatpush2.msra.mxu0 0.0
    %278 = vmatprep.subr.mxu0 0.0
    %279 = vmatpush2.msra.mxu0 0.0
    %280 = vmatprep.subr.mxu0 0.0
    %281 = vmatpush2.msra.mxu0 0.0
    %282 = vmatprep.subr.mxu0 0.0
    %283 = vmatpush2.msra.mxu0 0.0
    %284 = vmatprep.subr.mxu0 0.0
    %285 = vmatpush2.msra.mxu0 0.0
    %286 = vmatprep.subr.mxu0 0.0
    %287 = vmatpush2.msra.mxu0 0.0
    %288 = vmatprep.subr.mxu0 0.0
    %289 = vmatpush2.msra.mxu0 0.0
    %290 = vmatprep.subr.mxu0 0.0
    %291 = vmatpush2.msra.mxu0 0.0
    %292 = vmatprep.subr.mxu0 0.0
    %293 = vmatpush2.msra.mxu0 0.0
    %294 = vmatprep.subr.mxu0 0.0
    %295 = vmatpush2.msra.mxu0 0.0
    %296 = vmatprep.subr.mxu0 0.0
    %297 = vmatpush2.msra.mxu0 0.0
    %298 = vmatprep.subr.mxu0 0.0
    %299 = vmatpush2.msra.mxu0 0.0
    %300 = vmatprep.subr.mxu0 0.0
    %301 = vmatpush2.msra.mxu0 0.0
    %302 = vmatprep.subr.mxu0 0.0
    %303 = vmatpush2.msra.mxu0 0.0
    %304 = vmatprep.subr.mxu0 0.0
    %305 = vmatpush2.msra.mxu0 0.0
    %306 = vmatprep.mubr.f32.mxu0 0.0
    %307 = vmatmul.mubr.f32.gmra.mxu0 %v162
    %v308 = vpop.f32.mrf.mxu0
    %v309 = vadd.f32 %v127, %v308
    %v310 = vpop.f32.mrf.mxu0
    %311 = vdwg.mxu0
    %312 = vmatprep.subr.mxu0 %v96
    %313 = vmatpush1.msra.mxu0 %v95
    %314 = vmatprep.subr.mxu0 %v93
    %315 = vmatpush1.msra.mxu0 %v92
    %316 = vmatprep.subr.mxu0 %v90
    %317 = vmatpush1.msra.mxu0 %v89
    %318 = vmatprep.subr.mxu0 %v87
    %319 = vmatpush1.msra.mxu0 %v86
    %320 = vmatprep.subr.mxu0 %v84
    %321 = vmatpush1.msra.mxu0 %v83
    %322 = vmatprep.subr.mxu0 %v81
    %323 = vmatpush1.msra.mxu0 %v80
    %324 = vmatprep.subr.mxu0 %v78
    %325 = vmatpush1.msra.mxu0 %v77
    %326 = vmatprep.subr.mxu0 %v75
    %327 = vmatpush1.msra.mxu0 %v74
    %328 = vmatprep.subr.mxu0 %v72
    %329 = vmatpush1.msra.mxu0 %v71
    %330 = vmatprep.subr.mxu0 %v69
    %331 = vmatpush1.msra.mxu0 %v68
    %332 = vmatprep.subr.mxu0 %v66
    %333 = vmatpush1.msra.mxu0 %v65
    %334 = vmatprep.subr.mxu0 %v63
    %335 = vmatpush1.msra.mxu0 %v62
    %336 = vmatprep.subr.mxu0 %v60
    %337 = vmatpush1.msra.mxu0 %v59
    %338 = vmatprep.subr.mxu0 %v57
    %339 = vmatpush1.msra.mxu0 %v56
    %340 = vmatprep.subr.mxu0 %v54
    %341 = vmatpush1.msra.mxu0 %v53
    %342 = vmatprep.subr.mxu0 %v51
    %343 = vmatpush1.msra.mxu0 %v50
    %344 = vmatprep.subr.mxu0 0.0
    %345 = vmatpush2.msra.mxu0 0.0
    %346 = vmatprep.subr.mxu0 0.0
    %347 = vmatpush2.msra.mxu0 0.0
    %348 = vmatprep.subr.mxu0 0.0
    %349 = vmatpush2.msra.mxu0 0.0
    %350 = vmatprep.subr.mxu0 0.0
    %351 = vmatpush2.msra.mxu0 0.0
    %352 = vmatprep.subr.mxu0 0.0
    %353 = vmatpush2.msra.mxu0 0.0
    %354 = vmatprep.subr.mxu0 0.0
    %355 = vmatpush2.msra.mxu0 0.0
    %356 = vmatprep.subr.mxu0 0.0
    %357 = vmatpush2.msra.mxu0 0.0
    %358 = vmatprep.subr.mxu0 0.0
    %359 = vmatpush2.msra.mxu0 0.0
    %360 = vmatprep.subr.mxu0 0.0
    %361 = vmatpush2.msra.mxu0 0.0
    %362 = vmatprep.subr.mxu0 0.0
    %363 = vmatpush2.msra.mxu0 0.0
    %364 = vmatprep.subr.mxu0 0.0
    %365 = vmatpush2.msra.mxu0 0.0
    %366 = vmatprep.subr.mxu0 0.0
    %367 = vmatpush2.msra.mxu0 0.0
    %368 = vmatprep.subr.mxu0 0.0
    %369 = vmatpush2.msra.mxu0 0.0
    %370 = vmatprep.subr.mxu0 0.0
    %371 = vmatpush2.msra.mxu0 0.0
    %372 = vmatprep.subr.mxu0 0.0
    %373 = vmatpush2.msra.mxu0 0.0
    %374 = vmatprep.subr.mxu0 0.0
    %375 = vmatpush2.msra.mxu0 0.0
    %376 = vmatprep.mubr.f32.mxu0 0.0
    %377 = vmatmul.mubr.f32.gmra.mxu0 %v155
    %v378 = vpop.f32.mrf.mxu0
    %v379 = vadd.f32 %v136, %v378
    %v380 = vpop.f32.mrf.mxu0
    %v381 = vadd.f32 %v140, %v380
    %382 = vdwg.mxu0
    %383 = vmatprep.subr.mxu0 0.0
    %384 = vmatpush1.msra.mxu0 %v97
    %385 = vmatprep.subr.mxu0 0.0
    %386 = vmatpush1.msra.mxu0 %v94
    %387 = vmatprep.subr.mxu0 0.0
    %388 = vmatpush1.msra.mxu0 %v91
    %389 = vmatprep.subr.mxu0 0.0
    %390 = vmatpush1.msra.mxu0 %v88
    %391 = vmatprep.subr.mxu0 0.0
    %392 = vmatpush1.msra.mxu0 %v85
    %393 = vmatprep.subr.mxu0 0.0
    %394 = vmatpush1.msra.mxu0 %v82
    %395 = vmatprep.subr.mxu0 0.0
    %396 = vmatpush1.msra.mxu0 %v79
    %397 = vmatprep.subr.mxu0 0.0
    %398 = vmatpush1.msra.mxu0 %v76
    %399 = vmatprep.subr.mxu0 0.0
    %400 = vmatpush1.msra.mxu0 %v73
    %401 = vmatprep.subr.mxu0 0.0
    %402 = vmatpush1.msra.mxu0 %v70
    %403 = vmatprep.subr.mxu0 0.0
    %404 = vmatpush1.msra.mxu0 %v67
    %405 = vmatprep.subr.mxu0 0.0
    %406 = vmatpush1.msra.mxu0 %v64
    %407 = vmatprep.subr.mxu0 0.0
    %408 = vmatpush1.msra.mxu0 %v61
    %409 = vmatprep.subr.mxu0 0.0
    %410 = vmatpush1.msra.mxu0 %v58
    %411 = vmatprep.subr.mxu0 0.0
    %412 = vmatpush1.msra.mxu0 %v55
    %413 = vmatprep.subr.mxu0 0.0
    %414 = vmatpush1.msra.mxu0 %v52
    %415 = vmatprep.subr.mxu0 0.0
    %416 = vmatpush2.msra.mxu0 0.0
    %417 = vmatprep.subr.mxu0 0.0
    %418 = vmatpush2.msra.mxu0 0.0
    %419 = vmatprep.subr.mxu0 0.0
    %420 = vmatpush2.msra.mxu0 0.0
    %421 = vmatprep.subr.mxu0 0.0
    %422 = vmatpush2.msra.mxu0 0.0
    %423 = vmatprep.subr.mxu0 0.0
    %424 = vmatpush2.msra.mxu0 0.0
    %425 = vmatprep.subr.mxu0 0.0
    %426 = vmatpush2.msra.mxu0 0.0
    %427 = vmatprep.subr.mxu0 0.0
    %428 = vmatpush2.msra.mxu0 0.0
    %429 = vmatprep.subr.mxu0 0.0
    %430 = vmatpush2.msra.mxu0 0.0
    %431 = vmatprep.subr.mxu0 0.0
    %432 = vmatpush2.msra.mxu0 0.0
    %433 = vmatprep.subr.mxu0 0.0
    %434 = vmatpush2.msra.mxu0 0.0
    %435 = vmatprep.subr.mxu0 0.0
    %436 = vmatpush2.msra.mxu0 0.0
    %437 = vmatprep.subr.mxu0 0.0
    %438 = vmatpush2.msra.mxu0 0.0
    %439 = vmatprep.subr.mxu0 0.0
    %440 = vmatpush2.msra.mxu0 0.0
    %441 = vmatprep.subr.mxu0 0.0
    %442 = vmatpush2.msra.mxu0 0.0
    %443 = vmatprep.subr.mxu0 0.0
    %444 = vmatpush2.msra.mxu0 0.0
    %445 = vmatprep.subr.mxu0 0.0
    %446 = vmatpush2.msra.mxu0 0.0
    %447 = vmatprep.mubr.f32.mxu0 0.0
    %448 = vmatmul.mubr.f32.gmra.mxu0 %v155
    %v449 = vpop.f32.mrf.mxu0
    %v450 = vadd.f32 %v144, %v449
    %v451 = vpop.f32.mrf.mxu0
    %452 = vdwg.mxu0
    %v453 = vadd.f32 %v238, %v379
    %v454 = vxor.u32 %v453, 2147483648
    %v455 = vmul.f32 %v454, 1.442695
    %v456 = vpow.pop %v455
    %v457 = vadd.f32 %v456, 1.0
    %v458 = vrcp.pop %v457
    %v459 = vmul.f32 1.0, %v458
    %v460 = vadd.f32 %v240, %v381
    %v461 = vxor.u32 %v460, 2147483648
    %v462 = vmul.f32 %v461, 1.442695
    %v463 = vpow.pop %v462
    %v464 = vadd.f32 %v463, 1.0
    %v465 = vrcp.pop %v464
    %v466 = vmul.f32 1.0, %v465
    %v467 = vmul.f32 %v459, %v450
    %v468 = vadd.f32 %v309, %v467
    %v469 = vtanh.pop %v468
    %v470 = vsub.f32 1.0, %v466
    %v471 = vmul.f32 %v470, %v469
    %v472 = vmul.f32 %v466, %v155
    %v473 = vadd.f32 %v471, %v472
    %474 = vmatprep.subr.mxu0 0.0
    %475 = vmatpush1.msra.mxu0 %v113
    %476 = vmatprep.subr.mxu0 0.0
    %477 = vmatpush1.msra.mxu0 %v112
    %478 = vmatprep.subr.mxu0 0.0
    %479 = vmatpush1.msra.mxu0 %v111
    %480 = vmatprep.subr.mxu0 0.0
    %481 = vmatpush1.msra.mxu0 %v110
    %482 = vmatprep.subr.mxu0 0.0
    %483 = vmatpush1.msra.mxu0 %v109
    %484 = vmatprep.subr.mxu0 0.0
    %485 = vmatpush1.msra.mxu0 %v108
    %486 = vmatprep.subr.mxu0 0.0
    %487 = vmatpush1.msra.mxu0 %v107
    %488 = vmatprep.subr.mxu0 0.0
    %489 = vmatpush1.msra.mxu0 %v106
    %490 = vmatprep.subr.mxu0 0.0
    %491 = vmatpush1.msra.mxu0 %v105
    %492 = vmatprep.subr.mxu0 0.0
    %493 = vmatpush1.msra.mxu0 %v104
    %494 = vmatprep.subr.mxu0 0.0
    %495 = vmatpush1.msra.mxu0 %v103
    %496 = vmatprep.subr.mxu0 0.0
    %497 = vmatpush1.msra.mxu0 %v102
    %498 = vmatprep.subr.mxu0 0.0
    %499 = vmatpush1.msra.mxu0 %v101
    %500 = vmatprep.subr.mxu0 0.0
    %501 = vmatpush1.msra.mxu0 %v100
    %502 = vmatprep.subr.mxu0 0.0
    %503 = vmatpush1.msra.mxu0 %v99
    %504 = vmatprep.subr.mxu0 0.0
    %505 = vmatpush1.msra.mxu0 %v98
    %506 = vmatprep.subr.mxu0 0.0
    %507 = vmatpush2.msra.mxu0 0.0
    %508 = vmatprep.subr.mxu0 0.0
    %509 = vmatpush2.msra.mxu0 0.0
    %510 = vmatprep.subr.mxu0 0.0
    %511 = vmatpush2.msra.mxu0 0.0
    %512 = vmatprep.subr.mxu0 0.0
    %513 = vmatpush2.msra.mxu0 0.0
    %514 = vmatprep.subr.mxu0 0.0
    %515 = vmatpush2.msra.mxu0 0.0
    %516 = vmatprep.subr.mxu0 0.0
    %517 = vmatpush2.msra.mxu0 0.0
    %518 = vmatprep.subr.mxu0 0.0
    %519 = vmatpush2.msra.mxu0 0.0
    %520 = vmatprep.subr.mxu0 0.0
    %521 = vmatpush2.msra.mxu0 0.0
    %522 = vmatprep.subr.mxu0 0.0
    %523 = vmatpush2.msra.mxu0 0.0
    %524 = vmatprep.subr.mxu0 0.0
    %525 = vmatpush2.msra.mxu0 0.0
    %526 = vmatprep.subr.mxu0 0.0
    %527 = vmatpush2.msra.mxu0 0.0
    %528 = vmatprep.subr.mxu0 0.0
    %529 = vmatpush2.msra.mxu0 0.0
    %530 = vmatprep.subr.mxu0 0.0
    %531 = vmatpush2.msra.mxu0 0.0
    %532 = vmatprep.subr.mxu0 0.0
    %533 = vmatpush2.msra.mxu0 0.0
    %534 = vmatprep.subr.mxu0 0.0
    %535 = vmatpush2.msra.mxu0 0.0
    %536 = vmatprep.subr.mxu0 0.0
    %537 = vmatpush2.msra.mxu0 0.0
    %538 = vmatprep.mubr.f32.mxu0 0.0
    %539 = vmatmul.mubr.f32.gmra.mxu0 %v473
    %v540 = vpop.f32.mrf.mxu0
    %v541 = vadd.f32 %v153, %v540
    %v542 = vpop.f32.mrf.mxu0
    %543 = vdwg.mxu0
    %544 = vst.msk [vmem:[%s7] sm:$0xff] %vm160, %v541
    %v546 = vsel %vm160, %v541, 0
    %548 = vmatprep.subr.mxu0 0.0
    %549 = vmatpush1.msra.mxu0 0.0
    %550 = vmatprep.subr.mxu0 0.0
    %551 = vmatpush1.msra.mxu0 0.0
    %552 = vmatprep.subr.mxu0 0.0
    %553 = vmatpush1.msra.mxu0 0.0
    %554 = vmatprep.subr.mxu0 0.0
    %555 = vmatpush1.msra.mxu0 0.0
    %556 = vmatprep.subr.mxu0 0.0
    %557 = vmatpush1.msra.mxu0 0.0
    %558 = vmatprep.subr.mxu0 0.0
    %559 = vmatpush1.msra.mxu0 0.0
    %560 = vmatprep.subr.mxu0 0.0
    %561 = vmatpush1.msra.mxu0 0.0
    %562 = vmatprep.subr.mxu0 0.0
    %563 = vmatpush1.msra.mxu0 0.0
    %564 = vmatprep.subr.mxu0 0.0
    %565 = vmatpush1.msra.mxu0 0.0
    %566 = vmatprep.subr.mxu0 0.0
    %567 = vmatpush1.msra.mxu0 0.0
    %568 = vmatprep.subr.mxu0 0.0
    %569 = vmatpush1.msra.mxu0 0.0
    %570 = vmatprep.subr.mxu0 0.0
    %571 = vmatpush1.msra.mxu0 0.0
    %572 = vmatprep.subr.mxu0 0.0
    %573 = vmatpush1.msra.mxu0 0.0
    %574 = vmatprep.subr.mxu0 0.0
    %575 = vmatpush1.msra.mxu0 0.0
    %576 = vmatprep.subr.mxu0 0.0
    %577 = vmatpush1.msra.mxu0 0.0
    %578 = vmatprep.subr.mxu0 %v167
    %579 = vmatpush1.msra.mxu0 %v165
    %580 = vmatprep.subr.mxu0 0.0
    %581 = vmatpush2.msra.mxu0 0.0
    %582 = vmatprep.subr.mxu0 0.0
    %583 = vmatpush2.msra.mxu0 0.0
    %584 = vmatprep.subr.mxu0 0.0
    %585 = vmatpush2.msra.mxu0 0.0
    %586 = vmatprep.subr.mxu0 0.0
    %587 = vmatpush2.msra.mxu0 0.0
    %588 = vmatprep.subr.mxu0 0.0
    %589 = vmatpush2.msra.mxu0 0.0
    %590 = vmatprep.subr.mxu0 0.0
    %591 = vmatpush2.msra.mxu0 0.0
    %592 = vmatprep.subr.mxu0 0.0
    %593 = vmatpush2.msra.mxu0 0.0
    %594 = vmatprep.subr.mxu0 0.0
    %595 = vmatpush2.msra.mxu0 0.0
    %596 = vmatprep.subr.mxu0 0.0
    %597 = vmatpush2.msra.mxu0 0.0
    %598 = vmatprep.subr.mxu0 0.0
    %599 = vmatpush2.msra.mxu0 0.0
    %600 = vmatprep.subr.mxu0 0.0
    %601 = vmatpush2.msra.mxu0 0.0
    %602 = vmatprep.subr.mxu0 0.0
    %603 = vmatpush2.msra.mxu0 0.0
    %604 = vmatprep.subr.mxu0 0.0
    %605 = vmatpush2.msra.mxu0 0.0
    %606 = vmatprep.subr.mxu0 0.0
    %607 = vmatpush2.msra.mxu0 0.0
    %608 = vmatprep.subr.mxu0 0.0
    %609 = vmatpush2.msra.mxu0 0.0
    %610 = vmatprep.subr.mxu0 0.0
    %611 = vmatpush2.msra.mxu0 0.0
    %612 = vmatprep.mubr.f32.mxu0 0.0
    %613 = vmatmul.mubr.f32.gmra.mxu0 %v546
    %v614 = vpop.f32.mrf.mxu0
    %v615 = vadd.f32 %v119, %v614
    %v616 = vpop.f32.mrf.mxu0
    %v617 = vadd.f32 %v123, %v616
    %618 = vdwg.mxu0
    %619 = vmatprep.subr.mxu0 0.0
    %620 = vmatpush1.msra.mxu0 0.0
    %621 = vmatprep.subr.mxu0 0.0
    %622 = vmatpush1.msra.mxu0 0.0
    %623 = vmatprep.subr.mxu0 0.0
    %624 = vmatpush1.msra.mxu0 0.0
    %625 = vmatprep.subr.mxu0 0.0
    %626 = vmatpush1.msra.mxu0 0.0
    %627 = vmatprep.subr.mxu0 0.0
    %628 = vmatpush1.msra.mxu0 0.0
    %629 = vmatprep.subr.mxu0 0.0
    %630 = vmatpush1.msra.mxu0 0.0
    %631 = vmatprep.subr.mxu0 0.0
    %632 = vmatpush1.msra.mxu0 0.0
    %633 = vmatprep.subr.mxu0 0.0
    %634 = vmatpush1.msra.mxu0 0.0
    %635 = vmatprep.subr.mxu0 0.0
    %636 = vmatpush1.msra.mxu0 0.0
    %637 = vmatprep.subr.mxu0 0.0
    %638 = vmatpush1.msra.mxu0 0.0
    %639 = vmatprep.subr.mxu0 0.0
    %640 = vmatpush1.msra.mxu0 0.0
    %641 = vmatprep.subr.mxu0 0.0
    %642 = vmatpush1.msra.mxu0 0.0
    %643 = vmatprep.subr.mxu0 0.0
    %644 = vmatpush1.msra.mxu0 0.0
    %645 = vmatprep.subr.mxu0 0.0
    %646 = vmatpush1.msra.mxu0 0.0
    %647 = vmatprep.subr.mxu0 0.0
    %648 = vmatpush1.msra.mxu0 0.0
    %649 = vmatprep.subr.mxu0 0.0
    %650 = vmatpush1.msra.mxu0 %v169
    %651 = vmatprep.subr.mxu0 0.0
    %652 = vmatpush2.msra.mxu0 0.0
    %653 = vmatprep.subr.mxu0 0.0
    %654 = vmatpush2.msra.mxu0 0.0
    %655 = vmatprep.subr.mxu0 0.0
    %656 = vmatpush2.msra.mxu0 0.0
    %657 = vmatprep.subr.mxu0 0.0
    %658 = vmatpush2.msra.mxu0 0.0
    %659 = vmatprep.subr.mxu0 0.0
    %660 = vmatpush2.msra.mxu0 0.0
    %661 = vmatprep.subr.mxu0 0.0
    %662 = vmatpush2.msra.mxu0 0.0
    %663 = vmatprep.subr.mxu0 0.0
    %664 = vmatpush2.msra.mxu0 0.0
    %665 = vmatprep.subr.mxu0 0.0
    %666 = vmatpush2.msra.mxu0 0.0
    %667 = vmatprep.subr.mxu0 0.0
    %668 = vmatpush2.msra.mxu0 0.0
    %669 = vmatprep.subr.mxu0 0.0
    %670 = vmatpush2.msra.mxu0 0.0
    %671 = vmatprep.subr.mxu0 0.0
    %672 = vmatpush2.msra.mxu0 0.0
    %673 = vmatprep.subr.mxu0 0.0
    %674 = vmatpush2.msra.mxu0 0.0
    %675 = vmatprep.subr.mxu0 0.0
    %676 = vmatpush2.msra.mxu0 0.0
    %677 = vmatprep.subr.mxu0 0.0
    %678 = vmatpush2.msra.mxu0 0.0
    %679 = vmatprep.subr.mxu0 0.0
    %680 = vmatpush2.msra.mxu0 0.0
    %681 = vmatprep.subr.mxu0 0.0
    %682 = vmatpush2.msra.mxu0 0.0
    %683 = vmatprep.mubr.f32.mxu0 0.0
    %684 = vmatmul.mubr.f32.gmra.mxu0 %v546
    %v685 = vpop.f32.mrf.mxu0
    %v686 = vadd.f32 %v127, %v685
    %v687 = vpop.f32.mrf.mxu0
    %688 = vdwg.mxu0
    %689 = vmatprep.subr.mxu0 %v96
    %690 = vmatpush1.msra.mxu0 %v95
    %691 = vmatprep.subr.mxu0 %v93
    %692 = vmatpush1.msra.mxu0 %v92
    %693 = vmatprep.subr.mxu0 %v90
    %694 = vmatpush1.msra.mxu0 %v89
    %695 = vmatprep.subr.mxu0 %v87
    %696 = vmatpush1.msra.mxu0 %v86
    %697 = vmatprep.subr.mxu0 %v84
    %698 = vmatpush1.msra.mxu0 %v83
    %699 = vmatprep.subr.mxu0 %v81
    %700 = vmatpush1.msra.mxu0 %v80
    %701 = vmatprep.subr.mxu0 %v78
    %702 = vmatpush1.msra.mxu0 %v77
    %703 = vmatprep.subr.mxu0 %v75
    %704 = vmatpush1.msra.mxu0 %v74
    %705 = vmatprep.subr.mxu0 %v72
    %706 = vmatpush1.msra.mxu0 %v71
    %707 = vmatprep.subr.mxu0 %v69
    %708 = vmatpush1.msra.mxu0 %v68
    %709 = vmatprep.subr.mxu0 %v66
    %710 = vmatpush1.msra.mxu0 %v65
    %711 = vmatprep.subr.mxu0 %v63
    %712 = vmatpush1.msra.mxu0 %v62
    %713 = vmatprep.subr.mxu0 %v60
    %714 = vmatpush1.msra.mxu0 %v59
    %715 = vmatprep.subr.mxu0 %v57
    %716 = vmatpush1.msra.mxu0 %v56
    %717 = vmatprep.subr.mxu0 %v54
    %718 = vmatpush1.msra.mxu0 %v53
    %719 = vmatprep.subr.mxu0 %v51
    %720 = vmatpush1.msra.mxu0 %v50
    %721 = vmatprep.subr.mxu0 0.0
    %722 = vmatpush2.msra.mxu0 0.0
    %723 = vmatprep.subr.mxu0 0.0
    %724 = vmatpush2.msra.mxu0 0.0
    %725 = vmatprep.subr.mxu0 0.0
    %726 = vmatpush2.msra.mxu0 0.0
    %727 = vmatprep.subr.mxu0 0.0
    %728 = vmatpush2.msra.mxu0 0.0
    %729 = vmatprep.subr.mxu0 0.0
    %730 = vmatpush2.msra.mxu0 0.0
    %731 = vmatprep.subr.mxu0 0.0
    %732 = vmatpush2.msra.mxu0 0.0
    %733 = vmatprep.subr.mxu0 0.0
    %734 = vmatpush2.msra.mxu0 0.0
    %735 = vmatprep.subr.mxu0 0.0
    %736 = vmatpush2.msra.mxu0 0.0
    %737 = vmatprep.subr.mxu0 0.0
    %738 = vmatpush2.msra.mxu0 0.0
    %739 = vmatprep.subr.mxu0 0.0
    %740 = vmatpush2.msra.mxu0 0.0
    %741 = vmatprep.subr.mxu0 0.0
    %742 = vmatpush2.msra.mxu0 0.0
    %743 = vmatprep.subr.mxu0 0.0
    %744 = vmatpush2.msra.mxu0 0.0
    %745 = vmatprep.subr.mxu0 0.0
    %746 = vmatpush2.msra.mxu0 0.0
    %747 = vmatprep.subr.mxu0 0.0
    %748 = vmatpush2.msra.mxu0 0.0
    %749 = vmatprep.subr.mxu0 0.0
    %750 = vmatpush2.msra.mxu0 0.0
    %751 = vmatprep.subr.mxu0 0.0
    %752 = vmatpush2.msra.mxu0 0.0
    %753 = vmatprep.mubr.f32.mxu0 0.0
    %754 = vmatmul.mubr.f32.gmra.mxu0 %v473
    %v755 = vpop.f32.mrf.mxu0
    %v756 = vadd.f32 %v136, %v755
    %v757 = vpop.f32.mrf.mxu0
    %v758 = vadd.f32 %v140, %v757
    %759 = vdwg.mxu0
    %760 = vmatprep.subr.mxu0 0.0
    %761 = vmatpush1.msra.mxu0 %v97
    %762 = vmatprep.subr.mxu0 0.0
    %763 = vmatpush1.msra.mxu0 %v94
    %764 = vmatprep.subr.mxu0 0.0
    %765 = vmatpush1.msra.mxu0 %v91
    %766 = vmatprep.subr.mxu0 0.0
    %767 = vmatpush1.msra.mxu0 %v88
    %768 = vmatprep.subr.mxu0 0.0
    %769 = vmatpush1.msra.mxu0 %v85
    %770 = vmatprep.subr.mxu0 0.0
    %771 = vmatpush1.msra.mxu0 %v82
    %772 = vmatprep.subr.mxu0 0.0
    %773 = vmatpush1.msra.mxu0 %v79
    %774 = vmatprep.subr.mxu0 0.0
    %775 = vmatpush1.msra.mxu0 %v76
    %776 = vmatprep.subr.mxu0 0.0
    %777 = vmatpush1.msra.mxu0 %v73
    %778 = vmatprep.subr.mxu0 0.0
    %779 = vmatpush1.msra.mxu0 %v70
    %780 = vmatprep.subr.mxu0 0.0
    %781 = vmatpush1.msra.mxu0 %v67
    %782 = vmatprep.subr.mxu0 0.0
    %783 = vmatpush1.msra.mxu0 %v64
    %784 = vmatprep.subr.mxu0 0.0
    %785 = vmatpush1.msra.mxu0 %v61
    %786 = vmatprep.subr.mxu0 0.0
    %787 = vmatpush1.msra.mxu0 %v58
    %788 = vmatprep.subr.mxu0 0.0
    %789 = vmatpush1.msra.mxu0 %v55
    %790 = vmatprep.subr.mxu0 0.0
    %791 = vmatpush1.msra.mxu0 %v52
    %792 = vmatprep.subr.mxu0 0.0
    %793 = vmatpush2.msra.mxu0 0.0
    %794 = vmatprep.subr.mxu0 0.0
    %795 = vmatpush2.msra.mxu0 0.0
    %796 = vmatprep.subr.mxu0 0.0
    %797 = vmatpush2.msra.mxu0 0.0
    %798 = vmatprep.subr.mxu0 0.0
    %799 = vmatpush2.msra.mxu0 0.0
    %800 = vmatprep.subr.mxu0 0.0
    %801 = vmatpush2.msra.mxu0 0.0
    %802 = vmatprep.subr.mxu0 0.0
    %803 = vmatpush2.msra.mxu0 0.0
    %804 = vmatprep.subr.mxu0 0.0
    %805 = vmatpush2.msra.mxu0 0.0
    %806 = vmatprep.subr.mxu0 0.0
    %807 = vmatpush2.msra.mxu0 0.0
    %808 = vmatprep.subr.mxu0 0.0
    %809 = vmatpush2.msra.mxu0 0.0
    %810 = vmatprep.subr.mxu0 0.0
    %811 = vmatpush2.msra.mxu0 0.0
    %812 = vmatprep.subr.mxu0 0.0
    %813 = vmatpush2.msra.mxu0 0.0
    %814 = vmatprep.subr.mxu0 0.0
    %815 = vmatpush2.msra.mxu0 0.0
    %816 = vmatprep.subr.mxu0 0.0
    %817 = vmatpush2.msra.mxu0 0.0
    %818 = vmatprep.subr.mxu0 0.0
    %819 = vmatpush2.msra.mxu0 0.0
    %820 = vmatprep.subr.mxu0 0.0
    %821 = vmatpush2.msra.mxu0 0.0
    %822 = vmatprep.subr.mxu0 0.0
    %823 = vmatpush2.msra.mxu0 0.0
    %824 = vmatprep.mubr.f32.mxu0 0.0
    %825 = vmatmul.mubr.f32.gmra.mxu0 %v473
    %v826 = vpop.f32.mrf.mxu0
    %v827 = vadd.f32 %v144, %v826
    %v828 = vpop.f32.mrf.mxu0
    %829 = vdwg.mxu0
    %v830 = vadd.f32 %v615, %v756
    %v831 = vxor.u32 %v830, 2147483648
    %v832 = vmul.f32 %v831, 1.442695
    %v833 = vpow.pop %v832
    %v834 = vadd.f32 %v833, 1.0
    %v835 = vrcp.pop %v834
    %v836 = vmul.f32 1.0, %v835
    %v837 = vadd.f32 %v617, %v758
    %v838 = vxor.u32 %v837, 2147483648
    %v839 = vmul.f32 %v838, 1.442695
    %v840 = vpow.pop %v839
    %v841 = vadd.f32 %v840, 1.0
    %v842 = vrcp.pop %v841
    %v843 = vmul.f32 1.0, %v842
    %v844 = vmul.f32 %v836, %v827
    %v845 = vadd.f32 %v686, %v844
    %v846 = vtanh.pop %v845
    %v847 = vsub.f32 1.0, %v843
    %v848 = vmul.f32 %v847, %v846
    %v849 = vmul.f32 %v843, %v473
    %v850 = vadd.f32 %v848, %v849
    %851 = vmatprep.subr.mxu0 0.0
    %852 = vmatpush1.msra.mxu0 %v113
    %853 = vmatprep.subr.mxu0 0.0
    %854 = vmatpush1.msra.mxu0 %v112
    %855 = vmatprep.subr.mxu0 0.0
    %856 = vmatpush1.msra.mxu0 %v111
    %857 = vmatprep.subr.mxu0 0.0
    %858 = vmatpush1.msra.mxu0 %v110
    %859 = vmatprep.subr.mxu0 0.0
    %860 = vmatpush1.msra.mxu0 %v109
    %861 = vmatprep.subr.mxu0 0.0
    %862 = vmatpush1.msra.mxu0 %v108
    %863 = vmatprep.subr.mxu0 0.0
    %864 = vmatpush1.msra.mxu0 %v107
    %865 = vmatprep.subr.mxu0 0.0
    %866 = vmatpush1.msra.mxu0 %v106
    %867 = vmatprep.subr.mxu0 0.0
    %868 = vmatpush1.msra.mxu0 %v105
    %869 = vmatprep.subr.mxu0 0.0
    %870 = vmatpush1.msra.mxu0 %v104
    %871 = vmatprep.subr.mxu0 0.0
    %872 = vmatpush1.msra.mxu0 %v103
    %873 = vmatprep.subr.mxu0 0.0
    %874 = vmatpush1.msra.mxu0 %v102
    %875 = vmatprep.subr.mxu0 0.0
    %876 = vmatpush1.msra.mxu0 %v101
    %877 = vmatprep.subr.mxu0 0.0
    %878 = vmatpush1.msra.mxu0 %v100
    %879 = vmatprep.subr.mxu0 0.0
    %880 = vmatpush1.msra.mxu0 %v99
    %881 = vmatprep.subr.mxu0 0.0
    %882 = vmatpush1.msra.mxu0 %v98
    %883 = vmatprep.subr.mxu0 0.0
    %884 = vmatpush2.msra.mxu0 0.0
    %885 = vmatprep.subr.mxu0 0.0
    %886 = vmatpush2.msra.mxu0 0.0
    %887 = vmatprep.subr.mxu0 0.0
    %888 = vmatpush2.msra.mxu0 0.0
    %889 = vmatprep.subr.mxu0 0.0
    %890 = vmatpush2.msra.mxu0 0.0
    %891 = vmatprep.subr.mxu0 0.0
    %892 = vmatpush2.msra.mxu0 0.0
    %893 = vmatprep.subr.mxu0 0.0
    %894 = vmatpush2.msra.mxu0 0.0
    %895 = vmatprep.subr.mxu0 0.0
    %896 = vmatpush2.msra.mxu0 0.0
    %897 = vmatprep.subr.mxu0 0.0
    %898 = vmatpush2.msra.mxu0 0.0
    %899 = vmatprep.subr.mxu0 0.0
    %900 = vmatpush2.msra.mxu0 0.0
    %901 = vmatprep.subr.mxu0 0.0
    %902 = vmatpush2.msra.mxu0 0.0
    %903 = vmatprep.subr.mxu0 0.0
    %904 = vmatpush2.msra.mxu0 0.0
    %905 = vmatprep.subr.mxu0 0.0
    %906 = vmatpush2.msra.mxu0 0.0
    %907 = vmatprep.subr.mxu0 0.0
    %908 = vmatpush2.msra.mxu0 0.0
    %909 = vmatprep.subr.mxu0 0.0
    %910 = vmatpush2.msra.mxu0 0.0
    %911 = vmatprep.subr.mxu0 0.0
    %912 = vmatpush2.msra.mxu0 0.0
    %913 = vmatprep.subr.mxu0 0.0
    %914 = vmatpush2.msra.mxu0 0.0
    %915 = vmatprep.mubr.f32.mxu0 0.0
    %916 = vmatmul.mubr.f32.gmra.mxu0 %v850
    %v917 = vpop.f32.mrf.mxu0
    %v918 = vadd.f32 %v153, %v917
    %v919 = vpop.f32.mrf.mxu0
    %920 = vdwg.mxu0
    %922 = vrot.lane.b32.xlu0 %v918, 4
    %v923 = vpop.permute.xlu0 %922
    %vm925 = vcmask 64544
    %926 = vst.msk [vmem:[%s7] sm:$0xff] %vm925, %v923
    %v927 = vsel %vm160, %v918, 0
    %929 = vmatprep.subr.mxu0 0.0
    %930 = vmatpush1.msra.mxu0 0.0
    %931 = vmatprep.subr.mxu0 0.0
    %932 = vmatpush1.msra.mxu0 0.0
    %933 = vmatprep.subr.mxu0 0.0
    %934 = vmatpush1.msra.mxu0 0.0
    %935 = vmatprep.subr.mxu0 0.0
    %936 = vmatpush1.msra.mxu0 0.0
    %937 = vmatprep.subr.mxu0 0.0
    %938 = vmatpush1.msra.mxu0 0.0
    %939 = vmatprep.subr.mxu0 0.0
    %940 = vmatpush1.msra.mxu0 0.0
    %941 = vmatprep.subr.mxu0 0.0
    %942 = vmatpush1.msra.mxu0 0.0
    %943 = vmatprep.subr.mxu0 0.0
    %944 = vmatpush1.msra.mxu0 0.0
    %945 = vmatprep.subr.mxu0 0.0
    %946 = vmatpush1.msra.mxu0 0.0
    %947 = vmatprep.subr.mxu0 0.0
    %948 = vmatpush1.msra.mxu0 0.0
    %949 = vmatprep.subr.mxu0 0.0
    %950 = vmatpush1.msra.mxu0 0.0
    %951 = vmatprep.subr.mxu0 0.0
    %952 = vmatpush1.msra.mxu0 0.0
    %953 = vmatprep.subr.mxu0 0.0
    %954 = vmatpush1.msra.mxu0 0.0
    %955 = vmatprep.subr.mxu0 0.0
    %956 = vmatpush1.msra.mxu0 0.0
    %957 = vmatprep.subr.mxu0 0.0
    %958 = vmatpush1.msra.mxu0 0.0
    %959 = vmatprep.subr.mxu0 %v167
    %960 = vmatpush1.msra.mxu0 %v165
    %961 = vmatprep.subr.mxu0 0.0
    %962 = vmatpush2.msra.mxu0 0.0
    %963 = vmatprep.subr.mxu0 0.0
    %964 = vmatpush2.msra.mxu0 0.0
    %965 = vmatprep.subr.mxu0 0.0
    %966 = vmatpush2.msra.mxu0 0.0
    %967 = vmatprep.subr.mxu0 0.0
    %968 = vmatpush2.msra.mxu0 0.0
    %969 = vmatprep.subr.mxu0 0.0
    %970 = vmatpush2.msra.mxu0 0.0
    %971 = vmatprep.subr.mxu0 0.0
    %972 = vmatpush2.msra.mxu0 0.0
    %973 = vmatprep.subr.mxu0 0.0
    %974 = vmatpush2.msra.mxu0 0.0
    %975 = vmatprep.subr.mxu0 0.0
    %976 = vmatpush2.msra.mxu0 0.0
    %977 = vmatprep.subr.mxu0 0.0
    %978 = vmatpush2.msra.mxu0 0.0
    %979 = vmatprep.subr.mxu0 0.0
    %980 = vmatpush2.msra.mxu0 0.0
    %981 = vmatprep.subr.mxu0 0.0
    %982 = vmatpush2.msra.mxu0 0.0
    %983 = vmatprep.subr.mxu0 0.0
    %984 = vmatpush2.msra.mxu0 0.0
    %985 = vmatprep.subr.mxu0 0.0
    %986 = vmatpush2.msra.mxu0 0.0
    %987 = vmatprep.subr.mxu0 0.0
    %988 = vmatpush2.msra.mxu0 0.0
    %989 = vmatprep.subr.mxu0 0.0
    %990 = vmatpush2.msra.mxu0 0.0
    %991 = vmatprep.subr.mxu0 0.0
    %992 = vmatpush2.msra.mxu0 0.0
    %993 = vmatprep.mubr.f32.mxu0 0.0
    %994 = vmatmul.mubr.f32.gmra.mxu0 %v927
    %v995 = vpop.f32.mrf.mxu0
    %v996 = vadd.f32 %v119, %v995
    %v997 = vpop.f32.mrf.mxu0
    %v998 = vadd.f32 %v123, %v997
    %999 = vdwg.mxu0
    %1000 = vmatprep.subr.mxu0 0.0
    %1001 = vmatpush1.msra.mxu0 0.0
    %1002 = vmatprep.subr.mxu0 0.0
    %1003 = vmatpush1.msra.mxu0 0.0
    %1004 = vmatprep.subr.mxu0 0.0
    %1005 = vmatpush1.msra.mxu0 0.0
    %1006 = vmatprep.subr.mxu0 0.0
    %1007 = vmatpush1.msra.mxu0 0.0
    %1008 = vmatprep.subr.mxu0 0.0
    %1009 = vmatpush1.msra.mxu0 0.0
    %1010 = vmatprep.subr.mxu0 0.0
    %1011 = vmatpush1.msra.mxu0 0.0
    %1012 = vmatprep.subr.mxu0 0.0
    %1013 = vmatpush1.msra.mxu0 0.0
    %1014 = vmatprep.subr.mxu0 0.0
    %1015 = vmatpush1.msra.mxu0 0.0
    %1016 = vmatprep.subr.mxu0 0.0
    %1017 = vmatpush1.msra.mxu0 0.0
    %1018 = vmatprep.subr.mxu0 0.0
    %1019 = vmatpush1.msra.mxu0 0.0
    %1020 = vmatprep.subr.mxu0 0.0
    %1021 = vmatpush1.msra.mxu0 0.0
    %1022 = vmatprep.subr.mxu0 0.0
    %1023 = vmatpush1.msra.mxu0 0.0
    %1024 = vmatprep.subr.mxu0 0.0
    %1025 = vmatpush1.msra.mxu0 0.0
    %1026 = vmatprep.subr.mxu0 0.0
    %1027 = vmatpush1.msra.mxu0 0.0
    %1028 = vmatprep.subr.mxu0 0.0
    %1029 = vmatpush1.msra.mxu0 0.0
    %1030 = vmatprep.subr.mxu0 0.0
    %1031 = vmatpush1.msra.mxu0 %v169
    %1032 = vmatprep.subr.mxu0 0.0
    %1033 = vmatpush2.msra.mxu0 0.0
    %1034 = vmatprep.subr.mxu0 0.0
    %1035 = vmatpush2.msra.mxu0 0.0
    %1036 = vmatprep.subr.mxu0 0.0
    %1037 = vmatpush2.msra.mxu0 0.0
    %1038 = vmatprep.subr.mxu0 0.0
    %1039 = vmatpush2.msra.mxu0 0.0
    %1040 = vmatprep.subr.mxu0 0.0
    %1041 = vmatpush2.msra.mxu0 0.0
    %1042 = vmatprep.subr.mxu0 0.0
    %1043 = vmatpush2.msra.mxu0 0.0
    %1044 = vmatprep.subr.mxu0 0.0
    %1045 = vmatpush2.msra.mxu0 0.0
    %1046 = vmatprep.subr.mxu0 0.0
    %1047 = vmatpush2.msra.mxu0 0.0
    %1048 = vmatprep.subr.mxu0 0.0
    %1049 = vmatpush2.msra.mxu0 0.0
    %1050 = vmatprep.subr.mxu0 0.0
    %1051 = vmatpush2.msra.mxu0 0.0
    %1052 = vmatprep.subr.mxu0 0.0
    %1053 = vmatpush2.msra.mxu0 0.0
    %1054 = vmatprep.subr.mxu0 0.0
    %1055 = vmatpush2.msra.mxu0 0.0
    %1056 = vmatprep.subr.mxu0 0.0
    %1057 = vmatpush2.msra.mxu0 0.0
    %1058 = vmatprep.subr.mxu0 0.0
    %1059 = vmatpush2.msra.mxu0 0.0
    %1060 = vmatprep.subr.mxu0 0.0
    %1061 = vmatpush2.msra.mxu0 0.0
    %1062 = vmatprep.subr.mxu0 0.0
    %1063 = vmatpush2.msra.mxu0 0.0
    %1064 = vmatprep.mubr.f32.mxu0 0.0
    %1065 = vmatmul.mubr.f32.gmra.mxu0 %v927
    %v1066 = vpop.f32.mrf.mxu0
    %v1067 = vadd.f32 %v127, %v1066
    %v1068 = vpop.f32.mrf.mxu0
    %1069 = vdwg.mxu0
    %1070 = vmatprep.subr.mxu0 %v96
    %1071 = vmatpush1.msra.mxu0 %v95
    %1072 = vmatprep.subr.mxu0 %v93
    %1073 = vmatpush1.msra.mxu0 %v92
    %1074 = vmatprep.subr.mxu0 %v90
    %1075 = vmatpush1.msra.mxu0 %v89
    %1076 = vmatprep.subr.mxu0 %v87
    %1077 = vmatpush1.msra.mxu0 %v86
    %1078 = vmatprep.subr.mxu0 %v84
    %1079 = vmatpush1.msra.mxu0 %v83
    %1080 = vmatprep.subr.mxu0 %v81
    %1081 = vmatpush1.msra.mxu0 %v80
    %1082 = vmatprep.subr.mxu0 %v78
    %1083 = vmatpush1.msra.mxu0 %v77
    %1084 = vmatprep.subr.mxu0 %v75
    %1085 = vmatpush1.msra.mxu0 %v74
    %1086 = vmatprep.subr.mxu0 %v72
    %1087 = vmatpush1.msra.mxu0 %v71
    %1088 = vmatprep.subr.mxu0 %v69
    %1089 = vmatpush1.msra.mxu0 %v68
    %1090 = vmatprep.subr.mxu0 %v66
    %1091 = vmatpush1.msra.mxu0 %v65
    %1092 = vmatprep.subr.mxu0 %v63
    %1093 = vmatpush1.msra.mxu0 %v62
    %1094 = vmatprep.subr.mxu0 %v60
    %1095 = vmatpush1.msra.mxu0 %v59
    %1096 = vmatprep.subr.mxu0 %v57
    %1097 = vmatpush1.msra.mxu0 %v56
    %1098 = vmatprep.subr.mxu0 %v54
    %1099 = vmatpush1.msra.mxu0 %v53
    %1100 = vmatprep.subr.mxu0 %v51
    %1101 = vmatpush1.msra.mxu0 %v50
    %1102 = vmatprep.subr.mxu0 0.0
    %1103 = vmatpush2.msra.mxu0 0.0
    %1104 = vmatprep.subr.mxu0 0.0
    %1105 = vmatpush2.msra.mxu0 0.0
    %1106 = vmatprep.subr.mxu0 0.0
    %1107 = vmatpush2.msra.mxu0 0.0
    %1108 = vmatprep.subr.mxu0 0.0
    %1109 = vmatpush2.msra.mxu0 0.0
    %1110 = vmatprep.subr.mxu0 0.0
    %1111 = vmatpush2.msra.mxu0 0.0
    %1112 = vmatprep.subr.mxu0 0.0
    %1113 = vmatpush2.msra.mxu0 0.0
    %1114 = vmatprep.subr.mxu0 0.0
    %1115 = vmatpush2.msra.mxu0 0.0
    %1116 = vmatprep.subr.mxu0 0.0
    %1117 = vmatpush2.msra.mxu0 0.0
    %1118 = vmatprep.subr.mxu0 0.0
    %1119 = vmatpush2.msra.mxu0 0.0
    %1120 = vmatprep.subr.mxu0 0.0
    %1121 = vmatpush2.msra.mxu0 0.0
    %1122 = vmatprep.subr.mxu0 0.0
    %1123 = vmatpush2.msra.mxu0 0.0
    %1124 = vmatprep.subr.mxu0 0.0
    %1125 = vmatpush2.msra.mxu0 0.0
    %1126 = vmatprep.subr.mxu0 0.0
    %1127 = vmatpush2.msra.mxu0 0.0
    %1128 = vmatprep.subr.mxu0 0.0
    %1129 = vmatpush2.msra.mxu0 0.0
    %1130 = vmatprep.subr.mxu0 0.0
    %1131 = vmatpush2.msra.mxu0 0.0
    %1132 = vmatprep.subr.mxu0 0.0
    %1133 = vmatpush2.msra.mxu0 0.0
    %1134 = vmatprep.mubr.f32.mxu0 0.0
    %1135 = vmatmul.mubr.f32.gmra.mxu0 %v850
    %v1136 = vpop.f32.mrf.mxu0
    %v1137 = vadd.f32 %v136, %v1136
    %v1138 = vpop.f32.mrf.mxu0
    %v1139 = vadd.f32 %v140, %v1138
    %1140 = vdwg.mxu0
    %1141 = vmatprep.subr.mxu0 0.0
    %1142 = vmatpush1.msra.mxu0 %v97
    %1143 = vmatprep.subr.mxu0 0.0
    %1144 = vmatpush1.msra.mxu0 %v94
    %1145 = vmatprep.subr.mxu0 0.0
    %1146 = vmatpush1.msra.mxu0 %v91
    %1147 = vmatprep.subr.mxu0 0.0
    %1148 = vmatpush1.msra.mxu0 %v88
    %1149 = vmatprep.subr.mxu0 0.0
    %1150 = vmatpush1.msra.mxu0 %v85
    %1151 = vmatprep.subr.mxu0 0.0
    %1152 = vmatpush1.msra.mxu0 %v82
    %1153 = vmatprep.subr.mxu0 0.0
    %1154 = vmatpush1.msra.mxu0 %v79
    %1155 = vmatprep.subr.mxu0 0.0
    %1156 = vmatpush1.msra.mxu0 %v76
    %1157 = vmatprep.subr.mxu0 0.0
    %1158 = vmatpush1.msra.mxu0 %v73
    %1159 = vmatprep.subr.mxu0 0.0
    %1160 = vmatpush1.msra.mxu0 %v70
    %1161 = vmatprep.subr.mxu0 0.0
    %1162 = vmatpush1.msra.mxu0 %v67
    %1163 = vmatprep.subr.mxu0 0.0
    %1164 = vmatpush1.msra.mxu0 %v64
    %1165 = vmatprep.subr.mxu0 0.0
    %1166 = vmatpush1.msra.mxu0 %v61
    %1167 = vmatprep.subr.mxu0 0.0
    %1168 = vmatpush1.msra.mxu0 %v58
    %1169 = vmatprep.subr.mxu0 0.0
    %1170 = vmatpush1.msra.mxu0 %v55
    %1171 = vmatprep.subr.mxu0 0.0
    %1172 = vmatpush1.msra.mxu0 %v52
    %1173 = vmatprep.subr.mxu0 0.0
    %1174 = vmatpush2.msra.mxu0 0.0
    %1175 = vmatprep.subr.mxu0 0.0
    %1176 = vmatpush2.msra.mxu0 0.0
    %1177 = vmatprep.subr.mxu0 0.0
    %1178 = vmatpush2.msra.mxu0 0.0
    %1179 = vmatprep.subr.mxu0 0.0
    %1180 = vmatpush2.msra.mxu0 0.0
    %1181 = vmatprep.subr.mxu0 0.0
    %1182 = vmatpush2.msra.mxu0 0.0
    %1183 = vmatprep.subr.mxu0 0.0
    %1184 = vmatpush2.msra.mxu0 0.0
    %1185 = vmatprep.subr.mxu0 0.0
    %1186 = vmatpush2.msra.mxu0 0.0
    %1187 = vmatprep.subr.mxu0 0.0
    %1188 = vmatpush2.msra.mxu0 0.0
    %1189 = vmatprep.subr.mxu0 0.0
    %1190 = vmatpush2.msra.mxu0 0.0
    %1191 = vmatprep.subr.mxu0 0.0
    %1192 = vmatpush2.msra.mxu0 0.0
    %1193 = vmatprep.subr.mxu0 0.0
    %1194 = vmatpush2.msra.mxu0 0.0
    %1195 = vmatprep.subr.mxu0 0.0
    %1196 = vmatpush2.msra.mxu0 0.0
    %1197 = vmatprep.subr.mxu0 0.0
    %1198 = vmatpush2.msra.mxu0 0.0
    %1199 = vmatprep.subr.mxu0 0.0
    %1200 = vmatpush2.msra.mxu0 0.0
    %1201 = vmatprep.subr.mxu0 0.0
    %1202 = vmatpush2.msra.mxu0 0.0
    %1203 = vmatprep.subr.mxu0 0.0
    %1204 = vmatpush2.msra.mxu0 0.0
    %1205 = vmatprep.mubr.f32.mxu0 0.0
    %1206 = vmatmul.mubr.f32.gmra.mxu0 %v850
    %v1207 = vpop.f32.mrf.mxu0
    %v1208 = vadd.f32 %v144, %v1207
    %v1209 = vpop.f32.mrf.mxu0
    %1210 = vdwg.mxu0
    %v1211 = vadd.f32 %v996, %v1137
    %v1212 = vxor.u32 %v1211, 2147483648
    %v1213 = vmul.f32 %v1212, 1.442695
    %v1214 = vpow.pop %v1213
    %v1215 = vadd.f32 %v1214, 1.0
    %v1216 = vrcp.pop %v1215
    %v1217 = vmul.f32 1.0, %v1216
    %v1218 = vadd.f32 %v998, %v1139
    %v1219 = vxor.u32 %v1218, 2147483648
    %v1220 = vmul.f32 %v1219, 1.442695
    %v1221 = vpow.pop %v1220
    %v1222 = vadd.f32 %v1221, 1.0
    %v1223 = vrcp.pop %v1222
    %v1224 = vmul.f32 1.0, %v1223
    %v1225 = vmul.f32 %v1217, %v1208
    %v1226 = vadd.f32 %v1067, %v1225
    %v1227 = vtanh.pop %v1226
    %v1228 = vsub.f32 1.0, %v1224
    %v1229 = vmul.f32 %v1228, %v1227
    %v1230 = vmul.f32 %v1224, %v850
    %v1231 = vadd.f32 %v1229, %v1230
    %1232 = vmatprep.subr.mxu0 0.0
    %1233 = vmatpush1.msra.mxu0 %v113
    %1234 = vmatprep.subr.mxu0 0.0
    %1235 = vmatpush1.msra.mxu0 %v112
    %1236 = vmatprep.subr.mxu0 0.0
    %1237 = vmatpush1.msra.mxu0 %v111
    %1238 = vmatprep.subr.mxu0 0.0
    %1239 = vmatpush1.msra.mxu0 %v110
    %1240 = vmatprep.subr.mxu0 0.0
    %1241 = vmatpush1.msra.mxu0 %v109
    %1242 = vmatprep.subr.mxu0 0.0
    %1243 = vmatpush1.msra.mxu0 %v108
    %1244 = vmatprep.subr.mxu0 0.0
    %1245 = vmatpush1.msra.mxu0 %v107
    %1246 = vmatprep.subr.mxu0 0.0
    %1247 = vmatpush1.msra.mxu0 %v106
    %1248 = vmatprep.subr.mxu0 0.0
    %1249 = vmatpush1.msra.mxu0 %v105
    %1250 = vmatprep.subr.mxu0 0.0
    %1251 = vmatpush1.msra.mxu0 %v104
    %1252 = vmatprep.subr.mxu0 0.0
    %1253 = vmatpush1.msra.mxu0 %v103
    %1254 = vmatprep.subr.mxu0 0.0
    %1255 = vmatpush1.msra.mxu0 %v102
    %1256 = vmatprep.subr.mxu0 0.0
    %1257 = vmatpush1.msra.mxu0 %v101
    %1258 = vmatprep.subr.mxu0 0.0
    %1259 = vmatpush1.msra.mxu0 %v100
    %1260 = vmatprep.subr.mxu0 0.0
    %1261 = vmatpush1.msra.mxu0 %v99
    %1262 = vmatprep.subr.mxu0 0.0
    %1263 = vmatpush1.msra.mxu0 %v98
    %1264 = vmatprep.subr.mxu0 0.0
    %1265 = vmatpush2.msra.mxu0 0.0
    %1266 = vmatprep.subr.mxu0 0.0
    %1267 = vmatpush2.msra.mxu0 0.0
    %1268 = vmatprep.subr.mxu0 0.0
    %1269 = vmatpush2.msra.mxu0 0.0
    %1270 = vmatprep.subr.mxu0 0.0
    %1271 = vmatpush2.msra.mxu0 0.0
    %1272 = vmatprep.subr.mxu0 0.0
    %1273 = vmatpush2.msra.mxu0 0.0
    %1274 = vmatprep.subr.mxu0 0.0
    %1275 = vmatpush2.msra.mxu0 0.0
    %1276 = vmatprep.subr.mxu0 0.0
    %1277 = vmatpush2.msra.mxu0 0.0
    %1278 = vmatprep.subr.mxu0 0.0
    %1279 = vmatpush2.msra.mxu0 0.0
    %1280 = vmatprep.subr.mxu0 0.0
    %1281 = vmatpush2.msra.mxu0 0.0
    %1282 = vmatprep.subr.mxu0 0.0
    %1283 = vmatpush2.msra.mxu0 0.0
    %1284 = vmatprep.subr.mxu0 0.0
    %1285 = vmatpush2.msra.mxu0 0.0
    %1286 = vmatprep.subr.mxu0 0.0
    %1287 = vmatpush2.msra.mxu0 0.0
    %1288 = vmatprep.subr.mxu0 0.0
    %1289 = vmatpush2.msra.mxu0 0.0
    %1290 = vmatprep.subr.mxu0 0.0
    %1291 = vmatpush2.msra.mxu0 0.0
    %1292 = vmatprep.subr.mxu0 0.0
    %1293 = vmatpush2.msra.mxu0 0.0
    %1294 = vmatprep.subr.mxu0 0.0
    %1295 = vmatpush2.msra.mxu0 0.0
    %1296 = vmatprep.mubr.f32.mxu0 0.0
    %1297 = vmatmul.mubr.f32.gmra.mxu0 %v1231
    %v1298 = vpop.f32.mrf.mxu0
    %v1299 = vadd.f32 %v153, %v1298
    %v1300 = vpop.f32.mrf.mxu0
    %1301 = vdwg.mxu0
    %1303 = vrot.lane.b32.xlu0 %v1299, 8
    %v1304 = vpop.permute.xlu0 %1303
    %vm1306 = vcmask 97344
    %1307 = vst.msk [vmem:[%s7] sm:$0xff] %vm1306, %v1304
    %v1308 = vsel %vm160, %v1299, 0
    %1310 = vmatprep.subr.mxu0 0.0
    %1311 = vmatpush1.msra.mxu0 0.0
    %1312 = vmatprep.subr.mxu0 0.0
    %1313 = vmatpush1.msra.mxu0 0.0
    %1314 = vmatprep.subr.mxu0 0.0
    %1315 = vmatpush1.msra.mxu0 0.0
    %1316 = vmatprep.subr.mxu0 0.0
    %1317 = vmatpush1.msra.mxu0 0.0
    %1318 = vmatprep.subr.mxu0 0.0
    %1319 = vmatpush1.msra.mxu0 0.0
    %1320 = vmatprep.subr.mxu0 0.0
    %1321 = vmatpush1.msra.mxu0 0.0
    %1322 = vmatprep.subr.mxu0 0.0
    %1323 = vmatpush1.msra.mxu0 0.0
    %1324 = vmatprep.subr.mxu0 0.0
    %1325 = vmatpush1.msra.mxu0 0.0
    %1326 = vmatprep.subr.mxu0 0.0
    %1327 = vmatpush1.msra.mxu0 0.0
    %1328 = vmatprep.subr.mxu0 0.0
    %1329 = vmatpush1.msra.mxu0 0.0
    %1330 = vmatprep.subr.mxu0 0.0
    %1331 = vmatpush1.msra.mxu0 0.0
    %1332 = vmatprep.subr.mxu0 0.0
    %1333 = vmatpush1.msra.mxu0 0.0
    %1334 = vmatprep.subr.mxu0 0.0
    %1335 = vmatpush1.msra.mxu0 0.0
    %1336 = vmatprep.subr.mxu0 0.0
    %1337 = vmatpush1.msra.mxu0 0.0
    %1338 = vmatprep.subr.mxu0 0.0
    %1339 = vmatpush1.msra.mxu0 0.0
    %1340 = vmatprep.subr.mxu0 %v167
    %1341 = vmatpush1.msra.mxu0 %v165
    %1342 = vmatprep.subr.mxu0 0.0
    %1343 = vmatpush2.msra.mxu0 0.0
    %1344 = vmatprep.subr.mxu0 0.0
    %1345 = vmatpush2.msra.mxu0 0.0
    %1346 = vmatprep.subr.mxu0 0.0
    %1347 = vmatpush2.msra.mxu0 0.0
    %1348 = vmatprep.subr.mxu0 0.0
    %1349 = vmatpush2.msra.mxu0 0.0
    %1350 = vmatprep.subr.mxu0 0.0
    %1351 = vmatpush2.msra.mxu0 0.0
    %1352 = vmatprep.subr.mxu0 0.0
    %1353 = vmatpush2.msra.mxu0 0.0
    %1354 = vmatprep.subr.mxu0 0.0
    %1355 = vmatpush2.msra.mxu0 0.0
    %1356 = vmatprep.subr.mxu0 0.0
    %1357 = vmatpush2.msra.mxu0 0.0
    %1358 = vmatprep.subr.mxu0 0.0
    %1359 = vmatpush2.msra.mxu0 0.0
    %1360 = vmatprep.subr.mxu0 0.0
    %1361 = vmatpush2.msra.mxu0 0.0
    %1362 = vmatprep.subr.mxu0 0.0
    %1363 = vmatpush2.msra.mxu0 0.0
    %1364 = vmatprep.subr.mxu0 0.0
    %1365 = vmatpush2.msra.mxu0 0.0
    %1366 = vmatprep.subr.mxu0 0.0
    %1367 = vmatpush2.msra.mxu0 0.0
    %1368 = vmatprep.subr.mxu0 0.0
    %1369 = vmatpush2.msra.mxu0 0.0
    %1370 = vmatprep.subr.mxu0 0.0
    %1371 = vmatpush2.msra.mxu0 0.0
    %1372 = vmatprep.subr.mxu0 0.0
    %1373 = vmatpush2.msra.mxu0 0.0
    %1374 = vmatprep.mubr.f32.mxu0 0.0
    %1375 = vmatmul.mubr.f32.gmra.mxu0 %v1308
    %v1376 = vpop.f32.mrf.mxu0
    %v1377 = vadd.f32 %v119, %v1376
    %v1378 = vpop.f32.mrf.mxu0
    %v1379 = vadd.f32 %v123, %v1378
    %1380 = vdwg.mxu0
    %1381 = vmatprep.subr.mxu0 0.0
    %1382 = vmatpush1.msra.mxu0 0.0
    %1383 = vmatprep.subr.mxu0 0.0
    %1384 = vmatpush1.msra.mxu0 0.0
    %1385 = vmatprep.subr.mxu0 0.0
    %1386 = vmatpush1.msra.mxu0 0.0
    %1387 = vmatprep.subr.mxu0 0.0
    %1388 = vmatpush1.msra.mxu0 0.0
    %1389 = vmatprep.subr.mxu0 0.0
    %1390 = vmatpush1.msra.mxu0 0.0
    %1391 = vmatprep.subr.mxu0 0.0
    %1392 = vmatpush1.msra.mxu0 0.0
    %1393 = vmatprep.subr.mxu0 0.0
    %1394 = vmatpush1.msra.mxu0 0.0
    %1395 = vmatprep.subr.mxu0 0.0
    %1396 = vmatpush1.msra.mxu0 0.0
    %1397 = vmatprep.subr.mxu0 0.0
    %1398 = vmatpush1.msra.mxu0 0.0
    %1399 = vmatprep.subr.mxu0 0.0
    %1400 = vmatpush1.msra.mxu0 0.0
    %1401 = vmatprep.subr.mxu0 0.0
    %1402 = vmatpush1.msra.mxu0 0.0
    %1403 = vmatprep.subr.mxu0 0.0
    %1404 = vmatpush1.msra.mxu0 0.0
    %1405 = vmatprep.subr.mxu0 0.0
    %1406 = vmatpush1.msra.mxu0 0.0
    %1407 = vmatprep.subr.mxu0 0.0
    %1408 = vmatpush1.msra.mxu0 0.0
    %1409 = vmatprep.subr.mxu0 0.0
    %1410 = vmatpush1.msra.mxu0 0.0
    %1411 = vmatprep.subr.mxu0 0.0
    %1412 = vmatpush1.msra.mxu0 %v169
    %1413 = vmatprep.subr.mxu0 0.0
    %1414 = vmatpush2.msra.mxu0 0.0
    %1415 = vmatprep.subr.mxu0 0.0
    %1416 = vmatpush2.msra.mxu0 0.0
    %1417 = vmatprep.subr.mxu0 0.0
    %1418 = vmatpush2.msra.mxu0 0.0
    %1419 = vmatprep.subr.mxu0 0.0
    %1420 = vmatpush2.msra.mxu0 0.0
    %1421 = vmatprep.subr.mxu0 0.0
    %1422 = vmatpush2.msra.mxu0 0.0
    %1423 = vmatprep.subr.mxu0 0.0
    %1424 = vmatpush2.msra.mxu0 0.0
    %1425 = vmatprep.subr.mxu0 0.0
    %1426 = vmatpush2.msra.mxu0 0.0
    %1427 = vmatprep.subr.mxu0 0.0
    %1428 = vmatpush2.msra.mxu0 0.0
    %1429 = vmatprep.subr.mxu0 0.0
    %1430 = vmatpush2.msra.mxu0 0.0
    %1431 = vmatprep.subr.mxu0 0.0
    %1432 = vmatpush2.msra.mxu0 0.0
    %1433 = vmatprep.subr.mxu0 0.0
    %1434 = vmatpush2.msra.mxu0 0.0
    %1435 = vmatprep.subr.mxu0 0.0
    %1436 = vmatpush2.msra.mxu0 0.0
    %1437 = vmatprep.subr.mxu0 0.0
    %1438 = vmatpush2.msra.mxu0 0.0
    %1439 = vmatprep.subr.mxu0 0.0
    %1440 = vmatpush2.msra.mxu0 0.0
    %1441 = vmatprep.subr.mxu0 0.0
    %1442 = vmatpush2.msra.mxu0 0.0
    %1443 = vmatprep.subr.mxu0 0.0
    %1444 = vmatpush2.msra.mxu0 0.0
    %1445 = vmatprep.mubr.f32.mxu0 0.0
    %1446 = vmatmul.mubr.f32.gmra.mxu0 %v1308
    %v1447 = vpop.f32.mrf.mxu0
    %v1448 = vadd.f32 %v127, %v1447
    %v1449 = vpop.f32.mrf.mxu0
    %1450 = vdwg.mxu0
    %1451 = vmatprep.subr.mxu0 %v96
    %1452 = vmatpush1.msra.mxu0 %v95
    %1453 = vmatprep.subr.mxu0 %v93
    %1454 = vmatpush1.msra.mxu0 %v92
    %1455 = vmatprep.subr.mxu0 %v90
    %1456 = vmatpush1.msra.mxu0 %v89
    %1457 = vmatprep.subr.mxu0 %v87
    %1458 = vmatpush1.msra.mxu0 %v86
    %1459 = vmatprep.subr.mxu0 %v84
    %1460 = vmatpush1.msra.mxu0 %v83
    %1461 = vmatprep.subr.mxu0 %v81
    %1462 = vmatpush1.msra.mxu0 %v80
    %1463 = vmatprep.subr.mxu0 %v78
    %1464 = vmatpush1.msra.mxu0 %v77
    %1465 = vmatprep.subr.mxu0 %v75
    %1466 = vmatpush1.msra.mxu0 %v74
    %1467 = vmatprep.subr.mxu0 %v72
    %1468 = vmatpush1.msra.mxu0 %v71
    %1469 = vmatprep.subr.mxu0 %v69
    %1470 = vmatpush1.msra.mxu0 %v68
    %1471 = vmatprep.subr.mxu0 %v66
    %1472 = vmatpush1.msra.mxu0 %v65
    %1473 = vmatprep.subr.mxu0 %v63
    %1474 = vmatpush1.msra.mxu0 %v62
    %1475 = vmatprep.subr.mxu0 %v60
    %1476 = vmatpush1.msra.mxu0 %v59
    %1477 = vmatprep.subr.mxu0 %v57
    %1478 = vmatpush1.msra.mxu0 %v56
    %1479 = vmatprep.subr.mxu0 %v54
    %1480 = vmatpush1.msra.mxu0 %v53
    %1481 = vmatprep.subr.mxu0 %v51
    %1482 = vmatpush1.msra.mxu0 %v50
    %1483 = vmatprep.subr.mxu0 0.0
    %1484 = vmatpush2.msra.mxu0 0.0
    %1485 = vmatprep.subr.mxu0 0.0
    %1486 = vmatpush2.msra.mxu0 0.0
    %1487 = vmatprep.subr.mxu0 0.0
    %1488 = vmatpush2.msra.mxu0 0.0
    %1489 = vmatprep.subr.mxu0 0.0
    %1490 = vmatpush2.msra.mxu0 0.0
    %1491 = vmatprep.subr.mxu0 0.0
    %1492 = vmatpush2.msra.mxu0 0.0
    %1493 = vmatprep.subr.mxu0 0.0
    %1494 = vmatpush2.msra.mxu0 0.0
    %1495 = vmatprep.subr.mxu0 0.0
    %1496 = vmatpush2.msra.mxu0 0.0
    %1497 = vmatprep.subr.mxu0 0.0
    %1498 = vmatpush2.msra.mxu0 0.0
    %1499 = vmatprep.subr.mxu0 0.0
    %1500 = vmatpush2.msra.mxu0 0.0
    %1501 = vmatprep.subr.mxu0 0.0
    %1502 = vmatpush2.msra.mxu0 0.0
    %1503 = vmatprep.subr.mxu0 0.0
    %1504 = vmatpush2.msra.mxu0 0.0
    %1505 = vmatprep.subr.mxu0 0.0
    %1506 = vmatpush2.msra.mxu0 0.0
    %1507 = vmatprep.subr.mxu0 0.0
    %1508 = vmatpush2.msra.mxu0 0.0
    %1509 = vmatprep.subr.mxu0 0.0
    %1510 = vmatpush2.msra.mxu0 0.0
    %1511 = vmatprep.subr.mxu0 0.0
    %1512 = vmatpush2.msra.mxu0 0.0
    %1513 = vmatprep.subr.mxu0 0.0
    %1514 = vmatpush2.msra.mxu0 0.0
    %1515 = vmatprep.mubr.f32.mxu0 0.0
    %1516 = vmatmul.mubr.f32.gmra.mxu0 %v1231
    %v1517 = vpop.f32.mrf.mxu0
    %v1518 = vadd.f32 %v136, %v1517
    %v1519 = vpop.f32.mrf.mxu0
    %v1520 = vadd.f32 %v140, %v1519
    %1521 = vdwg.mxu0
    %1522 = vmatprep.subr.mxu0 0.0
    %1523 = vmatpush1.msra.mxu0 %v97
    %1524 = vmatprep.subr.mxu0 0.0
    %1525 = vmatpush1.msra.mxu0 %v94
    %1526 = vmatprep.subr.mxu0 0.0
    %1527 = vmatpush1.msra.mxu0 %v91
    %1528 = vmatprep.subr.mxu0 0.0
    %1529 = vmatpush1.msra.mxu0 %v88
    %1530 = vmatprep.subr.mxu0 0.0
    %1531 = vmatpush1.msra.mxu0 %v85
    %1532 = vmatprep.subr.mxu0 0.0
    %1533 = vmatpush1.msra.mxu0 %v82
    %1534 = vmatprep.subr.mxu0 0.0
    %1535 = vmatpush1.msra.mxu0 %v79
    %1536 = vmatprep.subr.mxu0 0.0
    %1537 = vmatpush1.msra.mxu0 %v76
    %1538 = vmatprep.subr.mxu0 0.0
    %1539 = vmatpush1.msra.mxu0 %v73
    %1540 = vmatprep.subr.mxu0 0.0
    %1541 = vmatpush1.msra.mxu0 %v70
    %1542 = vmatprep.subr.mxu0 0.0
    %1543 = vmatpush1.msra.mxu0 %v67
    %1544 = vmatprep.subr.mxu0 0.0
    %1545 = vmatpush1.msra.mxu0 %v64
    %1546 = vmatprep.subr.mxu0 0.0
    %1547 = vmatpush1.msra.mxu0 %v61
    %1548 = vmatprep.subr.mxu0 0.0
    %1549 = vmatpush1.msra.mxu0 %v58
    %1550 = vmatprep.subr.mxu0 0.0
    %1551 = vmatpush1.msra.mxu0 %v55
    %1552 = vmatprep.subr.mxu0 0.0
    %1553 = vmatpush1.msra.mxu0 %v52
    %1554 = vmatprep.subr.mxu0 0.0
    %1555 = vmatpush2.msra.mxu0 0.0
    %1556 = vmatprep.subr.mxu0 0.0
    %1557 = vmatpush2.msra.mxu0 0.0
    %1558 = vmatprep.subr.mxu0 0.0
    %1559 = vmatpush2.msra.mxu0 0.0
    %1560 = vmatprep.subr.mxu0 0.0
    %1561 = vmatpush2.msra.mxu0 0.0
    %1562 = vmatprep.subr.mxu0 0.0
    %1563 = vmatpush2.msra.mxu0 0.0
    %1564 = vmatprep.subr.mxu0 0.0
    %1565 = vmatpush2.msra.mxu0 0.0
    %1566 = vmatprep.subr.mxu0 0.0
    %1567 = vmatpush2.msra.mxu0 0.0
    %1568 = vmatprep.subr.mxu0 0.0
    %1569 = vmatpush2.msra.mxu0 0.0
    %1570 = vmatprep.subr.mxu0 0.0
    %1571 = vmatpush2.msra.mxu0 0.0
    %1572 = vmatprep.subr.mxu0 0.0
    %1573 = vmatpush2.msra.mxu0 0.0
    %1574 = vmatprep.subr.mxu0 0.0
    %1575 = vmatpush2.msra.mxu0 0.0
    %1576 = vmatprep.subr.mxu0 0.0
    %1577 = vmatpush2.msra.mxu0 0.0
    %1578 = vmatprep.subr.mxu0 0.0
    %1579 = vmatpush2.msra.mxu0 0.0
    %1580 = vmatprep.subr.mxu0 0.0
    %1581 = vmatpush2.msra.mxu0 0.0
    %1582 = vmatprep.subr.mxu0 0.0
    %1583 = vmatpush2.msra.mxu0 0.0
    %1584 = vmatprep.subr.mxu0 0.0
    %1585 = vmatpush2.msra.mxu0 0.0
    %1586 = vmatprep.mubr.f32.mxu0 0.0
    %1587 = vmatmul.mubr.f32.gmra.mxu0 %v1231
    %v1588 = vpop.f32.mrf.mxu0
    %v1589 = vadd.f32 %v144, %v1588
    %v1590 = vpop.f32.mrf.mxu0
    %1591 = vdwg.mxu0
    %v1592 = vadd.f32 %v1377, %v1518
    %v1593 = vxor.u32 %v1592, 2147483648
    %v1594 = vmul.f32 %v1593, 1.442695
    %v1595 = vpow.pop %v1594
    %v1596 = vadd.f32 %v1595, 1.0
    %v1597 = vrcp.pop %v1596
    %v1598 = vmul.f32 1.0, %v1597
    %v1599 = vadd.f32 %v1379, %v1520
    %v1600 = vxor.u32 %v1599, 2147483648
    %v1601 = vmul.f32 %v1600, 1.442695
    %v1602 = vpow.pop %v1601
    %v1603 = vadd.f32 %v1602, 1.0
    %v1604 = vrcp.pop %v1603
    %v1605 = vmul.f32 1.0, %v1604
    %v1606 = vmul.f32 %v1598, %v1589
    %v1607 = vadd.f32 %v1448, %v1606
    %v1608 = vtanh.pop %v1607
    %v1609 = vsub.f32 1.0, %v1605
    %v1610 = vmul.f32 %v1609, %v1608
    %v1611 = vmul.f32 %v1605, %v1231
    %v1612 = vadd.f32 %v1610, %v1611
    %1613 = vmatprep.subr.mxu0 0.0
    %1614 = vmatpush1.msra.mxu0 %v113
    %1615 = vmatprep.subr.mxu0 0.0
    %1616 = vmatpush1.msra.mxu0 %v112
    %1617 = vmatprep.subr.mxu0 0.0
    %1618 = vmatpush1.msra.mxu0 %v111
    %1619 = vmatprep.subr.mxu0 0.0
    %1620 = vmatpush1.msra.mxu0 %v110
    %1621 = vmatprep.subr.mxu0 0.0
    %1622 = vmatpush1.msra.mxu0 %v109
    %1623 = vmatprep.subr.mxu0 0.0
    %1624 = vmatpush1.msra.mxu0 %v108
    %1625 = vmatprep.subr.mxu0 0.0
    %1626 = vmatpush1.msra.mxu0 %v107
    %1627 = vmatprep.subr.mxu0 0.0
    %1628 = vmatpush1.msra.mxu0 %v106
    %1629 = vmatprep.subr.mxu0 0.0
    %1630 = vmatpush1.msra.mxu0 %v105
    %1631 = vmatprep.subr.mxu0 0.0
    %1632 = vmatpush1.msra.mxu0 %v104
    %1633 = vmatprep.subr.mxu0 0.0
    %1634 = vmatpush1.msra.mxu0 %v103
    %1635 = vmatprep.subr.mxu0 0.0
    %1636 = vmatpush1.msra.mxu0 %v102
    %1637 = vmatprep.subr.mxu0 0.0
    %1638 = vmatpush1.msra.mxu0 %v101
    %1639 = vmatprep.subr.mxu0 0.0
    %1640 = vmatpush1.msra.mxu0 %v100
    %1641 = vmatprep.subr.mxu0 0.0
    %1642 = vmatpush1.msra.mxu0 %v99
    %1643 = vmatprep.subr.mxu0 0.0
    %1644 = vmatpush1.msra.mxu0 %v98
    %1645 = vmatprep.subr.mxu0 0.0
    %1646 = vmatpush2.msra.mxu0 0.0
    %1647 = vmatprep.subr.mxu0 0.0
    %1648 = vmatpush2.msra.mxu0 0.0
    %1649 = vmatprep.subr.mxu0 0.0
    %1650 = vmatpush2.msra.mxu0 0.0
    %1651 = vmatprep.subr.mxu0 0.0
    %1652 = vmatpush2.msra.mxu0 0.0
    %1653 = vmatprep.subr.mxu0 0.0
    %1654 = vmatpush2.msra.mxu0 0.0
    %1655 = vmatprep.subr.mxu0 0.0
    %1656 = vmatpush2.msra.mxu0 0.0
    %1657 = vmatprep.subr.mxu0 0.0
    %1658 = vmatpush2.msra.mxu0 0.0
    %1659 = vmatprep.subr.mxu0 0.0
    %1660 = vmatpush2.msra.mxu0 0.0
    %1661 = vmatprep.subr.mxu0 0.0
    %1662 = vmatpush2.msra.mxu0 0.0
    %1663 = vmatprep.subr.mxu0 0.0
    %1664 = vmatpush2.msra.mxu0 0.0
    %1665 = vmatprep.subr.mxu0 0.0
    %1666 = vmatpush2.msra.mxu0 0.0
    %1667 = vmatprep.subr.mxu0 0.0
    %1668 = vmatpush2.msra.mxu0 0.0
    %1669 = vmatprep.subr.mxu0 0.0
    %1670 = vmatpush2.msra.mxu0 0.0
    %1671 = vmatprep.subr.mxu0 0.0
    %1672 = vmatpush2.msra.mxu0 0.0
    %1673 = vmatprep.subr.mxu0 0.0
    %1674 = vmatpush2.msra.mxu0 0.0
    %1675 = vmatprep.subr.mxu0 0.0
    %1676 = vmatpush2.msra.mxu0 0.0
    %1677 = vmatprep.mubr.f32.mxu0 0.0
    %1678 = vmatmul.mubr.f32.gmra.mxu0 %v1612
    %v1679 = vpop.f32.mrf.mxu0
    %v1680 = vadd.f32 %v153, %v1679
    %v1681 = vpop.f32.mrf.mxu0
    %1682 = vdwg.mxu0
    %1684 = vrot.lane.b32.xlu0 %v1680, 12
    %v1685 = vpop.permute.xlu0 %1684
    %vm1687 = vcmask 130144
    %1688 = vst.msk [vmem:[%s7] sm:$0xff] %vm1687, %v1685
    %v1689 = vsel %vm160, %v1680, 0
    %1691 = vmatprep.subr.mxu0 0.0
    %1692 = vmatpush1.msra.mxu0 0.0
    %1693 = vmatprep.subr.mxu0 0.0
    %1694 = vmatpush1.msra.mxu0 0.0
    %1695 = vmatprep.subr.mxu0 0.0
    %1696 = vmatpush1.msra.mxu0 0.0
    %1697 = vmatprep.subr.mxu0 0.0
    %1698 = vmatpush1.msra.mxu0 0.0
    %1699 = vmatprep.subr.mxu0 0.0
    %1700 = vmatpush1.msra.mxu0 0.0
    %1701 = vmatprep.subr.mxu0 0.0
    %1702 = vmatpush1.msra.mxu0 0.0
    %1703 = vmatprep.subr.mxu0 0.0
    %1704 = vmatpush1.msra.mxu0 0.0
    %1705 = vmatprep.subr.mxu0 0.0
    %1706 = vmatpush1.msra.mxu0 0.0
    %1707 = vmatprep.subr.mxu0 0.0
    %1708 = vmatpush1.msra.mxu0 0.0
    %1709 = vmatprep.subr.mxu0 0.0
    %1710 = vmatpush1.msra.mxu0 0.0
    %1711 = vmatprep.subr.mxu0 0.0
    %1712 = vmatpush1.msra.mxu0 0.0
    %1713 = vmatprep.subr.mxu0 0.0
    %1714 = vmatpush1.msra.mxu0 0.0
    %1715 = vmatprep.subr.mxu0 0.0
    %1716 = vmatpush1.msra.mxu0 0.0
    %1717 = vmatprep.subr.mxu0 0.0
    %1718 = vmatpush1.msra.mxu0 0.0
    %1719 = vmatprep.subr.mxu0 0.0
    %1720 = vmatpush1.msra.mxu0 0.0
    %1721 = vmatprep.subr.mxu0 %v167
    %1722 = vmatpush1.msra.mxu0 %v165
    %1723 = vmatprep.subr.mxu0 0.0
    %1724 = vmatpush2.msra.mxu0 0.0
    %1725 = vmatprep.subr.mxu0 0.0
    %1726 = vmatpush2.msra.mxu0 0.0
    %1727 = vmatprep.subr.mxu0 0.0
    %1728 = vmatpush2.msra.mxu0 0.0
    %1729 = vmatprep.subr.mxu0 0.0
    %1730 = vmatpush2.msra.mxu0 0.0
    %1731 = vmatprep.subr.mxu0 0.0
    %1732 = vmatpush2.msra.mxu0 0.0
    %1733 = vmatprep.subr.mxu0 0.0
    %1734 = vmatpush2.msra.mxu0 0.0
    %1735 = vmatprep.subr.mxu0 0.0
    %1736 = vmatpush2.msra.mxu0 0.0
    %1737 = vmatprep.subr.mxu0 0.0
    %1738 = vmatpush2.msra.mxu0 0.0
    %1739 = vmatprep.subr.mxu0 0.0
    %1740 = vmatpush2.msra.mxu0 0.0
    %1741 = vmatprep.subr.mxu0 0.0
    %1742 = vmatpush2.msra.mxu0 0.0
    %1743 = vmatprep.subr.mxu0 0.0
    %1744 = vmatpush2.msra.mxu0 0.0
    %1745 = vmatprep.subr.mxu0 0.0
    %1746 = vmatpush2.msra.mxu0 0.0
    %1747 = vmatprep.subr.mxu0 0.0
    %1748 = vmatpush2.msra.mxu0 0.0
    %1749 = vmatprep.subr.mxu0 0.0
    %1750 = vmatpush2.msra.mxu0 0.0
    %1751 = vmatprep.subr.mxu0 0.0
    %1752 = vmatpush2.msra.mxu0 0.0
    %1753 = vmatprep.subr.mxu0 0.0
    %1754 = vmatpush2.msra.mxu0 0.0
    %1755 = vmatprep.mubr.f32.mxu0 0.0
    %1756 = vmatmul.mubr.f32.gmra.mxu0 %v1689
    %v1757 = vpop.f32.mrf.mxu0
    %v1758 = vadd.f32 %v119, %v1757
    %v1759 = vpop.f32.mrf.mxu0
    %v1760 = vadd.f32 %v123, %v1759
    %1761 = vdwg.mxu0
    %1762 = vmatprep.subr.mxu0 0.0
    %1763 = vmatpush1.msra.mxu0 0.0
    %1764 = vmatprep.subr.mxu0 0.0
    %1765 = vmatpush1.msra.mxu0 0.0
    %1766 = vmatprep.subr.mxu0 0.0
    %1767 = vmatpush1.msra.mxu0 0.0
    %1768 = vmatprep.subr.mxu0 0.0
    %1769 = vmatpush1.msra.mxu0 0.0
    %1770 = vmatprep.subr.mxu0 0.0
    %1771 = vmatpush1.msra.mxu0 0.0
    %1772 = vmatprep.subr.mxu0 0.0
    %1773 = vmatpush1.msra.mxu0 0.0
    %1774 = vmatprep.subr.mxu0 0.0
    %1775 = vmatpush1.msra.mxu0 0.0
    %1776 = vmatprep.subr.mxu0 0.0
    %1777 = vmatpush1.msra.mxu0 0.0
    %1778 = vmatprep.subr.mxu0 0.0
    %1779 = vmatpush1.msra.mxu0 0.0
    %1780 = vmatprep.subr.mxu0 0.0
    %1781 = vmatpush1.msra.mxu0 0.0
    %1782 = vmatprep.subr.mxu0 0.0
    %1783 = vmatpush1.msra.mxu0 0.0
    %1784 = vmatprep.subr.mxu0 0.0
    %1785 = vmatpush1.msra.mxu0 0.0
    %1786 = vmatprep.subr.mxu0 0.0
    %1787 = vmatpush1.msra.mxu0 0.0
    %1788 = vmatprep.subr.mxu0 0.0
    %1789 = vmatpush1.msra.mxu0 0.0
    %1790 = vmatprep.subr.mxu0 0.0
    %1791 = vmatpush1.msra.mxu0 0.0
    %1792 = vmatprep.subr.mxu0 0.0
    %1793 = vmatpush1.msra.mxu0 %v169
    %1794 = vmatprep.subr.mxu0 0.0
    %1795 = vmatpush2.msra.mxu0 0.0
    %1796 = vmatprep.subr.mxu0 0.0
    %1797 = vmatpush2.msra.mxu0 0.0
    %1798 = vmatprep.subr.mxu0 0.0
    %1799 = vmatpush2.msra.mxu0 0.0
    %1800 = vmatprep.subr.mxu0 0.0
    %1801 = vmatpush2.msra.mxu0 0.0
    %1802 = vmatprep.subr.mxu0 0.0
    %1803 = vmatpush2.msra.mxu0 0.0
    %1804 = vmatprep.subr.mxu0 0.0
    %1805 = vmatpush2.msra.mxu0 0.0
    %1806 = vmatprep.subr.mxu0 0.0
    %1807 = vmatpush2.msra.mxu0 0.0
    %1808 = vmatprep.subr.mxu0 0.0
    %1809 = vmatpush2.msra.mxu0 0.0
    %1810 = vmatprep.subr.mxu0 0.0
    %1811 = vmatpush2.msra.mxu0 0.0
    %1812 = vmatprep.subr.mxu0 0.0
    %1813 = vmatpush2.msra.mxu0 0.0
    %1814 = vmatprep.subr.mxu0 0.0
    %1815 = vmatpush2.msra.mxu0 0.0
    %1816 = vmatprep.subr.mxu0 0.0
    %1817 = vmatpush2.msra.mxu0 0.0
    %1818 = vmatprep.subr.mxu0 0.0
    %1819 = vmatpush2.msra.mxu0 0.0
    %1820 = vmatprep.subr.mxu0 0.0
    %1821 = vmatpush2.msra.mxu0 0.0
    %1822 = vmatprep.subr.mxu0 0.0
    %1823 = vmatpush2.msra.mxu0 0.0
    %1824 = vmatprep.subr.mxu0 0.0
    %1825 = vmatpush2.msra.mxu0 0.0
    %1826 = vmatprep.mubr.f32.mxu0 0.0
    %1827 = vmatmul.mubr.f32.gmra.mxu0 %v1689
    %v1828 = vpop.f32.mrf.mxu0
    %v1829 = vadd.f32 %v127, %v1828
    %v1830 = vpop.f32.mrf.mxu0
    %1831 = vdwg.mxu0
    %1832 = vmatprep.subr.mxu0 %v96
    %1833 = vmatpush1.msra.mxu0 %v95
    %1834 = vmatprep.subr.mxu0 %v93
    %1835 = vmatpush1.msra.mxu0 %v92
    %1836 = vmatprep.subr.mxu0 %v90
    %1837 = vmatpush1.msra.mxu0 %v89
    %1838 = vmatprep.subr.mxu0 %v87
    %1839 = vmatpush1.msra.mxu0 %v86
    %1840 = vmatprep.subr.mxu0 %v84
    %1841 = vmatpush1.msra.mxu0 %v83
    %1842 = vmatprep.subr.mxu0 %v81
    %1843 = vmatpush1.msra.mxu0 %v80
    %1844 = vmatprep.subr.mxu0 %v78
    %1845 = vmatpush1.msra.mxu0 %v77
    %1846 = vmatprep.subr.mxu0 %v75
    %1847 = vmatpush1.msra.mxu0 %v74
    %1848 = vmatprep.subr.mxu0 %v72
    %1849 = vmatpush1.msra.mxu0 %v71
    %1850 = vmatprep.subr.mxu0 %v69
    %1851 = vmatpush1.msra.mxu0 %v68
    %1852 = vmatprep.subr.mxu0 %v66
    %1853 = vmatpush1.msra.mxu0 %v65
    %1854 = vmatprep.subr.mxu0 %v63
    %1855 = vmatpush1.msra.mxu0 %v62
    %1856 = vmatprep.subr.mxu0 %v60
    %1857 = vmatpush1.msra.mxu0 %v59
    %1858 = vmatprep.subr.mxu0 %v57
    %1859 = vmatpush1.msra.mxu0 %v56
    %1860 = vmatprep.subr.mxu0 %v54
    %1861 = vmatpush1.msra.mxu0 %v53
    %1862 = vmatprep.subr.mxu0 %v51
    %1863 = vmatpush1.msra.mxu0 %v50
    %1864 = vmatprep.subr.mxu0 0.0
    %1865 = vmatpush2.msra.mxu0 0.0
    %1866 = vmatprep.subr.mxu0 0.0
    %1867 = vmatpush2.msra.mxu0 0.0
    %1868 = vmatprep.subr.mxu0 0.0
    %1869 = vmatpush2.msra.mxu0 0.0
    %1870 = vmatprep.subr.mxu0 0.0
    %1871 = vmatpush2.msra.mxu0 0.0
    %1872 = vmatprep.subr.mxu0 0.0
    %1873 = vmatpush2.msra.mxu0 0.0
    %1874 = vmatprep.subr.mxu0 0.0
    %1875 = vmatpush2.msra.mxu0 0.0
    %1876 = vmatprep.subr.mxu0 0.0
    %1877 = vmatpush2.msra.mxu0 0.0
    %1878 = vmatprep.subr.mxu0 0.0
    %1879 = vmatpush2.msra.mxu0 0.0
    %1880 = vmatprep.subr.mxu0 0.0
    %1881 = vmatpush2.msra.mxu0 0.0
    %1882 = vmatprep.subr.mxu0 0.0
    %1883 = vmatpush2.msra.mxu0 0.0
    %1884 = vmatprep.subr.mxu0 0.0
    %1885 = vmatpush2.msra.mxu0 0.0
    %1886 = vmatprep.subr.mxu0 0.0
    %1887 = vmatpush2.msra.mxu0 0.0
    %1888 = vmatprep.subr.mxu0 0.0
    %1889 = vmatpush2.msra.mxu0 0.0
    %1890 = vmatprep.subr.mxu0 0.0
    %1891 = vmatpush2.msra.mxu0 0.0
    %1892 = vmatprep.subr.mxu0 0.0
    %1893 = vmatpush2.msra.mxu0 0.0
    %1894 = vmatprep.subr.mxu0 0.0
    %1895 = vmatpush2.msra.mxu0 0.0
    %1896 = vmatprep.mubr.f32.mxu0 0.0
    %1897 = vmatmul.mubr.f32.gmra.mxu0 %v1612
    %v1898 = vpop.f32.mrf.mxu0
    %v1899 = vadd.f32 %v136, %v1898
    %v1900 = vpop.f32.mrf.mxu0
    %v1901 = vadd.f32 %v140, %v1900
    %1902 = vdwg.mxu0
    %1903 = vmatprep.subr.mxu0 0.0
    %1904 = vmatpush1.msra.mxu0 %v97
    %1905 = vmatprep.subr.mxu0 0.0
    %1906 = vmatpush1.msra.mxu0 %v94
    %1907 = vmatprep.subr.mxu0 0.0
    %1908 = vmatpush1.msra.mxu0 %v91
    %1909 = vmatprep.subr.mxu0 0.0
    %1910 = vmatpush1.msra.mxu0 %v88
    %1911 = vmatprep.subr.mxu0 0.0
    %1912 = vmatpush1.msra.mxu0 %v85
    %1913 = vmatprep.subr.mxu0 0.0
    %1914 = vmatpush1.msra.mxu0 %v82
    %1915 = vmatprep.subr.mxu0 0.0
    %1916 = vmatpush1.msra.mxu0 %v79
    %1917 = vmatprep.subr.mxu0 0.0
    %1918 = vmatpush1.msra.mxu0 %v76
    %1919 = vmatprep.subr.mxu0 0.0
    %1920 = vmatpush1.msra.mxu0 %v73
    %1921 = vmatprep.subr.mxu0 0.0
    %1922 = vmatpush1.msra.mxu0 %v70
    %1923 = vmatprep.subr.mxu0 0.0
    %1924 = vmatpush1.msra.mxu0 %v67
    %1925 = vmatprep.subr.mxu0 0.0
    %1926 = vmatpush1.msra.mxu0 %v64
    %1927 = vmatprep.subr.mxu0 0.0
    %1928 = vmatpush1.msra.mxu0 %v61
    %1929 = vmatprep.subr.mxu0 0.0
    %1930 = vmatpush1.msra.mxu0 %v58
    %1931 = vmatprep.subr.mxu0 0.0
    %1932 = vmatpush1.msra.mxu0 %v55
    %1933 = vmatprep.subr.mxu0 0.0
    %1934 = vmatpush1.msra.mxu0 %v52
    %1935 = vmatprep.subr.mxu0 0.0
    %1936 = vmatpush2.msra.mxu0 0.0
    %1937 = vmatprep.subr.mxu0 0.0
    %1938 = vmatpush2.msra.mxu0 0.0
    %1939 = vmatprep.subr.mxu0 0.0
    %1940 = vmatpush2.msra.mxu0 0.0
    %1941 = vmatprep.subr.mxu0 0.0
    %1942 = vmatpush2.msra.mxu0 0.0
    %1943 = vmatprep.subr.mxu0 0.0
    %1944 = vmatpush2.msra.mxu0 0.0
    %1945 = vmatprep.subr.mxu0 0.0
    %1946 = vmatpush2.msra.mxu0 0.0
    %1947 = vmatprep.subr.mxu0 0.0
    %1948 = vmatpush2.msra.mxu0 0.0
    %1949 = vmatprep.subr.mxu0 0.0
    %1950 = vmatpush2.msra.mxu0 0.0
    %1951 = vmatprep.subr.mxu0 0.0
    %1952 = vmatpush2.msra.mxu0 0.0
    %1953 = vmatprep.subr.mxu0 0.0
    %1954 = vmatpush2.msra.mxu0 0.0
    %1955 = vmatprep.subr.mxu0 0.0
    %1956 = vmatpush2.msra.mxu0 0.0
    %1957 = vmatprep.subr.mxu0 0.0
    %1958 = vmatpush2.msra.mxu0 0.0
    %1959 = vmatprep.subr.mxu0 0.0
    %1960 = vmatpush2.msra.mxu0 0.0
    %1961 = vmatprep.subr.mxu0 0.0
    %1962 = vmatpush2.msra.mxu0 0.0
    %1963 = vmatprep.subr.mxu0 0.0
    %1964 = vmatpush2.msra.mxu0 0.0
    %1965 = vmatprep.subr.mxu0 0.0
    %1966 = vmatpush2.msra.mxu0 0.0
    %1967 = vmatprep.mubr.f32.mxu0 0.0
    %1968 = vmatmul.mubr.f32.gmra.mxu0 %v1612
    %v1969 = vpop.f32.mrf.mxu0
    %v1970 = vadd.f32 %v144, %v1969
    %v1971 = vpop.f32.mrf.mxu0
    %1972 = vdwg.mxu0
    %v1973 = vadd.f32 %v1758, %v1899
    %v1974 = vxor.u32 %v1973, 2147483648
    %v1975 = vmul.f32 %v1974, 1.442695
    %v1976 = vpow.pop %v1975
    %v1977 = vadd.f32 %v1976, 1.0
    %v1978 = vrcp.pop %v1977
    %v1979 = vmul.f32 1.0, %v1978
    %v1980 = vadd.f32 %v1760, %v1901
    %v1981 = vxor.u32 %v1980, 2147483648
    %v1982 = vmul.f32 %v1981, 1.442695
    %v1983 = vpow.pop %v1982
    %v1984 = vadd.f32 %v1983, 1.0
    %v1985 = vrcp.pop %v1984
    %v1986 = vmul.f32 1.0, %v1985
    %v1987 = vmul.f32 %v1979, %v1970
    %v1988 = vadd.f32 %v1829, %v1987
    %v1989 = vtanh.pop %v1988
    %v1990 = vsub.f32 1.0, %v1986
    %v1991 = vmul.f32 %v1990, %v1989
    %v1992 = vmul.f32 %v1986, %v1612
    %v1993 = vadd.f32 %v1991, %v1992
    %1994 = vmatprep.subr.mxu0 0.0
    %1995 = vmatpush1.msra.mxu0 %v113
    %1996 = vmatprep.subr.mxu0 0.0
    %1997 = vmatpush1.msra.mxu0 %v112
    %1998 = vmatprep.subr.mxu0 0.0
    %1999 = vmatpush1.msra.mxu0 %v111
    %2000 = vmatprep.subr.mxu0 0.0
    %2001 = vmatpush1.msra.mxu0 %v110
    %2002 = vmatprep.subr.mxu0 0.0
    %2003 = vmatpush1.msra.mxu0 %v109
    %2004 = vmatprep.subr.mxu0 0.0
    %2005 = vmatpush1.msra.mxu0 %v108
    %2006 = vmatprep.subr.mxu0 0.0
    %2007 = vmatpush1.msra.mxu0 %v107
    %2008 = vmatprep.subr.mxu0 0.0
    %2009 = vmatpush1.msra.mxu0 %v106
    %2010 = vmatprep.subr.mxu0 0.0
    %2011 = vmatpush1.msra.mxu0 %v105
    %2012 = vmatprep.subr.mxu0 0.0
    %2013 = vmatpush1.msra.mxu0 %v104
    %2014 = vmatprep.subr.mxu0 0.0
    %2015 = vmatpush1.msra.mxu0 %v103
    %2016 = vmatprep.subr.mxu0 0.0
    %2017 = vmatpush1.msra.mxu0 %v102
    %2018 = vmatprep.subr.mxu0 0.0
    %2019 = vmatpush1.msra.mxu0 %v101
    %2020 = vmatprep.subr.mxu0 0.0
    %2021 = vmatpush1.msra.mxu0 %v100
    %2022 = vmatprep.subr.mxu0 0.0
    %2023 = vmatpush1.msra.mxu0 %v99
    %2024 = vmatprep.subr.mxu0 0.0
    %2025 = vmatpush1.msra.mxu0 %v98
    %2026 = vmatprep.subr.mxu0 0.0
    %2027 = vmatpush2.msra.mxu0 0.0
    %2028 = vmatprep.subr.mxu0 0.0
    %2029 = vmatpush2.msra.mxu0 0.0
    %2030 = vmatprep.subr.mxu0 0.0
    %2031 = vmatpush2.msra.mxu0 0.0
    %2032 = vmatprep.subr.mxu0 0.0
    %2033 = vmatpush2.msra.mxu0 0.0
    %2034 = vmatprep.subr.mxu0 0.0
    %2035 = vmatpush2.msra.mxu0 0.0
    %2036 = vmatprep.subr.mxu0 0.0
    %2037 = vmatpush2.msra.mxu0 0.0
    %2038 = vmatprep.subr.mxu0 0.0
    %2039 = vmatpush2.msra.mxu0 0.0
    %2040 = vmatprep.subr.mxu0 0.0
    %2041 = vmatpush2.msra.mxu0 0.0
    %2042 = vmatprep.subr.mxu0 0.0
    %2043 = vmatpush2.msra.mxu0 0.0
    %2044 = vmatprep.subr.mxu0 0.0
    %2045 = vmatpush2.msra.mxu0 0.0
    %2046 = vmatprep.subr.mxu0 0.0
    %2047 = vmatpush2.msra.mxu0 0.0
    %2048 = vmatprep.subr.mxu0 0.0
    %2049 = vmatpush2.msra.mxu0 0.0
    %2050 = vmatprep.subr.mxu0 0.0
    %2051 = vmatpush2.msra.mxu0 0.0
    %2052 = vmatprep.subr.mxu0 0.0
    %2053 = vmatpush2.msra.mxu0 0.0
    %2054 = vmatprep.subr.mxu0 0.0
    %2055 = vmatpush2.msra.mxu0 0.0
    %2056 = vmatprep.subr.mxu0 0.0
    %2057 = vmatpush2.msra.mxu0 0.0
    %2058 = vmatprep.mubr.f32.mxu0 0.0
    %2059 = vmatmul.mubr.f32.gmra.mxu0 %v1993
    %v2060 = vpop.f32.mrf.mxu0
    %v2061 = vadd.f32 %v153, %v2060
    %v2062 = vpop.f32.mrf.mxu0
    %2063 = vdwg.mxu0
    %2065 = vrot.lane.b32.xlu0 %v2061, 16
    %v2066 = vpop.permute.xlu0 %2065
    %vm2068 = vcmask 162944
    %2069 = vst.msk [vmem:[%s7] sm:$0xff] %vm2068, %v2066
    %v2070 = vsel %vm160, %v2061, 0
    %2072 = vmatprep.subr.mxu0 0.0
    %2073 = vmatpush1.msra.mxu0 0.0
    %2074 = vmatprep.subr.mxu0 0.0
    %2075 = vmatpush1.msra.mxu0 0.0
    %2076 = vmatprep.subr.mxu0 0.0
    %2077 = vmatpush1.msra.mxu0 0.0
    %2078 = vmatprep.subr.mxu0 0.0
    %2079 = vmatpush1.msra.mxu0 0.0
    %2080 = vmatprep.subr.mxu0 0.0
    %2081 = vmatpush1.msra.mxu0 0.0
    %2082 = vmatprep.subr.mxu0 0.0
    %2083 = vmatpush1.msra.mxu0 0.0
    %2084 = vmatprep.subr.mxu0 0.0
    %2085 = vmatpush1.msra.mxu0 0.0
    %2086 = vmatprep.subr.mxu0 0.0
    %2087 = vmatpush1.msra.mxu0 0.0
    %2088 = vmatprep.subr.mxu0 0.0
    %2089 = vmatpush1.msra.mxu0 0.0
    %2090 = vmatprep.subr.mxu0 0.0
    %2091 = vmatpush1.msra.mxu0 0.0
    %2092 = vmatprep.subr.mxu0 0.0
    %2093 = vmatpush1.msra.mxu0 0.0
    %2094 = vmatprep.subr.mxu0 0.0
    %2095 = vmatpush1.msra.mxu0 0.0
    %2096 = vmatprep.subr.mxu0 0.0
    %2097 = vmatpush1.msra.mxu0 0.0
    %2098 = vmatprep.subr.mxu0 0.0
    %2099 = vmatpush1.msra.mxu0 0.0
    %2100 = vmatprep.subr.mxu0 0.0
    %2101 = vmatpush1.msra.mxu0 0.0
    %2102 = vmatprep.subr.mxu0 %v167
    %2103 = vmatpush1.msra.mxu0 %v165
    %2104 = vmatprep.subr.mxu0 0.0
    %2105 = vmatpush2.msra.mxu0 0.0
    %2106 = vmatprep.subr.mxu0 0.0
    %2107 = vmatpush2.msra.mxu0 0.0
    %2108 = vmatprep.subr.mxu0 0.0
    %2109 = vmatpush2.msra.mxu0 0.0
    %2110 = vmatprep.subr.mxu0 0.0
    %2111 = vmatpush2.msra.mxu0 0.0
    %2112 = vmatprep.subr.mxu0 0.0
    %2113 = vmatpush2.msra.mxu0 0.0
    %2114 = vmatprep.subr.mxu0 0.0
    %2115 = vmatpush2.msra.mxu0 0.0
    %2116 = vmatprep.subr.mxu0 0.0
    %2117 = vmatpush2.msra.mxu0 0.0
    %2118 = vmatprep.subr.mxu0 0.0
    %2119 = vmatpush2.msra.mxu0 0.0
    %2120 = vmatprep.subr.mxu0 0.0
    %2121 = vmatpush2.msra.mxu0 0.0
    %2122 = vmatprep.subr.mxu0 0.0
    %2123 = vmatpush2.msra.mxu0 0.0
    %2124 = vmatprep.subr.mxu0 0.0
    %2125 = vmatpush2.msra.mxu0 0.0
    %2126 = vmatprep.subr.mxu0 0.0
    %2127 = vmatpush2.msra.mxu0 0.0
    %2128 = vmatprep.subr.mxu0 0.0
    %2129 = vmatpush2.msra.mxu0 0.0
    %2130 = vmatprep.subr.mxu0 0.0
    %2131 = vmatpush2.msra.mxu0 0.0
    %2132 = vmatprep.subr.mxu0 0.0
    %2133 = vmatpush2.msra.mxu0 0.0
    %2134 = vmatprep.subr.mxu0 0.0
    %2135 = vmatpush2.msra.mxu0 0.0
    %2136 = vmatprep.mubr.f32.mxu0 0.0
    %2137 = vmatmul.mubr.f32.gmra.mxu0 %v2070
    %v2138 = vpop.f32.mrf.mxu0
    %v2139 = vadd.f32 %v119, %v2138
    %v2140 = vpop.f32.mrf.mxu0
    %v2141 = vadd.f32 %v123, %v2140
    %2142 = vdwg.mxu0
    %2143 = vmatprep.subr.mxu0 0.0
    %2144 = vmatpush1.msra.mxu0 0.0
    %2145 = vmatprep.subr.mxu0 0.0
    %2146 = vmatpush1.msra.mxu0 0.0
    %2147 = vmatprep.subr.mxu0 0.0
    %2148 = vmatpush1.msra.mxu0 0.0
    %2149 = vmatprep.subr.mxu0 0.0
    %2150 = vmatpush1.msra.mxu0 0.0
    %2151 = vmatprep.subr.mxu0 0.0
    %2152 = vmatpush1.msra.mxu0 0.0
    %2153 = vmatprep.subr.mxu0 0.0
    %2154 = vmatpush1.msra.mxu0 0.0
    %2155 = vmatprep.subr.mxu0 0.0
    %2156 = vmatpush1.msra.mxu0 0.0
    %2157 = vmatprep.subr.mxu0 0.0
    %2158 = vmatpush1.msra.mxu0 0.0
    %2159 = vmatprep.subr.mxu0 0.0
    %2160 = vmatpush1.msra.mxu0 0.0
    %2161 = vmatprep.subr.mxu0 0.0
    %2162 = vmatpush1.msra.mxu0 0.0
    %2163 = vmatprep.subr.mxu0 0.0
    %2164 = vmatpush1.msra.mxu0 0.0
    %2165 = vmatprep.subr.mxu0 0.0
    %2166 = vmatpush1.msra.mxu0 0.0
    %2167 = vmatprep.subr.mxu0 0.0
    %2168 = vmatpush1.msra.mxu0 0.0
    %2169 = vmatprep.subr.mxu0 0.0
    %2170 = vmatpush1.msra.mxu0 0.0
    %2171 = vmatprep.subr.mxu0 0.0
    %2172 = vmatpush1.msra.mxu0 0.0
    %2173 = vmatprep.subr.mxu0 0.0
    %2174 = vmatpush1.msra.mxu0 %v169
    %2175 = vmatprep.subr.mxu0 0.0
    %2176 = vmatpush2.msra.mxu0 0.0
    %2177 = vmatprep.subr.mxu0 0.0
    %2178 = vmatpush2.msra.mxu0 0.0
    %2179 = vmatprep.subr.mxu0 0.0
    %2180 = vmatpush2.msra.mxu0 0.0
    %2181 = vmatprep.subr.mxu0 0.0
    %2182 = vmatpush2.msra.mxu0 0.0
    %2183 = vmatprep.subr.mxu0 0.0
    %2184 = vmatpush2.msra.mxu0 0.0
    %2185 = vmatprep.subr.mxu0 0.0
    %2186 = vmatpush2.msra.mxu0 0.0
    %2187 = vmatprep.subr.mxu0 0.0
    %2188 = vmatpush2.msra.mxu0 0.0
    %2189 = vmatprep.subr.mxu0 0.0
    %2190 = vmatpush2.msra.mxu0 0.0
    %2191 = vmatprep.subr.mxu0 0.0
    %2192 = vmatpush2.msra.mxu0 0.0
    %2193 = vmatprep.subr.mxu0 0.0
    %2194 = vmatpush2.msra.mxu0 0.0
    %2195 = vmatprep.subr.mxu0 0.0
    %2196 = vmatpush2.msra.mxu0 0.0
    %2197 = vmatprep.subr.mxu0 0.0
    %2198 = vmatpush2.msra.mxu0 0.0
    %2199 = vmatprep.subr.mxu0 0.0
    %2200 = vmatpush2.msra.mxu0 0.0
    %2201 = vmatprep.subr.mxu0 0.0
    %2202 = vmatpush2.msra.mxu0 0.0
    %2203 = vmatprep.subr.mxu0 0.0
    %2204 = vmatpush2.msra.mxu0 0.0
    %2205 = vmatprep.subr.mxu0 0.0
    %2206 = vmatpush2.msra.mxu0 0.0
    %2207 = vmatprep.mubr.f32.mxu0 0.0
    %2208 = vmatmul.mubr.f32.gmra.mxu0 %v2070
    %v2209 = vpop.f32.mrf.mxu0
    %v2210 = vadd.f32 %v127, %v2209
    %v2211 = vpop.f32.mrf.mxu0
    %2212 = vdwg.mxu0
    %2213 = vmatprep.subr.mxu0 %v96
    %2214 = vmatpush1.msra.mxu0 %v95
    %2215 = vmatprep.subr.mxu0 %v93
    %2216 = vmatpush1.msra.mxu0 %v92
    %2217 = vmatprep.subr.mxu0 %v90
    %2218 = vmatpush1.msra.mxu0 %v89
    %2219 = vmatprep.subr.mxu0 %v87
    %2220 = vmatpush1.msra.mxu0 %v86
    %2221 = vmatprep.subr.mxu0 %v84
    %2222 = vmatpush1.msra.mxu0 %v83
    %2223 = vmatprep.subr.mxu0 %v81
    %2224 = vmatpush1.msra.mxu0 %v80
    %2225 = vmatprep.subr.mxu0 %v78
    %2226 = vmatpush1.msra.mxu0 %v77
    %2227 = vmatprep.subr.mxu0 %v75
    %2228 = vmatpush1.msra.mxu0 %v74
    %2229 = vmatprep.subr.mxu0 %v72
    %2230 = vmatpush1.msra.mxu0 %v71
    %2231 = vmatprep.subr.mxu0 %v69
    %2232 = vmatpush1.msra.mxu0 %v68
    %2233 = vmatprep.subr.mxu0 %v66
    %2234 = vmatpush1.msra.mxu0 %v65
    %2235 = vmatprep.subr.mxu0 %v63
    %2236 = vmatpush1.msra.mxu0 %v62
    %2237 = vmatprep.subr.mxu0 %v60
    %2238 = vmatpush1.msra.mxu0 %v59
    %2239 = vmatprep.subr.mxu0 %v57
    %2240 = vmatpush1.msra.mxu0 %v56
    %2241 = vmatprep.subr.mxu0 %v54
    %2242 = vmatpush1.msra.mxu0 %v53
    %2243 = vmatprep.subr.mxu0 %v51
    %2244 = vmatpush1.msra.mxu0 %v50
    %2245 = vmatprep.subr.mxu0 0.0
    %2246 = vmatpush2.msra.mxu0 0.0
    %2247 = vmatprep.subr.mxu0 0.0
    %2248 = vmatpush2.msra.mxu0 0.0
    %2249 = vmatprep.subr.mxu0 0.0
    %2250 = vmatpush2.msra.mxu0 0.0
    %2251 = vmatprep.subr.mxu0 0.0
    %2252 = vmatpush2.msra.mxu0 0.0
    %2253 = vmatprep.subr.mxu0 0.0
    %2254 = vmatpush2.msra.mxu0 0.0
    %2255 = vmatprep.subr.mxu0 0.0
    %2256 = vmatpush2.msra.mxu0 0.0
    %2257 = vmatprep.subr.mxu0 0.0
    %2258 = vmatpush2.msra.mxu0 0.0
    %2259 = vmatprep.subr.mxu0 0.0
    %2260 = vmatpush2.msra.mxu0 0.0
    %2261 = vmatprep.subr.mxu0 0.0
    %2262 = vmatpush2.msra.mxu0 0.0
    %2263 = vmatprep.subr.mxu0 0.0
    %2264 = vmatpush2.msra.mxu0 0.0
    %2265 = vmatprep.subr.mxu0 0.0
    %2266 = vmatpush2.msra.mxu0 0.0
    %2267 = vmatprep.subr.mxu0 0.0
    %2268 = vmatpush2.msra.mxu0 0.0
    %2269 = vmatprep.subr.mxu0 0.0
    %2270 = vmatpush2.msra.mxu0 0.0
    %2271 = vmatprep.subr.mxu0 0.0
    %2272 = vmatpush2.msra.mxu0 0.0
    %2273 = vmatprep.subr.mxu0 0.0
    %2274 = vmatpush2.msra.mxu0 0.0
    %2275 = vmatprep.subr.mxu0 0.0
    %2276 = vmatpush2.msra.mxu0 0.0
    %2277 = vmatprep.mubr.f32.mxu0 0.0
    %2278 = vmatmul.mubr.f32.gmra.mxu0 %v1993
    %v2279 = vpop.f32.mrf.mxu0
    %v2280 = vadd.f32 %v136, %v2279
    %v2281 = vpop.f32.mrf.mxu0
    %v2282 = vadd.f32 %v140, %v2281
    %2283 = vdwg.mxu0
    %2284 = vmatprep.subr.mxu0 0.0
    %2285 = vmatpush1.msra.mxu0 %v97
    %2286 = vmatprep.subr.mxu0 0.0
    %2287 = vmatpush1.msra.mxu0 %v94
    %2288 = vmatprep.subr.mxu0 0.0
    %2289 = vmatpush1.msra.mxu0 %v91
    %2290 = vmatprep.subr.mxu0 0.0
    %2291 = vmatpush1.msra.mxu0 %v88
    %2292 = vmatprep.subr.mxu0 0.0
    %2293 = vmatpush1.msra.mxu0 %v85
    %2294 = vmatprep.subr.mxu0 0.0
    %2295 = vmatpush1.msra.mxu0 %v82
    %2296 = vmatprep.subr.mxu0 0.0
    %2297 = vmatpush1.msra.mxu0 %v79
    %2298 = vmatprep.subr.mxu0 0.0
    %2299 = vmatpush1.msra.mxu0 %v76
    %2300 = vmatprep.subr.mxu0 0.0
    %2301 = vmatpush1.msra.mxu0 %v73
    %2302 = vmatprep.subr.mxu0 0.0
    %2303 = vmatpush1.msra.mxu0 %v70
    %2304 = vmatprep.subr.mxu0 0.0
    %2305 = vmatpush1.msra.mxu0 %v67
    %2306 = vmatprep.subr.mxu0 0.0
    %2307 = vmatpush1.msra.mxu0 %v64
    %2308 = vmatprep.subr.mxu0 0.0
    %2309 = vmatpush1.msra.mxu0 %v61
    %2310 = vmatprep.subr.mxu0 0.0
    %2311 = vmatpush1.msra.mxu0 %v58
    %2312 = vmatprep.subr.mxu0 0.0
    %2313 = vmatpush1.msra.mxu0 %v55
    %2314 = vmatprep.subr.mxu0 0.0
    %2315 = vmatpush1.msra.mxu0 %v52
    %2316 = vmatprep.subr.mxu0 0.0
    %2317 = vmatpush2.msra.mxu0 0.0
    %2318 = vmatprep.subr.mxu0 0.0
    %2319 = vmatpush2.msra.mxu0 0.0
    %2320 = vmatprep.subr.mxu0 0.0
    %2321 = vmatpush2.msra.mxu0 0.0
    %2322 = vmatprep.subr.mxu0 0.0
    %2323 = vmatpush2.msra.mxu0 0.0
    %2324 = vmatprep.subr.mxu0 0.0
    %2325 = vmatpush2.msra.mxu0 0.0
    %2326 = vmatprep.subr.mxu0 0.0
    %2327 = vmatpush2.msra.mxu0 0.0
    %2328 = vmatprep.subr.mxu0 0.0
    %2329 = vmatpush2.msra.mxu0 0.0
    %2330 = vmatprep.subr.mxu0 0.0
    %2331 = vmatpush2.msra.mxu0 0.0
    %2332 = vmatprep.subr.mxu0 0.0
    %2333 = vmatpush2.msra.mxu0 0.0
    %2334 = vmatprep.subr.mxu0 0.0
    %2335 = vmatpush2.msra.mxu0 0.0
    %2336 = vmatprep.subr.mxu0 0.0
    %2337 = vmatpush2.msra.mxu0 0.0
    %2338 = vmatprep.subr.mxu0 0.0
    %2339 = vmatpush2.msra.mxu0 0.0
    %2340 = vmatprep.subr.mxu0 0.0
    %2341 = vmatpush2.msra.mxu0 0.0
    %2342 = vmatprep.subr.mxu0 0.0
    %2343 = vmatpush2.msra.mxu0 0.0
    %2344 = vmatprep.subr.mxu0 0.0
    %2345 = vmatpush2.msra.mxu0 0.0
    %2346 = vmatprep.subr.mxu0 0.0
    %2347 = vmatpush2.msra.mxu0 0.0
    %2348 = vmatprep.mubr.f32.mxu0 0.0
    %2349 = vmatmul.mubr.f32.gmra.mxu0 %v1993
    %v2350 = vpop.f32.mrf.mxu0
    %v2351 = vadd.f32 %v144, %v2350
    %v2352 = vpop.f32.mrf.mxu0
    %2353 = vdwg.mxu0
    %v2354 = vadd.f32 %v2139, %v2280
    %v2355 = vxor.u32 %v2354, 2147483648
    %v2356 = vmul.f32 %v2355, 1.442695
    %v2357 = vpow.pop %v2356
    %v2358 = vadd.f32 %v2357, 1.0
    %v2359 = vrcp.pop %v2358
    %v2360 = vmul.f32 1.0, %v2359
    %v2361 = vadd.f32 %v2141, %v2282
    %v2362 = vxor.u32 %v2361, 2147483648
    %v2363 = vmul.f32 %v2362, 1.442695
    %v2364 = vpow.pop %v2363
    %v2365 = vadd.f32 %v2364, 1.0
    %v2366 = vrcp.pop %v2365
    %v2367 = vmul.f32 1.0, %v2366
    %v2368 = vmul.f32 %v2360, %v2351
    %v2369 = vadd.f32 %v2210, %v2368
    %v2370 = vtanh.pop %v2369
    %v2371 = vsub.f32 1.0, %v2367
    %v2372 = vmul.f32 %v2371, %v2370
    %v2373 = vmul.f32 %v2367, %v1993
    %v2374 = vadd.f32 %v2372, %v2373
    %2375 = vmatprep.subr.mxu0 0.0
    %2376 = vmatpush1.msra.mxu0 %v113
    %2377 = vmatprep.subr.mxu0 0.0
    %2378 = vmatpush1.msra.mxu0 %v112
    %2379 = vmatprep.subr.mxu0 0.0
    %2380 = vmatpush1.msra.mxu0 %v111
    %2381 = vmatprep.subr.mxu0 0.0
    %2382 = vmatpush1.msra.mxu0 %v110
    %2383 = vmatprep.subr.mxu0 0.0
    %2384 = vmatpush1.msra.mxu0 %v109
    %2385 = vmatprep.subr.mxu0 0.0
    %2386 = vmatpush1.msra.mxu0 %v108
    %2387 = vmatprep.subr.mxu0 0.0
    %2388 = vmatpush1.msra.mxu0 %v107
    %2389 = vmatprep.subr.mxu0 0.0
    %2390 = vmatpush1.msra.mxu0 %v106
    %2391 = vmatprep.subr.mxu0 0.0
    %2392 = vmatpush1.msra.mxu0 %v105
    %2393 = vmatprep.subr.mxu0 0.0
    %2394 = vmatpush1.msra.mxu0 %v104
    %2395 = vmatprep.subr.mxu0 0.0
    %2396 = vmatpush1.msra.mxu0 %v103
    %2397 = vmatprep.subr.mxu0 0.0
    %2398 = vmatpush1.msra.mxu0 %v102
    %2399 = vmatprep.subr.mxu0 0.0
    %2400 = vmatpush1.msra.mxu0 %v101
    %2401 = vmatprep.subr.mxu0 0.0
    %2402 = vmatpush1.msra.mxu0 %v100
    %2403 = vmatprep.subr.mxu0 0.0
    %2404 = vmatpush1.msra.mxu0 %v99
    %2405 = vmatprep.subr.mxu0 0.0
    %2406 = vmatpush1.msra.mxu0 %v98
    %2407 = vmatprep.subr.mxu0 0.0
    %2408 = vmatpush2.msra.mxu0 0.0
    %2409 = vmatprep.subr.mxu0 0.0
    %2410 = vmatpush2.msra.mxu0 0.0
    %2411 = vmatprep.subr.mxu0 0.0
    %2412 = vmatpush2.msra.mxu0 0.0
    %2413 = vmatprep.subr.mxu0 0.0
    %2414 = vmatpush2.msra.mxu0 0.0
    %2415 = vmatprep.subr.mxu0 0.0
    %2416 = vmatpush2.msra.mxu0 0.0
    %2417 = vmatprep.subr.mxu0 0.0
    %2418 = vmatpush2.msra.mxu0 0.0
    %2419 = vmatprep.subr.mxu0 0.0
    %2420 = vmatpush2.msra.mxu0 0.0
    %2421 = vmatprep.subr.mxu0 0.0
    %2422 = vmatpush2.msra.mxu0 0.0
    %2423 = vmatprep.subr.mxu0 0.0
    %2424 = vmatpush2.msra.mxu0 0.0
    %2425 = vmatprep.subr.mxu0 0.0
    %2426 = vmatpush2.msra.mxu0 0.0
    %2427 = vmatprep.subr.mxu0 0.0
    %2428 = vmatpush2.msra.mxu0 0.0
    %2429 = vmatprep.subr.mxu0 0.0
    %2430 = vmatpush2.msra.mxu0 0.0
    %2431 = vmatprep.subr.mxu0 0.0
    %2432 = vmatpush2.msra.mxu0 0.0
    %2433 = vmatprep.subr.mxu0 0.0
    %2434 = vmatpush2.msra.mxu0 0.0
    %2435 = vmatprep.subr.mxu0 0.0
    %2436 = vmatpush2.msra.mxu0 0.0
    %2437 = vmatprep.subr.mxu0 0.0
    %2438 = vmatpush2.msra.mxu0 0.0
    %2439 = vmatprep.mubr.f32.mxu0 0.0
    %2440 = vmatmul.mubr.f32.gmra.mxu0 %v2374
    %v2441 = vpop.f32.mrf.mxu0
    %v2442 = vadd.f32 %v153, %v2441
    %v2443 = vpop.f32.mrf.mxu0
    %2444 = vdwg.mxu0
    %2446 = vrot.lane.b32.xlu0 %v2442, 20
    %v2447 = vpop.permute.xlu0 %2446
    %vm2449 = vcmask 195744
    %2450 = vst.msk [vmem:[%s7] sm:$0xff] %vm2449, %v2447
    %v2451 = vsel %vm160, %v2442, 0
    %2453 = vmatprep.subr.mxu0 0.0
    %2454 = vmatpush1.msra.mxu0 0.0
    %2455 = vmatprep.subr.mxu0 0.0
    %2456 = vmatpush1.msra.mxu0 0.0
    %2457 = vmatprep.subr.mxu0 0.0
    %2458 = vmatpush1.msra.mxu0 0.0
    %2459 = vmatprep.subr.mxu0 0.0
    %2460 = vmatpush1.msra.mxu0 0.0
    %2461 = vmatprep.subr.mxu0 0.0
    %2462 = vmatpush1.msra.mxu0 0.0
    %2463 = vmatprep.subr.mxu0 0.0
    %2464 = vmatpush1.msra.mxu0 0.0
    %2465 = vmatprep.subr.mxu0 0.0
    %2466 = vmatpush1.msra.mxu0 0.0
    %2467 = vmatprep.subr.mxu0 0.0
    %2468 = vmatpush1.msra.mxu0 0.0
    %2469 = vmatprep.subr.mxu0 0.0
    %2470 = vmatpush1.msra.mxu0 0.0
    %2471 = vmatprep.subr.mxu0 0.0
    %2472 = vmatpush1.msra.mxu0 0.0
    %2473 = vmatprep.subr.mxu0 0.0
    %2474 = vmatpush1.msra.mxu0 0.0
    %2475 = vmatprep.subr.mxu0 0.0
    %2476 = vmatpush1.msra.mxu0 0.0
    %2477 = vmatprep.subr.mxu0 0.0
    %2478 = vmatpush1.msra.mxu0 0.0
    %2479 = vmatprep.subr.mxu0 0.0
    %2480 = vmatpush1.msra.mxu0 0.0
    %2481 = vmatprep.subr.mxu0 0.0
    %2482 = vmatpush1.msra.mxu0 0.0
    %2483 = vmatprep.subr.mxu0 %v167
    %2484 = vmatpush1.msra.mxu0 %v165
    %2485 = vmatprep.subr.mxu0 0.0
    %2486 = vmatpush2.msra.mxu0 0.0
    %2487 = vmatprep.subr.mxu0 0.0
    %2488 = vmatpush2.msra.mxu0 0.0
    %2489 = vmatprep.subr.mxu0 0.0
    %2490 = vmatpush2.msra.mxu0 0.0
    %2491 = vmatprep.subr.mxu0 0.0
    %2492 = vmatpush2.msra.mxu0 0.0
    %2493 = vmatprep.subr.mxu0 0.0
    %2494 = vmatpush2.msra.mxu0 0.0
    %2495 = vmatprep.subr.mxu0 0.0
    %2496 = vmatpush2.msra.mxu0 0.0
    %2497 = vmatprep.subr.mxu0 0.0
    %2498 = vmatpush2.msra.mxu0 0.0
    %2499 = vmatprep.subr.mxu0 0.0
    %2500 = vmatpush2.msra.mxu0 0.0
    %2501 = vmatprep.subr.mxu0 0.0
    %2502 = vmatpush2.msra.mxu0 0.0
    %2503 = vmatprep.subr.mxu0 0.0
    %2504 = vmatpush2.msra.mxu0 0.0
    %2505 = vmatprep.subr.mxu0 0.0
    %2506 = vmatpush2.msra.mxu0 0.0
    %2507 = vmatprep.subr.mxu0 0.0
    %2508 = vmatpush2.msra.mxu0 0.0
    %2509 = vmatprep.subr.mxu0 0.0
    %2510 = vmatpush2.msra.mxu0 0.0
    %2511 = vmatprep.subr.mxu0 0.0
    %2512 = vmatpush2.msra.mxu0 0.0
    %2513 = vmatprep.subr.mxu0 0.0
    %2514 = vmatpush2.msra.mxu0 0.0
    %2515 = vmatprep.subr.mxu0 0.0
    %2516 = vmatpush2.msra.mxu0 0.0
    %2517 = vmatprep.mubr.f32.mxu0 0.0
    %2518 = vmatmul.mubr.f32.gmra.mxu0 %v2451
    %v2519 = vpop.f32.mrf.mxu0
    %v2520 = vadd.f32 %v119, %v2519
    %v2521 = vpop.f32.mrf.mxu0
    %v2522 = vadd.f32 %v123, %v2521
    %2523 = vdwg.mxu0
    %2524 = vmatprep.subr.mxu0 0.0
    %2525 = vmatpush1.msra.mxu0 0.0
    %2526 = vmatprep.subr.mxu0 0.0
    %2527 = vmatpush1.msra.mxu0 0.0
    %2528 = vmatprep.subr.mxu0 0.0
    %2529 = vmatpush1.msra.mxu0 0.0
    %2530 = vmatprep.subr.mxu0 0.0
    %2531 = vmatpush1.msra.mxu0 0.0
    %2532 = vmatprep.subr.mxu0 0.0
    %2533 = vmatpush1.msra.mxu0 0.0
    %2534 = vmatprep.subr.mxu0 0.0
    %2535 = vmatpush1.msra.mxu0 0.0
    %2536 = vmatprep.subr.mxu0 0.0
    %2537 = vmatpush1.msra.mxu0 0.0
    %2538 = vmatprep.subr.mxu0 0.0
    %2539 = vmatpush1.msra.mxu0 0.0
    %2540 = vmatprep.subr.mxu0 0.0
    %2541 = vmatpush1.msra.mxu0 0.0
    %2542 = vmatprep.subr.mxu0 0.0
    %2543 = vmatpush1.msra.mxu0 0.0
    %2544 = vmatprep.subr.mxu0 0.0
    %2545 = vmatpush1.msra.mxu0 0.0
    %2546 = vmatprep.subr.mxu0 0.0
    %2547 = vmatpush1.msra.mxu0 0.0
    %2548 = vmatprep.subr.mxu0 0.0
    %2549 = vmatpush1.msra.mxu0 0.0
    %2550 = vmatprep.subr.mxu0 0.0
    %2551 = vmatpush1.msra.mxu0 0.0
    %2552 = vmatprep.subr.mxu0 0.0
    %2553 = vmatpush1.msra.mxu0 0.0
    %2554 = vmatprep.subr.mxu0 0.0
    %2555 = vmatpush1.msra.mxu0 %v169
    %2556 = vmatprep.subr.mxu0 0.0
    %2557 = vmatpush2.msra.mxu0 0.0
    %2558 = vmatprep.subr.mxu0 0.0
    %2559 = vmatpush2.msra.mxu0 0.0
    %2560 = vmatprep.subr.mxu0 0.0
    %2561 = vmatpush2.msra.mxu0 0.0
    %2562 = vmatprep.subr.mxu0 0.0
    %2563 = vmatpush2.msra.mxu0 0.0
    %2564 = vmatprep.subr.mxu0 0.0
    %2565 = vmatpush2.msra.mxu0 0.0
    %2566 = vmatprep.subr.mxu0 0.0
    %2567 = vmatpush2.msra.mxu0 0.0
    %2568 = vmatprep.subr.mxu0 0.0
    %2569 = vmatpush2.msra.mxu0 0.0
    %2570 = vmatprep.subr.mxu0 0.0
    %2571 = vmatpush2.msra.mxu0 0.0
    %2572 = vmatprep.subr.mxu0 0.0
    %2573 = vmatpush2.msra.mxu0 0.0
    %2574 = vmatprep.subr.mxu0 0.0
    %2575 = vmatpush2.msra.mxu0 0.0
    %2576 = vmatprep.subr.mxu0 0.0
    %2577 = vmatpush2.msra.mxu0 0.0
    %2578 = vmatprep.subr.mxu0 0.0
    %2579 = vmatpush2.msra.mxu0 0.0
    %2580 = vmatprep.subr.mxu0 0.0
    %2581 = vmatpush2.msra.mxu0 0.0
    %2582 = vmatprep.subr.mxu0 0.0
    %2583 = vmatpush2.msra.mxu0 0.0
    %2584 = vmatprep.subr.mxu0 0.0
    %2585 = vmatpush2.msra.mxu0 0.0
    %2586 = vmatprep.subr.mxu0 0.0
    %2587 = vmatpush2.msra.mxu0 0.0
    %2588 = vmatprep.mubr.f32.mxu0 0.0
    %2589 = vmatmul.mubr.f32.gmra.mxu0 %v2451
    %v2590 = vpop.f32.mrf.mxu0
    %v2591 = vadd.f32 %v127, %v2590
    %v2592 = vpop.f32.mrf.mxu0
    %2593 = vdwg.mxu0
    %2594 = vmatprep.subr.mxu0 %v96
    %2595 = vmatpush1.msra.mxu0 %v95
    %2596 = vmatprep.subr.mxu0 %v93
    %2597 = vmatpush1.msra.mxu0 %v92
    %2598 = vmatprep.subr.mxu0 %v90
    %2599 = vmatpush1.msra.mxu0 %v89
    %2600 = vmatprep.subr.mxu0 %v87
    %2601 = vmatpush1.msra.mxu0 %v86
    %2602 = vmatprep.subr.mxu0 %v84
    %2603 = vmatpush1.msra.mxu0 %v83
    %2604 = vmatprep.subr.mxu0 %v81
    %2605 = vmatpush1.msra.mxu0 %v80
    %2606 = vmatprep.subr.mxu0 %v78
    %2607 = vmatpush1.msra.mxu0 %v77
    %2608 = vmatprep.subr.mxu0 %v75
    %2609 = vmatpush1.msra.mxu0 %v74
    %2610 = vmatprep.subr.mxu0 %v72
    %2611 = vmatpush1.msra.mxu0 %v71
    %2612 = vmatprep.subr.mxu0 %v69
    %2613 = vmatpush1.msra.mxu0 %v68
    %2614 = vmatprep.subr.mxu0 %v66
    %2615 = vmatpush1.msra.mxu0 %v65
    %2616 = vmatprep.subr.mxu0 %v63
    %2617 = vmatpush1.msra.mxu0 %v62
    %2618 = vmatprep.subr.mxu0 %v60
    %2619 = vmatpush1.msra.mxu0 %v59
    %2620 = vmatprep.subr.mxu0 %v57
    %2621 = vmatpush1.msra.mxu0 %v56
    %2622 = vmatprep.subr.mxu0 %v54
    %2623 = vmatpush1.msra.mxu0 %v53
    %2624 = vmatprep.subr.mxu0 %v51
    %2625 = vmatpush1.msra.mxu0 %v50
    %2626 = vmatprep.subr.mxu0 0.0
    %2627 = vmatpush2.msra.mxu0 0.0
    %2628 = vmatprep.subr.mxu0 0.0
    %2629 = vmatpush2.msra.mxu0 0.0
    %2630 = vmatprep.subr.mxu0 0.0
    %2631 = vmatpush2.msra.mxu0 0.0
    %2632 = vmatprep.subr.mxu0 0.0
    %2633 = vmatpush2.msra.mxu0 0.0
    %2634 = vmatprep.subr.mxu0 0.0
    %2635 = vmatpush2.msra.mxu0 0.0
    %2636 = vmatprep.subr.mxu0 0.0
    %2637 = vmatpush2.msra.mxu0 0.0
    %2638 = vmatprep.subr.mxu0 0.0
    %2639 = vmatpush2.msra.mxu0 0.0
    %2640 = vmatprep.subr.mxu0 0.0
    %2641 = vmatpush2.msra.mxu0 0.0
    %2642 = vmatprep.subr.mxu0 0.0
    %2643 = vmatpush2.msra.mxu0 0.0
    %2644 = vmatprep.subr.mxu0 0.0
    %2645 = vmatpush2.msra.mxu0 0.0
    %2646 = vmatprep.subr.mxu0 0.0
    %2647 = vmatpush2.msra.mxu0 0.0
    %2648 = vmatprep.subr.mxu0 0.0
    %2649 = vmatpush2.msra.mxu0 0.0
    %2650 = vmatprep.subr.mxu0 0.0
    %2651 = vmatpush2.msra.mxu0 0.0
    %2652 = vmatprep.subr.mxu0 0.0
    %2653 = vmatpush2.msra.mxu0 0.0
    %2654 = vmatprep.subr.mxu0 0.0
    %2655 = vmatpush2.msra.mxu0 0.0
    %2656 = vmatprep.subr.mxu0 0.0
    %2657 = vmatpush2.msra.mxu0 0.0
    %2658 = vmatprep.mubr.f32.mxu0 0.0
    %2659 = vmatmul.mubr.f32.gmra.mxu0 %v2374
    %v2660 = vpop.f32.mrf.mxu0
    %v2661 = vadd.f32 %v136, %v2660
    %v2662 = vpop.f32.mrf.mxu0
    %v2663 = vadd.f32 %v140, %v2662
    %2664 = vdwg.mxu0
    %2665 = vmatprep.subr.mxu0 0.0
    %2666 = vmatpush1.msra.mxu0 %v97
    %2667 = vmatprep.subr.mxu0 0.0
    %2668 = vmatpush1.msra.mxu0 %v94
    %2669 = vmatprep.subr.mxu0 0.0
    %2670 = vmatpush1.msra.mxu0 %v91
    %2671 = vmatprep.subr.mxu0 0.0
    %2672 = vmatpush1.msra.mxu0 %v88
    %2673 = vmatprep.subr.mxu0 0.0
    %2674 = vmatpush1.msra.mxu0 %v85
    %2675 = vmatprep.subr.mxu0 0.0
    %2676 = vmatpush1.msra.mxu0 %v82
    %2677 = vmatprep.subr.mxu0 0.0
    %2678 = vmatpush1.msra.mxu0 %v79
    %2679 = vmatprep.subr.mxu0 0.0
    %2680 = vmatpush1.msra.mxu0 %v76
    %2681 = vmatprep.subr.mxu0 0.0
    %2682 = vmatpush1.msra.mxu0 %v73
    %2683 = vmatprep.subr.mxu0 0.0
    %2684 = vmatpush1.msra.mxu0 %v70
    %2685 = vmatprep.subr.mxu0 0.0
    %2686 = vmatpush1.msra.mxu0 %v67
    %2687 = vmatprep.subr.mxu0 0.0
    %2688 = vmatpush1.msra.mxu0 %v64
    %2689 = vmatprep.subr.mxu0 0.0
    %2690 = vmatpush1.msra.mxu0 %v61
    %2691 = vmatprep.subr.mxu0 0.0
    %2692 = vmatpush1.msra.mxu0 %v58
    %2693 = vmatprep.subr.mxu0 0.0
    %2694 = vmatpush1.msra.mxu0 %v55
    %2695 = vmatprep.subr.mxu0 0.0
    %2696 = vmatpush1.msra.mxu0 %v52
    %2697 = vmatprep.subr.mxu0 0.0
    %2698 = vmatpush2.msra.mxu0 0.0
    %2699 = vmatprep.subr.mxu0 0.0
    %2700 = vmatpush2.msra.mxu0 0.0
    %2701 = vmatprep.subr.mxu0 0.0
    %2702 = vmatpush2.msra.mxu0 0.0
    %2703 = vmatprep.subr.mxu0 0.0
    %2704 = vmatpush2.msra.mxu0 0.0
    %2705 = vmatprep.subr.mxu0 0.0
    %2706 = vmatpush2.msra.mxu0 0.0
    %2707 = vmatprep.subr.mxu0 0.0
    %2708 = vmatpush2.msra.mxu0 0.0
    %2709 = vmatprep.subr.mxu0 0.0
    %2710 = vmatpush2.msra.mxu0 0.0
    %2711 = vmatprep.subr.mxu0 0.0
    %2712 = vmatpush2.msra.mxu0 0.0
    %2713 = vmatprep.subr.mxu0 0.0
    %2714 = vmatpush2.msra.mxu0 0.0
    %2715 = vmatprep.subr.mxu0 0.0
    %2716 = vmatpush2.msra.mxu0 0.0
    %2717 = vmatprep.subr.mxu0 0.0
    %2718 = vmatpush2.msra.mxu0 0.0
    %2719 = vmatprep.subr.mxu0 0.0
    %2720 = vmatpush2.msra.mxu0 0.0
    %2721 = vmatprep.subr.mxu0 0.0
    %2722 = vmatpush2.msra.mxu0 0.0
    %2723 = vmatprep.subr.mxu0 0.0
    %2724 = vmatpush2.msra.mxu0 0.0
    %2725 = vmatprep.subr.mxu0 0.0
    %2726 = vmatpush2.msra.mxu0 0.0
    %2727 = vmatprep.subr.mxu0 0.0
    %2728 = vmatpush2.msra.mxu0 0.0
    %2729 = vmatprep.mubr.f32.mxu0 0.0
    %2730 = vmatmul.mubr.f32.gmra.mxu0 %v2374
    %v2731 = vpop.f32.mrf.mxu0
    %v2732 = vadd.f32 %v144, %v2731
    %v2733 = vpop.f32.mrf.mxu0
    %2734 = vdwg.mxu0
    %v2735 = vadd.f32 %v2520, %v2661
    %v2736 = vxor.u32 %v2735, 2147483648
    %v2737 = vmul.f32 %v2736, 1.442695
    %v2738 = vpow.pop %v2737
    %v2739 = vadd.f32 %v2738, 1.0
    %v2740 = vrcp.pop %v2739
    %v2741 = vmul.f32 1.0, %v2740
    %v2742 = vadd.f32 %v2522, %v2663
    %v2743 = vxor.u32 %v2742, 2147483648
    %v2744 = vmul.f32 %v2743, 1.442695
    %v2745 = vpow.pop %v2744
    %v2746 = vadd.f32 %v2745, 1.0
    %v2747 = vrcp.pop %v2746
    %v2748 = vmul.f32 1.0, %v2747
    %v2749 = vmul.f32 %v2741, %v2732
    %v2750 = vadd.f32 %v2591, %v2749
    %v2751 = vtanh.pop %v2750
    %v2752 = vsub.f32 1.0, %v2748
    %v2753 = vmul.f32 %v2752, %v2751
    %v2754 = vmul.f32 %v2748, %v2374
    %v2755 = vadd.f32 %v2753, %v2754
    %2756 = vmatprep.subr.mxu0 0.0
    %2757 = vmatpush1.msra.mxu0 %v113
    %2758 = vmatprep.subr.mxu0 0.0
    %2759 = vmatpush1.msra.mxu0 %v112
    %2760 = vmatprep.subr.mxu0 0.0
    %2761 = vmatpush1.msra.mxu0 %v111
    %2762 = vmatprep.subr.mxu0 0.0
    %2763 = vmatpush1.msra.mxu0 %v110
    %2764 = vmatprep.subr.mxu0 0.0
    %2765 = vmatpush1.msra.mxu0 %v109
    %2766 = vmatprep.subr.mxu0 0.0
    %2767 = vmatpush1.msra.mxu0 %v108
    %2768 = vmatprep.subr.mxu0 0.0
    %2769 = vmatpush1.msra.mxu0 %v107
    %2770 = vmatprep.subr.mxu0 0.0
    %2771 = vmatpush1.msra.mxu0 %v106
    %2772 = vmatprep.subr.mxu0 0.0
    %2773 = vmatpush1.msra.mxu0 %v105
    %2774 = vmatprep.subr.mxu0 0.0
    %2775 = vmatpush1.msra.mxu0 %v104
    %2776 = vmatprep.subr.mxu0 0.0
    %2777 = vmatpush1.msra.mxu0 %v103
    %2778 = vmatprep.subr.mxu0 0.0
    %2779 = vmatpush1.msra.mxu0 %v102
    %2780 = vmatprep.subr.mxu0 0.0
    %2781 = vmatpush1.msra.mxu0 %v101
    %2782 = vmatprep.subr.mxu0 0.0
    %2783 = vmatpush1.msra.mxu0 %v100
    %2784 = vmatprep.subr.mxu0 0.0
    %2785 = vmatpush1.msra.mxu0 %v99
    %2786 = vmatprep.subr.mxu0 0.0
    %2787 = vmatpush1.msra.mxu0 %v98
    %2788 = vmatprep.subr.mxu0 0.0
    %2789 = vmatpush2.msra.mxu0 0.0
    %2790 = vmatprep.subr.mxu0 0.0
    %2791 = vmatpush2.msra.mxu0 0.0
    %2792 = vmatprep.subr.mxu0 0.0
    %2793 = vmatpush2.msra.mxu0 0.0
    %2794 = vmatprep.subr.mxu0 0.0
    %2795 = vmatpush2.msra.mxu0 0.0
    %2796 = vmatprep.subr.mxu0 0.0
    %2797 = vmatpush2.msra.mxu0 0.0
    %2798 = vmatprep.subr.mxu0 0.0
    %2799 = vmatpush2.msra.mxu0 0.0
    %2800 = vmatprep.subr.mxu0 0.0
    %2801 = vmatpush2.msra.mxu0 0.0
    %2802 = vmatprep.subr.mxu0 0.0
    %2803 = vmatpush2.msra.mxu0 0.0
    %2804 = vmatprep.subr.mxu0 0.0
    %2805 = vmatpush2.msra.mxu0 0.0
    %2806 = vmatprep.subr.mxu0 0.0
    %2807 = vmatpush2.msra.mxu0 0.0
    %2808 = vmatprep.subr.mxu0 0.0
    %2809 = vmatpush2.msra.mxu0 0.0
    %2810 = vmatprep.subr.mxu0 0.0
    %2811 = vmatpush2.msra.mxu0 0.0
    %2812 = vmatprep.subr.mxu0 0.0
    %2813 = vmatpush2.msra.mxu0 0.0
    %2814 = vmatprep.subr.mxu0 0.0
    %2815 = vmatpush2.msra.mxu0 0.0
    %2816 = vmatprep.subr.mxu0 0.0
    %2817 = vmatpush2.msra.mxu0 0.0
    %2818 = vmatprep.subr.mxu0 0.0
    %2819 = vmatpush2.msra.mxu0 0.0
    %2820 = vmatprep.mubr.f32.mxu0 0.0
    %2821 = vmatmul.mubr.f32.gmra.mxu0 %v2755
    %v2822 = vpop.f32.mrf.mxu0
    %v2823 = vadd.f32 %v153, %v2822
    %v2824 = vpop.f32.mrf.mxu0
    %2825 = vdwg.mxu0
    %2827 = vrot.lane.b32.xlu0 %v2823, 24
    %v2828 = vpop.permute.xlu0 %2827
    %vm2830 = vcmask 228544
    %2831 = vst.msk [vmem:[%s7] sm:$0xff] %vm2830, %v2828
    %v2832 = vsel %vm160, %v2823, 0
    %2834 = vmatprep.subr.mxu0 0.0
    %2835 = vmatpush1.msra.mxu0 0.0
    %2836 = vmatprep.subr.mxu0 0.0
    %2837 = vmatpush1.msra.mxu0 0.0
    %2838 = vmatprep.subr.mxu0 0.0
    %2839 = vmatpush1.msra.mxu0 0.0
    %2840 = vmatprep.subr.mxu0 0.0
    %2841 = vmatpush1.msra.mxu0 0.0
    %2842 = vmatprep.subr.mxu0 0.0
    %2843 = vmatpush1.msra.mxu0 0.0
    %2844 = vmatprep.subr.mxu0 0.0
    %2845 = vmatpush1.msra.mxu0 0.0
    %2846 = vmatprep.subr.mxu0 0.0
    %2847 = vmatpush1.msra.mxu0 0.0
    %2848 = vmatprep.subr.mxu0 0.0
    %2849 = vmatpush1.msra.mxu0 0.0
    %2850 = vmatprep.subr.mxu0 0.0
    %2851 = vmatpush1.msra.mxu0 0.0
    %2852 = vmatprep.subr.mxu0 0.0
    %2853 = vmatpush1.msra.mxu0 0.0
    %2854 = vmatprep.subr.mxu0 0.0
    %2855 = vmatpush1.msra.mxu0 0.0
    %2856 = vmatprep.subr.mxu0 0.0
    %2857 = vmatpush1.msra.mxu0 0.0
    %2858 = vmatprep.subr.mxu0 0.0
    %2859 = vmatpush1.msra.mxu0 0.0
    %2860 = vmatprep.subr.mxu0 0.0
    %2861 = vmatpush1.msra.mxu0 0.0
    %2862 = vmatprep.subr.mxu0 0.0
    %2863 = vmatpush1.msra.mxu0 0.0
    %2864 = vmatprep.subr.mxu0 %v167
    %2865 = vmatpush1.msra.mxu0 %v165
    %2866 = vmatprep.subr.mxu0 0.0
    %2867 = vmatpush2.msra.mxu0 0.0
    %2868 = vmatprep.subr.mxu0 0.0
    %2869 = vmatpush2.msra.mxu0 0.0
    %2870 = vmatprep.subr.mxu0 0.0
    %2871 = vmatpush2.msra.mxu0 0.0
    %2872 = vmatprep.subr.mxu0 0.0
    %2873 = vmatpush2.msra.mxu0 0.0
    %2874 = vmatprep.subr.mxu0 0.0
    %2875 = vmatpush2.msra.mxu0 0.0
    %2876 = vmatprep.subr.mxu0 0.0
    %2877 = vmatpush2.msra.mxu0 0.0
    %2878 = vmatprep.subr.mxu0 0.0
    %2879 = vmatpush2.msra.mxu0 0.0
    %2880 = vmatprep.subr.mxu0 0.0
    %2881 = vmatpush2.msra.mxu0 0.0
    %2882 = vmatprep.subr.mxu0 0.0
    %2883 = vmatpush2.msra.mxu0 0.0
    %2884 = vmatprep.subr.mxu0 0.0
    %2885 = vmatpush2.msra.mxu0 0.0
    %2886 = vmatprep.subr.mxu0 0.0
    %2887 = vmatpush2.msra.mxu0 0.0
    %2888 = vmatprep.subr.mxu0 0.0
    %2889 = vmatpush2.msra.mxu0 0.0
    %2890 = vmatprep.subr.mxu0 0.0
    %2891 = vmatpush2.msra.mxu0 0.0
    %2892 = vmatprep.subr.mxu0 0.0
    %2893 = vmatpush2.msra.mxu0 0.0
    %2894 = vmatprep.subr.mxu0 0.0
    %2895 = vmatpush2.msra.mxu0 0.0
    %2896 = vmatprep.subr.mxu0 0.0
    %2897 = vmatpush2.msra.mxu0 0.0
    %2898 = vmatprep.mubr.f32.mxu0 0.0
    %2899 = vmatmul.mubr.f32.gmra.mxu0 %v2832
    %v2900 = vpop.f32.mrf.mxu0
    %v2901 = vadd.f32 %v119, %v2900
    %v2902 = vpop.f32.mrf.mxu0
    %v2903 = vadd.f32 %v123, %v2902
    %2904 = vdwg.mxu0
    %2905 = vmatprep.subr.mxu0 0.0
    %2906 = vmatpush1.msra.mxu0 0.0
    %2907 = vmatprep.subr.mxu0 0.0
    %2908 = vmatpush1.msra.mxu0 0.0
    %2909 = vmatprep.subr.mxu0 0.0
    %2910 = vmatpush1.msra.mxu0 0.0
    %2911 = vmatprep.subr.mxu0 0.0
    %2912 = vmatpush1.msra.mxu0 0.0
    %2913 = vmatprep.subr.mxu0 0.0
    %2914 = vmatpush1.msra.mxu0 0.0
    %2915 = vmatprep.subr.mxu0 0.0
    %2916 = vmatpush1.msra.mxu0 0.0
    %2917 = vmatprep.subr.mxu0 0.0
    %2918 = vmatpush1.msra.mxu0 0.0
    %2919 = vmatprep.subr.mxu0 0.0
    %2920 = vmatpush1.msra.mxu0 0.0
    %2921 = vmatprep.subr.mxu0 0.0
    %2922 = vmatpush1.msra.mxu0 0.0
    %2923 = vmatprep.subr.mxu0 0.0
    %2924 = vmatpush1.msra.mxu0 0.0
    %2925 = vmatprep.subr.mxu0 0.0
    %2926 = vmatpush1.msra.mxu0 0.0
    %2927 = vmatprep.subr.mxu0 0.0
    %2928 = vmatpush1.msra.mxu0 0.0
    %2929 = vmatprep.subr.mxu0 0.0
    %2930 = vmatpush1.msra.mxu0 0.0
    %2931 = vmatprep.subr.mxu0 0.0
    %2932 = vmatpush1.msra.mxu0 0.0
    %2933 = vmatprep.subr.mxu0 0.0
    %2934 = vmatpush1.msra.mxu0 0.0
    %2935 = vmatprep.subr.mxu0 0.0
    %2936 = vmatpush1.msra.mxu0 %v169
    %2937 = vmatprep.subr.mxu0 0.0
    %2938 = vmatpush2.msra.mxu0 0.0
    %2939 = vmatprep.subr.mxu0 0.0
    %2940 = vmatpush2.msra.mxu0 0.0
    %2941 = vmatprep.subr.mxu0 0.0
    %2942 = vmatpush2.msra.mxu0 0.0
    %2943 = vmatprep.subr.mxu0 0.0
    %2944 = vmatpush2.msra.mxu0 0.0
    %2945 = vmatprep.subr.mxu0 0.0
    %2946 = vmatpush2.msra.mxu0 0.0
    %2947 = vmatprep.subr.mxu0 0.0
    %2948 = vmatpush2.msra.mxu0 0.0
    %2949 = vmatprep.subr.mxu0 0.0
    %2950 = vmatpush2.msra.mxu0 0.0
    %2951 = vmatprep.subr.mxu0 0.0
    %2952 = vmatpush2.msra.mxu0 0.0
    %2953 = vmatprep.subr.mxu0 0.0
    %2954 = vmatpush2.msra.mxu0 0.0
    %2955 = vmatprep.subr.mxu0 0.0
    %2956 = vmatpush2.msra.mxu0 0.0
    %2957 = vmatprep.subr.mxu0 0.0
    %2958 = vmatpush2.msra.mxu0 0.0
    %2959 = vmatprep.subr.mxu0 0.0
    %2960 = vmatpush2.msra.mxu0 0.0
    %2961 = vmatprep.subr.mxu0 0.0
    %2962 = vmatpush2.msra.mxu0 0.0
    %2963 = vmatprep.subr.mxu0 0.0
    %2964 = vmatpush2.msra.mxu0 0.0
    %2965 = vmatprep.subr.mxu0 0.0
    %2966 = vmatpush2.msra.mxu0 0.0
    %2967 = vmatprep.subr.mxu0 0.0
    %2968 = vmatpush2.msra.mxu0 0.0
    %2969 = vmatprep.mubr.f32.mxu0 0.0
    %2970 = vmatmul.mubr.f32.gmra.mxu0 %v2832
    %v2971 = vpop.f32.mrf.mxu0
    %v2972 = vadd.f32 %v127, %v2971
    %v2973 = vpop.f32.mrf.mxu0
    %2974 = vdwg.mxu0
    %2975 = vmatprep.subr.mxu0 %v96
    %2976 = vmatpush1.msra.mxu0 %v95
    %2977 = vmatprep.subr.mxu0 %v93
    %2978 = vmatpush1.msra.mxu0 %v92
    %2979 = vmatprep.subr.mxu0 %v90
    %2980 = vmatpush1.msra.mxu0 %v89
    %2981 = vmatprep.subr.mxu0 %v87
    %2982 = vmatpush1.msra.mxu0 %v86
    %2983 = vmatprep.subr.mxu0 %v84
    %2984 = vmatpush1.msra.mxu0 %v83
    %2985 = vmatprep.subr.mxu0 %v81
    %2986 = vmatpush1.msra.mxu0 %v80
    %2987 = vmatprep.subr.mxu0 %v78
    %2988 = vmatpush1.msra.mxu0 %v77
    %2989 = vmatprep.subr.mxu0 %v75
    %2990 = vmatpush1.msra.mxu0 %v74
    %2991 = vmatprep.subr.mxu0 %v72
    %2992 = vmatpush1.msra.mxu0 %v71
    %2993 = vmatprep.subr.mxu0 %v69
    %2994 = vmatpush1.msra.mxu0 %v68
    %2995 = vmatprep.subr.mxu0 %v66
    %2996 = vmatpush1.msra.mxu0 %v65
    %2997 = vmatprep.subr.mxu0 %v63
    %2998 = vmatpush1.msra.mxu0 %v62
    %2999 = vmatprep.subr.mxu0 %v60
    %3000 = vmatpush1.msra.mxu0 %v59
    %3001 = vmatprep.subr.mxu0 %v57
    %3002 = vmatpush1.msra.mxu0 %v56
    %3003 = vmatprep.subr.mxu0 %v54
    %3004 = vmatpush1.msra.mxu0 %v53
    %3005 = vmatprep.subr.mxu0 %v51
    %3006 = vmatpush1.msra.mxu0 %v50
    %3007 = vmatprep.subr.mxu0 0.0
    %3008 = vmatpush2.msra.mxu0 0.0
    %3009 = vmatprep.subr.mxu0 0.0
    %3010 = vmatpush2.msra.mxu0 0.0
    %3011 = vmatprep.subr.mxu0 0.0
    %3012 = vmatpush2.msra.mxu0 0.0
    %3013 = vmatprep.subr.mxu0 0.0
    %3014 = vmatpush2.msra.mxu0 0.0
    %3015 = vmatprep.subr.mxu0 0.0
    %3016 = vmatpush2.msra.mxu0 0.0
    %3017 = vmatprep.subr.mxu0 0.0
    %3018 = vmatpush2.msra.mxu0 0.0
    %3019 = vmatprep.subr.mxu0 0.0
    %3020 = vmatpush2.msra.mxu0 0.0
    %3021 = vmatprep.subr.mxu0 0.0
    %3022 = vmatpush2.msra.mxu0 0.0
    %3023 = vmatprep.subr.mxu0 0.0
    %3024 = vmatpush2.msra.mxu0 0.0
    %3025 = vmatprep.subr.mxu0 0.0
    %3026 = vmatpush2.msra.mxu0 0.0
    %3027 = vmatprep.subr.mxu0 0.0
    %3028 = vmatpush2.msra.mxu0 0.0
    %3029 = vmatprep.subr.mxu0 0.0
    %3030 = vmatpush2.msra.mxu0 0.0
    %3031 = vmatprep.subr.mxu0 0.0
    %3032 = vmatpush2.msra.mxu0 0.0
    %3033 = vmatprep.subr.mxu0 0.0
    %3034 = vmatpush2.msra.mxu0 0.0
    %3035 = vmatprep.subr.mxu0 0.0
    %3036 = vmatpush2.msra.mxu0 0.0
    %3037 = vmatprep.subr.mxu0 0.0
    %3038 = vmatpush2.msra.mxu0 0.0
    %3039 = vmatprep.mubr.f32.mxu0 0.0
    %3040 = vmatmul.mubr.f32.gmra.mxu0 %v2755
    %v3041 = vpop.f32.mrf.mxu0
    %v3042 = vadd.f32 %v136, %v3041
    %v3043 = vpop.f32.mrf.mxu0
    %v3044 = vadd.f32 %v140, %v3043
    %3045 = vdwg.mxu0
    %3046 = vmatprep.subr.mxu0 0.0
    %3047 = vmatpush1.msra.mxu0 %v97
    %3048 = vmatprep.subr.mxu0 0.0
    %3049 = vmatpush1.msra.mxu0 %v94
    %3050 = vmatprep.subr.mxu0 0.0
    %3051 = vmatpush1.msra.mxu0 %v91
    %3052 = vmatprep.subr.mxu0 0.0
    %3053 = vmatpush1.msra.mxu0 %v88
    %3054 = vmatprep.subr.mxu0 0.0
    %3055 = vmatpush1.msra.mxu0 %v85
    %3056 = vmatprep.subr.mxu0 0.0
    %3057 = vmatpush1.msra.mxu0 %v82
    %3058 = vmatprep.subr.mxu0 0.0
    %3059 = vmatpush1.msra.mxu0 %v79
    %3060 = vmatprep.subr.mxu0 0.0
    %3061 = vmatpush1.msra.mxu0 %v76
    %3062 = vmatprep.subr.mxu0 0.0
    %3063 = vmatpush1.msra.mxu0 %v73
    %3064 = vmatprep.subr.mxu0 0.0
    %3065 = vmatpush1.msra.mxu0 %v70
    %3066 = vmatprep.subr.mxu0 0.0
    %3067 = vmatpush1.msra.mxu0 %v67
    %3068 = vmatprep.subr.mxu0 0.0
    %3069 = vmatpush1.msra.mxu0 %v64
    %3070 = vmatprep.subr.mxu0 0.0
    %3071 = vmatpush1.msra.mxu0 %v61
    %3072 = vmatprep.subr.mxu0 0.0
    %3073 = vmatpush1.msra.mxu0 %v58
    %3074 = vmatprep.subr.mxu0 0.0
    %3075 = vmatpush1.msra.mxu0 %v55
    %3076 = vmatprep.subr.mxu0 0.0
    %3077 = vmatpush1.msra.mxu0 %v52
    %3078 = vmatprep.subr.mxu0 0.0
    %3079 = vmatpush2.msra.mxu0 0.0
    %3080 = vmatprep.subr.mxu0 0.0
    %3081 = vmatpush2.msra.mxu0 0.0
    %3082 = vmatprep.subr.mxu0 0.0
    %3083 = vmatpush2.msra.mxu0 0.0
    %3084 = vmatprep.subr.mxu0 0.0
    %3085 = vmatpush2.msra.mxu0 0.0
    %3086 = vmatprep.subr.mxu0 0.0
    %3087 = vmatpush2.msra.mxu0 0.0
    %3088 = vmatprep.subr.mxu0 0.0
    %3089 = vmatpush2.msra.mxu0 0.0
    %3090 = vmatprep.subr.mxu0 0.0
    %3091 = vmatpush2.msra.mxu0 0.0
    %3092 = vmatprep.subr.mxu0 0.0
    %3093 = vmatpush2.msra.mxu0 0.0
    %3094 = vmatprep.subr.mxu0 0.0
    %3095 = vmatpush2.msra.mxu0 0.0
    %3096 = vmatprep.subr.mxu0 0.0
    %3097 = vmatpush2.msra.mxu0 0.0
    %3098 = vmatprep.subr.mxu0 0.0
    %3099 = vmatpush2.msra.mxu0 0.0
    %3100 = vmatprep.subr.mxu0 0.0
    %3101 = vmatpush2.msra.mxu0 0.0
    %3102 = vmatprep.subr.mxu0 0.0
    %3103 = vmatpush2.msra.mxu0 0.0
    %3104 = vmatprep.subr.mxu0 0.0
    %3105 = vmatpush2.msra.mxu0 0.0
    %3106 = vmatprep.subr.mxu0 0.0
    %3107 = vmatpush2.msra.mxu0 0.0
    %3108 = vmatprep.subr.mxu0 0.0
    %3109 = vmatpush2.msra.mxu0 0.0
    %3110 = vmatprep.mubr.f32.mxu0 0.0
    %3111 = vmatmul.mubr.f32.gmra.mxu0 %v2755
    %v3112 = vpop.f32.mrf.mxu0
    %v3113 = vadd.f32 %v144, %v3112
    %v3114 = vpop.f32.mrf.mxu0
    %3115 = vdwg.mxu0
    %v3116 = vadd.f32 %v2901, %v3042
    %v3117 = vxor.u32 %v3116, 2147483648
    %v3118 = vmul.f32 %v3117, 1.442695
    %v3119 = vpow.pop %v3118
    %v3120 = vadd.f32 %v3119, 1.0
    %v3121 = vrcp.pop %v3120
    %v3122 = vmul.f32 1.0, %v3121
    %v3123 = vadd.f32 %v2903, %v3044
    %v3124 = vxor.u32 %v3123, 2147483648
    %v3125 = vmul.f32 %v3124, 1.442695
    %v3126 = vpow.pop %v3125
    %v3127 = vadd.f32 %v3126, 1.0
    %v3128 = vrcp.pop %v3127
    %v3129 = vmul.f32 1.0, %v3128
    %v3130 = vmul.f32 %v3122, %v3113
    %v3131 = vadd.f32 %v2972, %v3130
    %v3132 = vtanh.pop %v3131
    %v3133 = vsub.f32 1.0, %v3129
    %v3134 = vmul.f32 %v3133, %v3132
    %v3135 = vmul.f32 %v3129, %v2755
    %v3136 = vadd.f32 %v3134, %v3135
    %3137 = vmatprep.subr.mxu0 0.0
    %3138 = vmatpush1.msra.mxu0 %v113
    %3139 = vmatprep.subr.mxu0 0.0
    %3140 = vmatpush1.msra.mxu0 %v112
    %3141 = vmatprep.subr.mxu0 0.0
    %3142 = vmatpush1.msra.mxu0 %v111
    %3143 = vmatprep.subr.mxu0 0.0
    %3144 = vmatpush1.msra.mxu0 %v110
    %3145 = vmatprep.subr.mxu0 0.0
    %3146 = vmatpush1.msra.mxu0 %v109
    %3147 = vmatprep.subr.mxu0 0.0
    %3148 = vmatpush1.msra.mxu0 %v108
    %3149 = vmatprep.subr.mxu0 0.0
    %3150 = vmatpush1.msra.mxu0 %v107
    %3151 = vmatprep.subr.mxu0 0.0
    %3152 = vmatpush1.msra.mxu0 %v106
    %3153 = vmatprep.subr.mxu0 0.0
    %3154 = vmatpush1.msra.mxu0 %v105
    %3155 = vmatprep.subr.mxu0 0.0
    %3156 = vmatpush1.msra.mxu0 %v104
    %3157 = vmatprep.subr.mxu0 0.0
    %3158 = vmatpush1.msra.mxu0 %v103
    %3159 = vmatprep.subr.mxu0 0.0
    %3160 = vmatpush1.msra.mxu0 %v102
    %3161 = vmatprep.subr.mxu0 0.0
    %3162 = vmatpush1.msra.mxu0 %v101
    %3163 = vmatprep.subr.mxu0 0.0
    %3164 = vmatpush1.msra.mxu0 %v100
    %3165 = vmatprep.subr.mxu0 0.0
    %3166 = vmatpush1.msra.mxu0 %v99
    %3167 = vmatprep.subr.mxu0 0.0
    %3168 = vmatpush1.msra.mxu0 %v98
    %3169 = vmatprep.subr.mxu0 0.0
    %3170 = vmatpush2.msra.mxu0 0.0
    %3171 = vmatprep.subr.mxu0 0.0
    %3172 = vmatpush2.msra.mxu0 0.0
    %3173 = vmatprep.subr.mxu0 0.0
    %3174 = vmatpush2.msra.mxu0 0.0
    %3175 = vmatprep.subr.mxu0 0.0
    %3176 = vmatpush2.msra.mxu0 0.0
    %3177 = vmatprep.subr.mxu0 0.0
    %3178 = vmatpush2.msra.mxu0 0.0
    %3179 = vmatprep.subr.mxu0 0.0
    %3180 = vmatpush2.msra.mxu0 0.0
    %3181 = vmatprep.subr.mxu0 0.0
    %3182 = vmatpush2.msra.mxu0 0.0
    %3183 = vmatprep.subr.mxu0 0.0
    %3184 = vmatpush2.msra.mxu0 0.0
    %3185 = vmatprep.subr.mxu0 0.0
    %3186 = vmatpush2.msra.mxu0 0.0
    %3187 = vmatprep.subr.mxu0 0.0
    %3188 = vmatpush2.msra.mxu0 0.0
    %3189 = vmatprep.subr.mxu0 0.0
    %3190 = vmatpush2.msra.mxu0 0.0
    %3191 = vmatprep.subr.mxu0 0.0
    %3192 = vmatpush2.msra.mxu0 0.0
    %3193 = vmatprep.subr.mxu0 0.0
    %3194 = vmatpush2.msra.mxu0 0.0
    %3195 = vmatprep.subr.mxu0 0.0
    %3196 = vmatpush2.msra.mxu0 0.0
    %3197 = vmatprep.subr.mxu0 0.0
    %3198 = vmatpush2.msra.mxu0 0.0
    %3199 = vmatprep.subr.mxu0 0.0
    %3200 = vmatpush2.msra.mxu0 0.0
    %3201 = vmatprep.mubr.f32.mxu0 0.0
    %3202 = vmatmul.mubr.f32.gmra.mxu0 %v3136
    %v3203 = vpop.f32.mrf.mxu0
    %v3204 = vadd.f32 %v153, %v3203
    %v3205 = vpop.f32.mrf.mxu0
    %3206 = vdwg.mxu0
    %3208 = vrot.lane.b32.xlu0 %v3204, 28
    %v3209 = vpop.permute.xlu0 %3208
    %vm3211 = vcmask 261344
    %3212 = vst.msk [vmem:[%s7] sm:$0xff] %vm3211, %v3209
    %3213 = vst [vmem:[#allocation2] sm:$0xff] %v3136
    %3214 = vst.msk [vmem:[#allocation3] sm:$0xff] %vm160, %v3204
    // Predicated region
    $region38: #{decoder_forward.1} parent=1 // pred_check
      _
    $region39: #{decoder_forward.1} parent=1 // pred_check_branch
      %3216 = sbr.rel (0) target = $region41
    $region40: #{decoder_forward.1} parent=1 // pred_region
      _
    $region41: #{decoder_forward.1} parent=1 // pred_fallthru
      _
    // Predicated region
    $region42: #{decoder_forward.1} parent=1 // pred_check
      _
    $region43: #{decoder_forward.1} parent=1 // pred_check_branch
      %3218 = sbr.rel (0) target = $region45
    $region44: #{decoder_forward.1} parent=1 // pred_region
      _
    $region45: #{decoder_forward.1} parent=1 // pred_fallthru
      _
    %3219 = vsyncpa [#allocation5], 1

</llo_original>
